<compile_context>
chip_gen: v7x
topology: tpu7x:2x2x1
jax: 0.10.0
libtpu: 0.0.40
codegen_flags: <defaults>
</compile_context>

<pallas_src>
import functools

import jax
import jax.numpy as jnp
from jax.experimental import pallas as pl
from jax.experimental.pallas import tpu as pltpu


def _leaky(x):
    return jnp.where(x >= 0, x, 0.1 * x)          # nn.LeakyReLU(0.1)


def _dot(x_f32, w_ref):
    # bf16 MXU path, f32 accumulation.
    return jnp.dot(x_f32.astype(jnp.bfloat16), w_ref[...],
                   preferred_element_type=jnp.float32)


def _fused_kernel(att_ref, w_att_ref, b_att_ref,
                  im_ref, w_im_ref, b_im_ref,
                  q_ref, w_q_ref, b_q_ref,
                  ans_ref, w_ans_ref, b_ans_ref,
                  w_c0a_ref, w_c0b_ref, w_c0c_ref, w_c0d_ref, b_c0_ref,
                  w_c1_ref, b_c1_ref,
                  w_a0_ref, b_a0_ref,
                  w_a1_ref, b_a1_ref,
                  w_ap_ref, b_ap_ref,
                  refined_ref, ans_pred_ref,
                  acc_ref):
    k = pl.program_id(0)
    nk = pl.num_programs(0)

    @pl.when(k == 0)
    def _():
        acc_ref[...] = jnp.zeros_like(acc_ref)

    # Partial product of the K-tiled atten_input layer (dominant weight).
    acc_ref[...] += _dot(att_ref[...], w_att_ref)

    @pl.when(k == nk - 1)
    def _():
        # Branch encoders: Linear + LeakyReLU(0.1)
        att_feats = _leaky(acc_ref[...] + b_att_ref[...])
        im_feats  = _leaky(_dot(im_ref[...],  w_im_ref)  + b_im_ref[...])
        q_feats   = _leaky(_dot(q_ref[...],   w_q_ref)   + b_q_ref[...])
        ans_feats = _leaky(_dot(ans_ref[...], w_ans_ref) + b_ans_ref[...])

        # concat2feat layer 0 without materializing the concat:
        # cat(att,im,q,ans) @ W0 == att@W0a + im@W0b + q@W0c + ans@W0d
        h = (_dot(att_feats, w_c0a_ref) + _dot(im_feats, w_c0b_ref)
             + _dot(q_feats, w_c0c_ref) + _dot(ans_feats, w_c0d_ref)
             + b_c0_ref[...])
        h = _leaky(h)
        feats = _leaky(_dot(h, w_c1_ref) + b_c1_ref[...])

        # linear_block_attention_out: Linear + LeakyReLU, Linear, Softmax(dim=1)
        a = _leaky(_dot(feats, w_a0_ref) + b_a0_ref[...])
        logits = _dot(a, w_a1_ref) + b_a1_ref[...]
        logits = logits - jnp.max(logits, axis=-1, keepdims=True)
        e = jnp.exp(logits)
        refined_ref[...] = (e / jnp.sum(e, axis=-1, keepdims=True)
                            ).astype(refined_ref.dtype)

        # linear_block_ans_pred: plain Linear
        ans_pred_ref[...] = (_dot(feats, w_ap_ref) + b_ap_ref[...]
                             ).astype(ans_pred_ref.dtype)


# ----------------------------------------------------------------------------
# Deterministic parameter construction (PyTorch nn.Linear shapes / init)
# ----------------------------------------------------------------------------
def _linear_params(key, fan_in, fan_out):
    """PyTorch-style uniform(-1/sqrt(fan_in), 1/sqrt(fan_in)); W stored [in, out] bf16."""
    kw, kb = jax.random.split(key)
    bound = 1.0 / float(fan_in) ** 0.5
    w = jax.random.uniform(kw, (fan_in, fan_out), jnp.float32, -bound, bound)
    b = jax.random.uniform(kb, (1, fan_out), jnp.float32, -bound, bound)
    # NOTE: real PyTorch checkpoints are [out, in] and must be transposed.
    return w.astype(jnp.bfloat16), b


def make_params(key, *, atten_dim, hidden_feat_size, q_feat_dim, im_feat_dim,
                ans_dim, out_atten_dim=14 * 14):
    H = hidden_feat_size
    keys = iter(jax.random.split(key, 9))
    params = {
        "atten_input":      _linear_params(next(keys), atten_dim, 2 * H),
        "im_feat_in":       _linear_params(next(keys), im_feat_dim, 2 * H),
        "question_feat_in": _linear_params(next(keys), q_feat_dim, 2 * H),
        "answer_score_in":  _linear_params(next(keys), ans_dim, 2 * H),
    }
    # concat2feat layer 0: Linear(8H, 4H); pre-split along the input dim into
    # four [2H, 4H] blocks (att | im | q | ans) to avoid the runtime concat.
    w_c0, b_c0 = _linear_params(next(keys), 8 * H, 4 * H)
    w_c0a, w_c0b, w_c0c, w_c0d = jnp.split(w_c0, 4, axis=0)
    params["concat2feat_0"] = (w_c0a, w_c0b, w_c0c, w_c0d, b_c0)
    params["concat2feat_1"] = _linear_params(next(keys), 4 * H, 3 * H)
    params["attn_out_0"]    = _linear_params(next(keys), 3 * H, 3 * H)
    params["attn_out_1"]    = _linear_params(next(keys), 3 * H, out_atten_dim)
    params["ans_pred"]      = _linear_params(next(keys), 3 * H, ans_dim)
    return params


# ----------------------------------------------------------------------------
# Forward pass (mirrors attention_refine_net_anspred.forward) — one pallas_call
# ----------------------------------------------------------------------------
def attention_refine_forward(params, attention, im_feat, q_feat, ans_scores,
                             *, tk=4096):
    B, atten_dim = attention.shape
    w_att, b_att = params["atten_input"]
    w_im, b_im   = params["im_feat_in"]
    w_q, b_q     = params["question_feat_in"]
    w_ans, b_ans = params["answer_score_in"]
    w_c0a, w_c0b, w_c0c, w_c0d, b_c0 = params["concat2feat_0"]
    w_c1, b_c1 = params["concat2feat_1"]
    w_a0, b_a0 = params["attn_out_0"]
    w_a1, b_a1 = params["attn_out_1"]
    w_ap, b_ap = params["ans_pred"]

    two_h   = w_att.shape[1]
    out_att = w_a1.shape[1]
    ans_out = w_ap.shape[1]

    # --- K tiling for the (potentially huge) atten_input weight -------------
    if tk >= atten_dim:
        tk, nk = atten_dim, 1
    else:
        tk = max(128, (tk // 128) * 128)          # keep (8,128)-aligned blocks
        nk = pl.cdiv(atten_dim, tk)
    k_pad = nk * tk
    if k_pad != atten_dim:                        # zero-pad: does not change result
        pad = k_pad - atten_dim
        attention = jnp.pad(attention, ((0, 0), (0, pad)))
        w_att = jnp.pad(w_att, ((0, pad), (0, 0)))

    args = [attention, w_att, b_att,
            im_feat, w_im, b_im,
            q_feat, w_q, b_q,
            ans_scores, w_ans, b_ans,
            w_c0a, w_c0b, w_c0c, w_c0d, b_c0,
            w_c1, b_c1,
            w_a0, b_a0,
            w_a1, b_a1,
            w_ap, b_ap]

    def _resident(a):
        # Full-array block, constant index -> DMA'd once, resident across grid.
        return pl.BlockSpec(a.shape, lambda k: (0,) * a.ndim)

    in_specs = ([pl.BlockSpec((B, tk), lambda k: (0, k)),       # attention K-chunk
                 pl.BlockSpec((tk, two_h), lambda k: (k, 0)),   # atten_input W chunk
                 _resident(b_att)]
                + [_resident(a) for a in args[3:]])

    out_shape = (jax.ShapeDtypeStruct((B, out_att), jnp.float32),
                 jax.ShapeDtypeStruct((B, ans_out), jnp.float32))
    out_specs = (pl.BlockSpec((B, out_att), lambda k: (0, 0)),
                 pl.BlockSpec((B, ans_out), lambda k: (0, 0)))

    refined, ans_pred = pl.pallas_call(
        _fused_kernel,
        grid=(nk,),
        in_specs=in_specs,
        out_specs=out_specs,
        out_shape=out_shape,
        scratch_shapes=[pltpu.VMEM((B, two_h), jnp.float32)],
        compiler_params=pltpu.CompilerParams(
            dimension_semantics=("arbitrary",),     # K reduction axis
            vmem_limit_bytes=48 * 1024 * 1024),
    )(*args)

    return {"refined_attn": refined, "ans_pred": ans_pred}


# ----------------------------------------------------------------------------
if __name__ == "__main__":
    # Small stand-in shapes consistent with the module's interface.
    B = 2
    hidden_feat_size = 64       # module default -> 2H=128 (lane-dense), 4H=256, 3H=192
    atten_dim = 512             # stand-in for 4*12*115*115
    im_feat_dim = 384           # stand-in for 36*2048
    q_feat_dim = 128            # stand-in for 300
    ans_dim = 256               # stand-in for 3000
    out_atten_dim = 14 * 14     # 196, fixed by the module

    key = jax.random.PRNGKey(0)
    k_par, k_att, k_im, k_q, k_ans = jax.random.split(key, 5)

    params = make_params(k_par,
                         atten_dim=atten_dim,
                         hidden_feat_size=hidden_feat_size,
                         q_feat_dim=q_feat_dim,
                         im_feat_dim=im_feat_dim,
                         ans_dim=ans_dim,
                         out_atten_dim=out_atten_dim)

    attention = jax.random.normal(k_att, (B, atten_dim), jnp.float32)
    im_feat = jax.random.normal(k_im, (B, im_feat_dim), jnp.float32)
    q_feat = jax.random.normal(k_q, (B, q_feat_dim), jnp.float32)
    ans_scores = jax.random.normal(k_ans, (B, ans_dim), jnp.float32)

    # tk=128 -> 4 K-steps, exercising the accumulator / pl.when path.
    fwd = jax.jit(functools.partial(attention_refine_forward, params, tk=128))
    out = fwd(attention, im_feat, q_feat, ans_scores)
    jax.block_until_ready(out)

    assert out["refined_attn"].shape == (B, out_atten_dim)
    assert out["ans_pred"].shape == (B, ans_dim)
    # Softmax rows must sum to 1.
    assert jnp.allclose(jnp.sum(out["refined_attn"], axis=-1), 1.0, atol=1e-3)
    print("KERNEL_OK")
</pallas_src>

<mosaic_0001>
module attributes {stable_mosaic.version = 11 : i64} {
  func.func @_fused_kernel(%arg0: i32, %arg1: memref<2x128xf32, #tpu.memory_space<vmem>>, %arg2: memref<128x128xbf16, #tpu.memory_space<vmem>>, %arg3: memref<1x128xf32, #tpu.memory_space<vmem>>, %arg4: memref<2x384xf32, #tpu.memory_space<vmem>>, %arg5: memref<384x128xbf16, #tpu.memory_space<vmem>>, %arg6: memref<1x128xf32, #tpu.memory_space<vmem>>, %arg7: memref<2x128xf32, #tpu.memory_space<vmem>>, %arg8: memref<128x128xbf16, #tpu.memory_space<vmem>>, %arg9: memref<1x128xf32, #tpu.memory_space<vmem>>, %arg10: memref<2x256xf32, #tpu.memory_space<vmem>>, %arg11: memref<256x128xbf16, #tpu.memory_space<vmem>>, %arg12: memref<1x128xf32, #tpu.memory_space<vmem>>, %arg13: memref<128x256xbf16, #tpu.memory_space<vmem>>, %arg14: memref<128x256xbf16, #tpu.memory_space<vmem>>, %arg15: memref<128x256xbf16, #tpu.memory_space<vmem>>, %arg16: memref<128x256xbf16, #tpu.memory_space<vmem>>, %arg17: memref<1x256xf32, #tpu.memory_space<vmem>>, %arg18: memref<256x192xbf16, #tpu.memory_space<vmem>>, %arg19: memref<1x192xf32, #tpu.memory_space<vmem>>, %arg20: memref<192x192xbf16, #tpu.memory_space<vmem>>, %arg21: memref<1x192xf32, #tpu.memory_space<vmem>>, %arg22: memref<192x196xbf16, #tpu.memory_space<vmem>>, %arg23: memref<1x196xf32, #tpu.memory_space<vmem>>, %arg24: memref<192x256xbf16, #tpu.memory_space<vmem>>, %arg25: memref<1x256xf32, #tpu.memory_space<vmem>>, %arg26: memref<2x196xf32, #tpu.memory_space<vmem>>, %arg27: memref<2x256xf32, #tpu.memory_space<vmem>>, %arg28: memref<2x128xf32, #tpu.memory_space<vmem>>) attributes {dimension_semantics = [#tpu.dimension_semantics<arbitrary>], iteration_bounds = array<i64: 4>, scalar_prefetch = 0 : i64, scratch_operands = 1 : i64, tpu.core_type = #tpu.core_type<tc>, window_params = [{transform_indices = @transform_0, window_bounds = array<i64: 2, 128>}, {transform_indices = @transform_1, window_bounds = array<i64: 128, 128>}, {pipeline_mode = #tpu.pipeline_mode<synchronous>, transform_indices = @transform_2, window_bounds = array<i64: 1, 128>}, {pipeline_mode = #tpu.pipeline_mode<synchronous>, transform_indices = @transform_3, window_bounds = array<i64: 2, 384>}, {pipeline_mode = #tpu.pipeline_mode<synchronous>, transform_indices = @transform_4, window_bounds = array<i64: 384, 128>}, {pipeline_mode = #tpu.pipeline_mode<synchronous>, transform_indices = @transform_5, window_bounds = array<i64: 1, 128>}, {pipeline_mode = #tpu.pipeline_mode<synchronous>, transform_indices = @transform_6, window_bounds = array<i64: 2, 128>}, {pipeline_mode = #tpu.pipeline_mode<synchronous>, transform_indices = @transform_7, window_bounds = array<i64: 128, 128>}, {pipeline_mode = #tpu.pipeline_mode<synchronous>, transform_indices = @transform_8, window_bounds = array<i64: 1, 128>}, {pipeline_mode = #tpu.pipeline_mode<synchronous>, transform_indices = @transform_9, window_bounds = array<i64: 2, 256>}, {pipeline_mode = #tpu.pipeline_mode<synchronous>, transform_indices = @transform_10, window_bounds = array<i64: 256, 128>}, {pipeline_mode = #tpu.pipeline_mode<synchronous>, transform_indices = @transform_11, window_bounds = array<i64: 1, 128>}, {pipeline_mode = #tpu.pipeline_mode<synchronous>, transform_indices = @transform_12, window_bounds = array<i64: 128, 256>}, {pipeline_mode = #tpu.pipeline_mode<synchronous>, transform_indices = @transform_13, window_bounds = array<i64: 128, 256>}, {pipeline_mode = #tpu.pipeline_mode<synchronous>, transform_indices = @transform_14, window_bounds = array<i64: 128, 256>}, {pipeline_mode = #tpu.pipeline_mode<synchronous>, transform_indices = @transform_15, window_bounds = array<i64: 128, 256>}, {pipeline_mode = #tpu.pipeline_mode<synchronous>, transform_indices = @transform_16, window_bounds = array<i64: 1, 256>}, {pipeline_mode = #tpu.pipeline_mode<synchronous>, transform_indices = @transform_17, window_bounds = array<i64: 256, 192>}, {pipeline_mode = #tpu.pipeline_mode<synchronous>, transform_indices = @transform_18, window_bounds = array<i64: 1, 192>}, {pipeline_mode = #tpu.pipeline_mode<synchronous>, transform_indices = @transform_19, window_bounds = array<i64: 192, 192>}, {pipeline_mode = #tpu.pipeline_mode<synchronous>, transform_indices = @transform_20, window_bounds = array<i64: 1, 192>}, {pipeline_mode = #tpu.pipeline_mode<synchronous>, transform_indices = @transform_21, window_bounds = array<i64: 192, 196>}, {pipeline_mode = #tpu.pipeline_mode<synchronous>, transform_indices = @transform_22, window_bounds = array<i64: 1, 196>}, {pipeline_mode = #tpu.pipeline_mode<synchronous>, transform_indices = @transform_23, window_bounds = array<i64: 192, 256>}, {pipeline_mode = #tpu.pipeline_mode<synchronous>, transform_indices = @transform_24, window_bounds = array<i64: 1, 256>}, {pipeline_mode = #tpu.pipeline_mode<synchronous>, transform_indices = @transform_25, window_bounds = array<i64: 2, 196>}, {pipeline_mode = #tpu.pipeline_mode<synchronous>, transform_indices = @transform_26, window_bounds = array<i64: 2, 256>}]} {
    %c0_i32 = arith.constant 0 : i32
    %0 = arith.cmpi eq, %arg0, %c0_i32 : i32
    %1 = arith.extui %0 : i1 to i32
    %c0_i32_0 = arith.constant 0 : i32
    %2 = arith.cmpi ne, %1, %c0_i32_0 : i32
    scf.if %2 {
      %cst_9 = arith.constant 0.000000e+00 : f32
      %13 = vector.broadcast %cst_9 : f32 to vector<2x128xf32>
      %c0_10 = arith.constant 0 : index
      %c0_11 = arith.constant 0 : index
      %14 = vector.load %arg28[%c0_10, %c0_11] : memref<2x128xf32, #tpu.memory_space<vmem>>, vector<2x128xf32>
      tpu.vector_store %arg28[%c0_10, %c0_11], %13 {strides = array<i32>} : memref<2x128xf32, #tpu.memory_space<vmem>>, vector<2x128xf32>,
    } else {
    }
    %c0 = arith.constant 0 : index
    %c0_1 = arith.constant 0 : index
    %3 = vector.load %arg28[%c0, %c0_1] : memref<2x128xf32, #tpu.memory_space<vmem>>, vector<2x128xf32>
    %c0_2 = arith.constant 0 : index
    %c0_3 = arith.constant 0 : index
    %4 = vector.load %arg1[%c0_2, %c0_3] : memref<2x128xf32, #tpu.memory_space<vmem>>, vector<2x128xf32>
    %5 = arith.truncf %4 : vector<2x128xf32> to vector<2x128xbf16>
    %c0_4 = arith.constant 0 : index
    %c0_5 = arith.constant 0 : index
    %6 = vector.load %arg2[%c0_4, %c0_5] : memref<128x128xbf16, #tpu.memory_space<vmem>>, vector<128x128xbf16>
    %cst = arith.constant dense<0.000000e+00> : vector<2x128xf32>
    %7 = tpu.matmul %5, %6, %cst {dimension_numbers = #tpu.dot_dimension_numbers<[1], [0], [0], [1], [0, 0, 1, 1], [], []>} : vector<2x128xbf16>, vector<128x128xbf16>, vector<2x128xf32> -> vector<2x128xf32>
    %8 = arith.addf %3, %7 : vector<2x128xf32>
    %c0_6 = arith.constant 0 : index
    %c0_7 = arith.constant 0 : index
    %9 = vector.load %arg28[%c0_6, %c0_7] : memref<2x128xf32, #tpu.memory_space<vmem>>, vector<2x128xf32>
    tpu.vector_store %arg28[%c0_6, %c0_7], %8 {strides = array<i32>} : memref<2x128xf32, #tpu.memory_space<vmem>>, vector<2x128xf32>,
    %c3_i32 = arith.constant 3 : i32
    %10 = arith.cmpi eq, %arg0, %c3_i32 : i32
    %11 = arith.extui %10 : i1 to i32
    %c0_i32_8 = arith.constant 0 : i32
    %12 = arith.cmpi ne, %11, %c0_i32_8 : i32
    scf.if %12 {
      %c0_9 = arith.constant 0 : index
      %c0_10 = arith.constant 0 : index
      %13 = vector.load %arg28[%c0_9, %c0_10] : memref<2x128xf32, #tpu.memory_space<vmem>>, vector<2x128xf32>
      %c0_11 = arith.constant 0 : index
      %c0_12 = arith.constant 0 : index
      %14 = vector.load %arg3[%c0_11, %c0_12] : memref<1x128xf32, #tpu.memory_space<vmem>>, vector<1x128xf32>
      %15 = vector.broadcast %14 : vector<1x128xf32> to vector<2x128xf32>
      %16 = arith.addf %13, %15 : vector<2x128xf32>
      %cst_13 = arith.constant 0.000000e+00 : f32
      %17 = vector.broadcast %cst_13 : f32 to vector<2x128xf32>
      %18 = arith.cmpf oge, %16, %17 : vector<2x128xf32>
      %cst_14 = arith.constant 1.000000e-01 : f32
      %19 = vector.broadcast %cst_14 : f32 to vector<2x128xf32>
      %20 = arith.mulf %19, %16 : vector<2x128xf32>
      %21 = arith.select %18, %16, %20 : vector<2x128xi1>, vector<2x128xf32>
      %c0_15 = arith.constant 0 : index
      %c0_16 = arith.constant 0 : index
      %22 = vector.load %arg4[%c0_15, %c0_16] : memref<2x384xf32, #tpu.memory_space<vmem>>, vector<2x384xf32>
      %23 = arith.truncf %22 : vector<2x384xf32> to vector<2x384xbf16>
      %c0_17 = arith.constant 0 : index
      %c0_18 = arith.constant 0 : index
      %24 = vector.load %arg5[%c0_17, %c0_18] : memref<384x128xbf16, #tpu.memory_space<vmem>>, vector<384x128xbf16>
      %cst_19 = arith.constant dense<0.000000e+00> : vector<2x128xf32>
      %25 = tpu.matmul %23, %24, %cst_19 {dimension_numbers = #tpu.dot_dimension_numbers<[1], [0], [0], [1], [0, 0, 1, 1], [], []>} : vector<2x384xbf16>, vector<384x128xbf16>, vector<2x128xf32> -> vector<2x128xf32>
      %c0_20 = arith.constant 0 : index
      %c0_21 = arith.constant 0 : index
      %26 = vector.load %arg6[%c0_20, %c0_21] : memref<1x128xf32, #tpu.memory_space<vmem>>, vector<1x128xf32>
      %27 = vector.broadcast %26 : vector<1x128xf32> to vector<2x128xf32>
      %28 = arith.addf %25, %27 : vector<2x128xf32>
      %cst_22 = arith.constant 0.000000e+00 : f32
      %29 = vector.broadcast %cst_22 : f32 to vector<2x128xf32>
      %30 = arith.cmpf oge, %28, %29 : vector<2x128xf32>
      %cst_23 = arith.constant 1.000000e-01 : f32
      %31 = vector.broadcast %cst_23 : f32 to vector<2x128xf32>
      %32 = arith.mulf %31, %28 : vector<2x128xf32>
      %33 = arith.select %30, %28, %32 : vector<2x128xi1>, vector<2x128xf32>
      %c0_24 = arith.constant 0 : index
      %c0_25 = arith.constant 0 : index
      %34 = vector.load %arg7[%c0_24, %c0_25] : memref<2x128xf32, #tpu.memory_space<vmem>>, vector<2x128xf32>
      %35 = arith.truncf %34 : vector<2x128xf32> to vector<2x128xbf16>
      %c0_26 = arith.constant 0 : index
      %c0_27 = arith.constant 0 : index
      %36 = vector.load %arg8[%c0_26, %c0_27] : memref<128x128xbf16, #tpu.memory_space<vmem>>, vector<128x128xbf16>
      %cst_28 = arith.constant dense<0.000000e+00> : vector<2x128xf32>
      %37 = tpu.matmul %35, %36, %cst_28 {dimension_numbers = #tpu.dot_dimension_numbers<[1], [0], [0], [1], [0, 0, 1, 1], [], []>} : vector<2x128xbf16>, vector<128x128xbf16>, vector<2x128xf32> -> vector<2x128xf32>
      %c0_29 = arith.constant 0 : index
      %c0_30 = arith.constant 0 : index
      %38 = vector.load %arg9[%c0_29, %c0_30] : memref<1x128xf32, #tpu.memory_space<vmem>>, vector<1x128xf32>
      %39 = vector.broadcast %38 : vector<1x128xf32> to vector<2x128xf32>
      %40 = arith.addf %37, %39 : vector<2x128xf32>
      %cst_31 = arith.constant 0.000000e+00 : f32
      %41 = vector.broadcast %cst_31 : f32 to vector<2x128xf32>
      %42 = arith.cmpf oge, %40, %41 : vector<2x128xf32>
      %cst_32 = arith.constant 1.000000e-01 : f32
      %43 = vector.broadcast %cst_32 : f32 to vector<2x128xf32>
      %44 = arith.mulf %43, %40 : vector<2x128xf32>
      %45 = arith.select %42, %40, %44 : vector<2x128xi1>, vector<2x128xf32>
      %c0_33 = arith.constant 0 : index
      %c0_34 = arith.constant 0 : index
      %46 = vector.load %arg10[%c0_33, %c0_34] : memref<2x256xf32, #tpu.memory_space<vmem>>, vector<2x256xf32>
      %47 = arith.truncf %46 : vector<2x256xf32> to vector<2x256xbf16>
      %c0_35 = arith.constant 0 : index
      %c0_36 = arith.constant 0 : index
      %48 = vector.load %arg11[%c0_35, %c0_36] : memref<256x128xbf16, #tpu.memory_space<vmem>>, vector<256x128xbf16>
      %cst_37 = arith.constant dense<0.000000e+00> : vector<2x128xf32>
      %49 = tpu.matmul %47, %48, %cst_37 {dimension_numbers = #tpu.dot_dimension_numbers<[1], [0], [0], [1], [0, 0, 1, 1], [], []>} : vector<2x256xbf16>, vector<256x128xbf16>, vector<2x128xf32> -> vector<2x128xf32>
      %c0_38 = arith.constant 0 : index
      %c0_39 = arith.constant 0 : index
      %50 = vector.load %arg12[%c0_38, %c0_39] : memref<1x128xf32, #tpu.memory_space<vmem>>, vector<1x128xf32>
      %51 = vector.broadcast %50 : vector<1x128xf32> to vector<2x128xf32>
      %52 = arith.addf %49, %51 : vector<2x128xf32>
      %cst_40 = arith.constant 0.000000e+00 : f32
      %53 = vector.broadcast %cst_40 : f32 to vector<2x128xf32>
      %54 = arith.cmpf oge, %52, %53 : vector<2x128xf32>
      %cst_41 = arith.constant 1.000000e-01 : f32
      %55 = vector.broadcast %cst_41 : f32 to vector<2x128xf32>
      %56 = arith.mulf %55, %52 : vector<2x128xf32>
      %57 = arith.select %54, %52, %56 : vector<2x128xi1>, vector<2x128xf32>
      %58 = arith.truncf %21 : vector<2x128xf32> to vector<2x128xbf16>
      %c0_42 = arith.constant 0 : index
      %c0_43 = arith.constant 0 : index
      %59 = vector.load %arg13[%c0_42, %c0_43] : memref<128x256xbf16, #tpu.memory_space<vmem>>, vector<128x256xbf16>
      %cst_44 = arith.constant dense<0.000000e+00> : vector<2x256xf32>
      %60 = tpu.matmul %58, %59, %cst_44 {dimension_numbers = #tpu.dot_dimension_numbers<[1], [0], [0], [1], [0, 0, 1, 1], [], []>} : vector<2x128xbf16>, vector<128x256xbf16>, vector<2x256xf32> -> vector<2x256xf32>
      %61 = arith.truncf %33 : vector<2x128xf32> to vector<2x128xbf16>
      %c0_45 = arith.constant 0 : index
      %c0_46 = arith.constant 0 : index
      %62 = vector.load %arg14[%c0_45, %c0_46] : memref<128x256xbf16, #tpu.memory_space<vmem>>, vector<128x256xbf16>
      %cst_47 = arith.constant dense<0.000000e+00> : vector<2x256xf32>
      %63 = tpu.matmul %61, %62, %cst_47 {dimension_numbers = #tpu.dot_dimension_numbers<[1], [0], [0], [1], [0, 0, 1, 1], [], []>} : vector<2x128xbf16>, vector<128x256xbf16>, vector<2x256xf32> -> vector<2x256xf32>
      %64 = arith.addf %60, %63 : vector<2x256xf32>
      %65 = arith.truncf %45 : vector<2x128xf32> to vector<2x128xbf16>
      %c0_48 = arith.constant 0 : index
      %c0_49 = arith.constant 0 : index
      %66 = vector.load %arg15[%c0_48, %c0_49] : memref<128x256xbf16, #tpu.memory_space<vmem>>, vector<128x256xbf16>
      %cst_50 = arith.constant dense<0.000000e+00> : vector<2x256xf32>
      %67 = tpu.matmul %65, %66, %cst_50 {dimension_numbers = #tpu.dot_dimension_numbers<[1], [0], [0], [1], [0, 0, 1, 1], [], []>} : vector<2x128xbf16>, vector<128x256xbf16>, vector<2x256xf32> -> vector<2x256xf32>
      %68 = arith.addf %64, %67 : vector<2x256xf32>
      %69 = arith.truncf %57 : vector<2x128xf32> to vector<2x128xbf16>
      %c0_51 = arith.constant 0 : index
      %c0_52 = arith.constant 0 : index
      %70 = vector.load %arg16[%c0_51, %c0_52] : memref<128x256xbf16, #tpu.memory_space<vmem>>, vector<128x256xbf16>
      %cst_53 = arith.constant dense<0.000000e+00> : vector<2x256xf32>
      %71 = tpu.matmul %69, %70, %cst_53 {dimension_numbers = #tpu.dot_dimension_numbers<[1], [0], [0], [1], [0, 0, 1, 1], [], []>} : vector<2x128xbf16>, vector<128x256xbf16>, vector<2x256xf32> -> vector<2x256xf32>
      %72 = arith.addf %68, %71 : vector<2x256xf32>
      %c0_54 = arith.constant 0 : index
      %c0_55 = arith.constant 0 : index
      %73 = vector.load %arg17[%c0_54, %c0_55] : memref<1x256xf32, #tpu.memory_space<vmem>>, vector<1x256xf32>
      %74 = vector.broadcast %73 : vector<1x256xf32> to vector<2x256xf32>
      %75 = arith.addf %72, %74 : vector<2x256xf32>
      %cst_56 = arith.constant 0.000000e+00 : f32
      %76 = vector.broadcast %cst_56 : f32 to vector<2x256xf32>
      %77 = arith.cmpf oge, %75, %76 : vector<2x256xf32>
      %cst_57 = arith.constant 1.000000e-01 : f32
      %78 = vector.broadcast %cst_57 : f32 to vector<2x256xf32>
      %79 = arith.mulf %78, %75 : vector<2x256xf32>
      %80 = arith.select %77, %75, %79 : vector<2x256xi1>, vector<2x256xf32>
      %81 = arith.truncf %80 : vector<2x256xf32> to vector<2x256xbf16>
      %c0_58 = arith.constant 0 : index
      %c0_59 = arith.constant 0 : index
      %82 = vector.load %arg18[%c0_58, %c0_59] : memref<256x192xbf16, #tpu.memory_space<vmem>>, vector<256x192xbf16>
      %cst_60 = arith.constant dense<0.000000e+00> : vector<2x192xf32>
      %83 = tpu.matmul %81, %82, %cst_60 {dimension_numbers = #tpu.dot_dimension_numbers<[1], [0], [0], [1], [0, 0, 1, 1], [], []>} : vector<2x256xbf16>, vector<256x192xbf16>, vector<2x192xf32> -> vector<2x192xf32>
      %c0_61 = arith.constant 0 : index
      %c0_62 = arith.constant 0 : index
      %84 = vector.load %arg19[%c0_61, %c0_62] : memref<1x192xf32, #tpu.memory_space<vmem>>, vector<1x192xf32>
      %85 = vector.broadcast %84 : vector<1x192xf32> to vector<2x192xf32>
      %86 = arith.addf %83, %85 : vector<2x192xf32>
      %cst_63 = arith.constant 0.000000e+00 : f32
      %87 = vector.broadcast %cst_63 : f32 to vector<2x192xf32>
      %88 = arith.cmpf oge, %86, %87 : vector<2x192xf32>
      %cst_64 = arith.constant 1.000000e-01 : f32
      %89 = vector.broadcast %cst_64 : f32 to vector<2x192xf32>
      %90 = arith.mulf %89, %86 : vector<2x192xf32>
      %91 = arith.select %88, %86, %90 : vector<2x192xi1>, vector<2x192xf32>
      %92 = arith.truncf %91 : vector<2x192xf32> to vector<2x192xbf16>
      %c0_65 = arith.constant 0 : index
      %c0_66 = arith.constant 0 : index
      %93 = vector.load %arg20[%c0_65, %c0_66] : memref<192x192xbf16, #tpu.memory_space<vmem>>, vector<192x192xbf16>
      %cst_67 = arith.constant dense<0.000000e+00> : vector<2x192xf32>
      %94 = tpu.matmul %92, %93, %cst_67 {dimension_numbers = #tpu.dot_dimension_numbers<[1], [0], [0], [1], [0, 0, 1, 1], [], []>} : vector<2x192xbf16>, vector<192x192xbf16>, vector<2x192xf32> -> vector<2x192xf32>
      %c0_68 = arith.constant 0 : index
      %c0_69 = arith.constant 0 : index
      %95 = vector.load %arg21[%c0_68, %c0_69] : memref<1x192xf32, #tpu.memory_space<vmem>>, vector<1x192xf32>
      %96 = vector.broadcast %95 : vector<1x192xf32> to vector<2x192xf32>
      %97 = arith.addf %94, %96 : vector<2x192xf32>
      %cst_70 = arith.constant 0.000000e+00 : f32
      %98 = vector.broadcast %cst_70 : f32 to vector<2x192xf32>
      %99 = arith.cmpf oge, %97, %98 : vector<2x192xf32>
      %cst_71 = arith.constant 1.000000e-01 : f32
      %100 = vector.broadcast %cst_71 : f32 to vector<2x192xf32>
      %101 = arith.mulf %100, %97 : vector<2x192xf32>
      %102 = arith.select %99, %97, %101 : vector<2x192xi1>, vector<2x192xf32>
      %103 = arith.truncf %102 : vector<2x192xf32> to vector<2x192xbf16>
      %c0_72 = arith.constant 0 : index
      %c0_73 = arith.constant 0 : index
      %104 = vector.load %arg22[%c0_72, %c0_73] : memref<192x196xbf16, #tpu.memory_space<vmem>>, vector<192x196xbf16>
      %cst_74 = arith.constant dense<0.000000e+00> : vector<2x196xf32>
      %105 = tpu.matmul %103, %104, %cst_74 {dimension_numbers = #tpu.dot_dimension_numbers<[1], [0], [0], [1], [0, 0, 1, 1], [], []>} : vector<2x192xbf16>, vector<192x196xbf16>, vector<2x196xf32> -> vector<2x196xf32>
      %c0_75 = arith.constant 0 : index
      %c0_76 = arith.constant 0 : index
      %106 = vector.load %arg23[%c0_75, %c0_76] : memref<1x196xf32, #tpu.memory_space<vmem>>, vector<1x196xf32>
      %107 = vector.broadcast %106 : vector<1x196xf32> to vector<2x196xf32>
      %108 = arith.addf %105, %107 : vector<2x196xf32>
      %cst_77 = arith.constant dense<0xFF800000> : vector<2xf32>
      %109 = vector.multi_reduction <maximumf>, %108, %cst_77 [1] : vector<2x196xf32> to vector<2xf32>
      %110 = vector.shape_cast %109 : vector<2xf32> to vector<2x1xf32>
      %111 = vector.broadcast %110 : vector<2x1xf32> to vector<2x196xf32>
      %112 = arith.subf %108, %111 : vector<2x196xf32>
      %113 = math.exp %112 : vector<2x196xf32>
      %cst_78 = arith.constant dense<0.000000e+00> : vector<2xf32>
      %114 = vector.multi_reduction <add>, %113, %cst_78 [1] : vector<2x196xf32> to vector<2xf32>
      %115 = vector.shape_cast %114 : vector<2xf32> to vector<2x1xf32>
      %116 = vector.broadcast %115 : vector<2x1xf32> to vector<2x196xf32>
      %117 = arith.divf %113, %116 : vector<2x196xf32>
      %c0_79 = arith.constant 0 : index
      %c0_80 = arith.constant 0 : index
      %118 = vector.load %arg26[%c0_79, %c0_80] : memref<2x196xf32, #tpu.memory_space<vmem>>, vector<2x196xf32>
      tpu.vector_store %arg26[%c0_79, %c0_80], %117 {strides = array<i32>} : memref<2x196xf32, #tpu.memory_space<vmem>>, vector<2x196xf32>,
      %119 = arith.truncf %91 : vector<2x192xf32> to vector<2x192xbf16>
      %c0_81 = arith.constant 0 : index
      %c0_82 = arith.constant 0 : index
      %120 = vector.load %arg24[%c0_81, %c0_82] : memref<192x256xbf16, #tpu.memory_space<vmem>>, vector<192x256xbf16>
      %cst_83 = arith.constant dense<0.000000e+00> : vector<2x256xf32>
      %121 = tpu.matmul %119, %120, %cst_83 {dimension_numbers = #tpu.dot_dimension_numbers<[1], [0], [0], [1], [0, 0, 1, 1], [], []>} : vector<2x192xbf16>, vector<192x256xbf16>, vector<2x256xf32> -> vector<2x256xf32>
      %c0_84 = arith.constant 0 : index
      %c0_85 = arith.constant 0 : index
      %122 = vector.load %arg25[%c0_84, %c0_85] : memref<1x256xf32, #tpu.memory_space<vmem>>, vector<1x256xf32>
      %123 = vector.broadcast %122 : vector<1x256xf32> to vector<2x256xf32>
      %124 = arith.addf %121, %123 : vector<2x256xf32>
      %c0_86 = arith.constant 0 : index
      %c0_87 = arith.constant 0 : index
      %125 = vector.load %arg27[%c0_86, %c0_87] : memref<2x256xf32, #tpu.memory_space<vmem>>, vector<2x256xf32>
      tpu.vector_store %arg27[%c0_86, %c0_87], %124 {strides = array<i32>} : memref<2x256xf32, #tpu.memory_space<vmem>>, vector<2x256xf32>,
    } else {
    }
    return
  }
  func.func @transform_0(%arg0: i32) -> (i32, i32) {
    %c0_i32 = arith.constant 0 : i32
    %c0_i32_0 = arith.constant 0 : i32
    return %c0_i32, %arg0 : i32, i32
  }
  func.func @transform_1(%arg0: i32) -> (i32, i32) {
    %c0_i32 = arith.constant 0 : i32
    %c0_i32_0 = arith.constant 0 : i32
    return %arg0, %c0_i32 : i32, i32
  }
  func.func @transform_2(%arg0: i32) -> (i32, i32) {
    %c0_i32 = arith.constant 0 : i32
    %c0_i32_0 = arith.constant 0 : i32
    %c0_i32_1 = arith.constant 0 : i32
    return %c0_i32, %c0_i32_0 : i32, i32
  }
  func.func @transform_3(%arg0: i32) -> (i32, i32) {
    %c0_i32 = arith.constant 0 : i32
    %c0_i32_0 = arith.constant 0 : i32
    %c0_i32_1 = arith.constant 0 : i32
    return %c0_i32, %c0_i32_0 : i32, i32
  }
  func.func @transform_4(%arg0: i32) -> (i32, i32) {
    %c0_i32 = arith.constant 0 : i32
    %c0_i32_0 = arith.constant 0 : i32
    %c0_i32_1 = arith.constant 0 : i32
    return %c0_i32, %c0_i32_0 : i32, i32
  }
  func.func @transform_5(%arg0: i32) -> (i32, i32) {
    %c0_i32 = arith.constant 0 : i32
    %c0_i32_0 = arith.constant 0 : i32
    %c0_i32_1 = arith.constant 0 : i32
    return %c0_i32, %c0_i32_0 : i32, i32
  }
  func.func @transform_6(%arg0: i32) -> (i32, i32) {
    %c0_i32 = arith.constant 0 : i32
    %c0_i32_0 = arith.constant 0 : i32
    %c0_i32_1 = arith.constant 0 : i32
    return %c0_i32, %c0_i32_0 : i32, i32
  }
  func.func @transform_7(%arg0: i32) -> (i32, i32) {
    %c0_i32 = arith.constant 0 : i32
    %c0_i32_0 = arith.constant 0 : i32
    %c0_i32_1 = arith.constant 0 : i32
    return %c0_i32, %c0_i32_0 : i32, i32
  }
  func.func @transform_8(%arg0: i32) -> (i32, i32) {
    %c0_i32 = arith.constant 0 : i32
    %c0_i32_0 = arith.constant 0 : i32
    %c0_i32_1 = arith.constant 0 : i32
    return %c0_i32, %c0_i32_0 : i32, i32
  }
  func.func @transform_9(%arg0: i32) -> (i32, i32) {
    %c0_i32 = arith.constant 0 : i32
    %c0_i32_0 = arith.constant 0 : i32
    %c0_i32_1 = arith.constant 0 : i32
    return %c0_i32, %c0_i32_0 : i32, i32
  }
  func.func @transform_10(%arg0: i32) -> (i32, i32) {
    %c0_i32 = arith.constant 0 : i32
    %c0_i32_0 = arith.constant 0 : i32
    %c0_i32_1 = arith.constant 0 : i32
    return %c0_i32, %c0_i32_0 : i32, i32
  }
  func.func @transform_11(%arg0: i32) -> (i32, i32) {
    %c0_i32 = arith.constant 0 : i32
    %c0_i32_0 = arith.constant 0 : i32
    %c0_i32_1 = arith.constant 0 : i32
    return %c0_i32, %c0_i32_0 : i32, i32
  }
  func.func @transform_12(%arg0: i32) -> (i32, i32) {
    %c0_i32 = arith.constant 0 : i32
    %c0_i32_0 = arith.constant 0 : i32
    %c0_i32_1 = arith.constant 0 : i32
    return %c0_i32, %c0_i32_0 : i32, i32
  }
  func.func @transform_13(%arg0: i32) -> (i32, i32) {
    %c0_i32 = arith.constant 0 : i32
    %c0_i32_0 = arith.constant 0 : i32
    %c0_i32_1 = arith.constant 0 : i32
    return %c0_i32, %c0_i32_0 : i32, i32
  }
  func.func @transform_14(%arg0: i32) -> (i32, i32) {
    %c0_i32 = arith.constant 0 : i32
    %c0_i32_0 = arith.constant 0 : i32
    %c0_i32_1 = arith.constant 0 : i32
    return %c0_i32, %c0_i32_0 : i32, i32
  }
  func.func @transform_15(%arg0: i32) -> (i32, i32) {
    %c0_i32 = arith.constant 0 : i32
    %c0_i32_0 = arith.constant 0 : i32
    %c0_i32_1 = arith.constant 0 : i32
    return %c0_i32, %c0_i32_0 : i32, i32
  }
  func.func @transform_16(%arg0: i32) -> (i32, i32) {
    %c0_i32 = arith.constant 0 : i32
    %c0_i32_0 = arith.constant 0 : i32
    %c0_i32_1 = arith.constant 0 : i32
    return %c0_i32, %c0_i32_0 : i32, i32
  }
  func.func @transform_17(%arg0: i32) -> (i32, i32) {
    %c0_i32 = arith.constant 0 : i32
    %c0_i32_0 = arith.constant 0 : i32
    %c0_i32_1 = arith.constant 0 : i32
    return %c0_i32, %c0_i32_0 : i32, i32
  }
  func.func @transform_18(%arg0: i32) -> (i32, i32) {
    %c0_i32 = arith.constant 0 : i32
    %c0_i32_0 = arith.constant 0 : i32
    %c0_i32_1 = arith.constant 0 : i32
    return %c0_i32, %c0_i32_0 : i32, i32
  }
  func.func @transform_19(%arg0: i32) -> (i32, i32) {
    %c0_i32 = arith.constant 0 : i32
    %c0_i32_0 = arith.constant 0 : i32
    %c0_i32_1 = arith.constant 0 : i32
    return %c0_i32, %c0_i32_0 : i32, i32
  }
  func.func @transform_20(%arg0: i32) -> (i32, i32) {
    %c0_i32 = arith.constant 0 : i32
    %c0_i32_0 = arith.constant 0 : i32
    %c0_i32_1 = arith.constant 0 : i32
    return %c0_i32, %c0_i32_0 : i32, i32
  }
  func.func @transform_21(%arg0: i32) -> (i32, i32) {
    %c0_i32 = arith.constant 0 : i32
    %c0_i32_0 = arith.constant 0 : i32
    %c0_i32_1 = arith.constant 0 : i32
    return %c0_i32, %c0_i32_0 : i32, i32
  }
  func.func @transform_22(%arg0: i32) -> (i32, i32) {
    %c0_i32 = arith.constant 0 : i32
    %c0_i32_0 = arith.constant 0 : i32
    %c0_i32_1 = arith.constant 0 : i32
    return %c0_i32, %c0_i32_0 : i32, i32
  }
  func.func @transform_23(%arg0: i32) -> (i32, i32) {
    %c0_i32 = arith.constant 0 : i32
    %c0_i32_0 = arith.constant 0 : i32
    %c0_i32_1 = arith.constant 0 : i32
    return %c0_i32, %c0_i32_0 : i32, i32
  }
  func.func @transform_24(%arg0: i32) -> (i32, i32) {
    %c0_i32 = arith.constant 0 : i32
    %c0_i32_0 = arith.constant 0 : i32
    %c0_i32_1 = arith.constant 0 : i32
    return %c0_i32, %c0_i32_0 : i32, i32
  }
  func.func @transform_25(%arg0: i32) -> (i32, i32) {
    %c0_i32 = arith.constant 0 : i32
    %c0_i32_0 = arith.constant 0 : i32
    %c0_i32_1 = arith.constant 0 : i32
    return %c0_i32, %c0_i32_0 : i32, i32
  }
  func.func @transform_26(%arg0: i32) -> (i32, i32) {
    %c0_i32 = arith.constant 0 : i32
    %c0_i32_0 = arith.constant 0 : i32
    %c0_i32_1 = arith.constant 0 : i32
    return %c0_i32, %c0_i32_0 : i32, i32
  }
}

</mosaic_0001>

<llo_original>
// kernel: attention_refine_forward.1
$region0: #{attention_refine_forward.1}
  #allocation0 [shape = 'u32[]', space=smem, size = 0x4, offset = 0x4, fixed_abs, tag = 'smem constant byte address 0x4 - core index']
  #allocation1 [shape = 'u32[144,128]{1,0:T(1,128)}', space=vmem, size = 0x12000, scoped, tag = 'internal scratch']
  #allocation2 [shape = 'f32[2,128]{1,0:T(2,128)}', space=vmem, size = 0x400, scoped, tag = 'scratch operand']
  %s0 = inlined_call_operand.vmem [shape: f32[2,512], index: 0, kind: input, shape index: {}]
  %s1 = inlined_call_operand.vmem [shape: bf16[512,128], index: 1, kind: input, shape index: {}]
  %s2 = inlined_call_operand.vmem [shape: f32[1,128], index: 2, kind: input, shape index: {}]
  %s3 = inlined_call_operand.vmem [shape: f32[2,384], index: 3, kind: input, shape index: {}]
  %s4 = inlined_call_operand.vmem [shape: bf16[384,128], index: 4, kind: input, shape index: {}]
  %s5 = inlined_call_operand.vmem [shape: f32[1,128], index: 5, kind: input, shape index: {}]
  %s6 = inlined_call_operand.vmem [shape: f32[2,128], index: 6, kind: input, shape index: {}]
  %s7 = inlined_call_operand.vmem [shape: bf16[128,128], index: 7, kind: input, shape index: {}]
  %s8 = inlined_call_operand.vmem [shape: f32[1,128], index: 8, kind: input, shape index: {}]
  %s9 = inlined_call_operand.vmem [shape: f32[2,256], index: 9, kind: input, shape index: {}]
  %s10 = inlined_call_operand.vmem [shape: bf16[256,128], index: 10, kind: input, shape index: {}]
  %s11 = inlined_call_operand.vmem [shape: f32[1,128], index: 11, kind: input, shape index: {}]
  %s12 = inlined_call_operand.vmem [shape: bf16[128,256], index: 12, kind: input, shape index: {}]
  %s13 = inlined_call_operand.vmem [shape: bf16[128,256], index: 13, kind: input, shape index: {}]
  %s14 = inlined_call_operand.vmem [shape: bf16[128,256], index: 14, kind: input, shape index: {}]
  %s15 = inlined_call_operand.vmem [shape: bf16[128,256], index: 15, kind: input, shape index: {}]
  %s16 = inlined_call_operand.vmem [shape: f32[1,256], index: 16, kind: input, shape index: {}]
  %s17 = inlined_call_operand.vmem [shape: bf16[256,192], index: 17, kind: input, shape index: {}]
  %s18 = inlined_call_operand.vmem [shape: f32[1,192], index: 18, kind: input, shape index: {}]
  %s19 = inlined_call_operand.vmem [shape: bf16[192,192], index: 19, kind: input, shape index: {}]
  %s20 = inlined_call_operand.vmem [shape: f32[1,192], index: 20, kind: input, shape index: {}]
  %s21 = inlined_call_operand.vmem [shape: bf16[192,196], index: 21, kind: input, shape index: {}]
  %s22 = inlined_call_operand.vmem [shape: f32[1,196], index: 22, kind: input, shape index: {}]
  %s23 = inlined_call_operand.vmem [shape: bf16[192,256], index: 23, kind: input, shape index: {}]
  %s24 = inlined_call_operand.vmem [shape: f32[1,256], index: 24, kind: input, shape index: {}]
  %s25 = inlined_call_operand.hbm [shape: f32[2,196], index: 25, kind: output, shape index: {0}]
  %s26 = inlined_call_operand.hbm [shape: f32[2,256], index: 26, kind: output, shape index: {1}]
  %27 = xla_tuple %s25, %s26
  %s28 = sld [smem:[#allocation0]]
  $region149: #{attention_refine_forward.1} parent=0
    _
  %s30 = ssub.s32 1, %s28
  %s31 = scalar_select 0, %s30, %s28
  $region1: #{attention_refine_forward.1} parent=0
    #allocation3 [shape = 'u8[2048]{0}', space=vmem, size = 0x800, scoped, tag = 'output window, operand 0, single buffered']
    #allocation4 [shape = 's32[2]{0}', space=sflag, size = 0x8, scoped, tag = 'scoped memory for attention_refine_forward.1']
    #allocation5 [shape = 'u8[2048]{0}', space=vmem, size = 0x800, scoped, tag = 'output window, operand 1, single buffered']
    #allocation6 [shape = 's32[1]{0}', space=sflag, size = 0x4, scoped, tag = 'scoped memory for attention_refine_forward.1']
    %32 = vsyncpa [#allocation4], 0
    %33 = vsyncpa [#allocation6], 0
    loop: start=0, step=1, limit=6
    $region2: #{attention_refine_forward.1} parent=1 // loop_pre_header
      _
    $region3: #{attention_refine_forward.1} parent=1 // loop_header
      %s35 = sphi 0, %s39
      %p36 = scmp.ge.s32.totalorder %s35, 6
      %s45 = sphi 0, %s47
      %s48 = sphi 0, %s45
      %s49 = sphi 0, %s48
      %s65 = sphi 0, %s49
      %s71 = sphi 0, %s73
      %s74 = sphi 0, %s71
      %s75 = sphi 0, %s74
      %s91 = sphi 0, %s75
      %s95 = sphi 0, %s95
      %s97 = sphi 0, %s95
      %s98 = sphi 0, %s97
      %s112 = sphi 0, %s98
      %s116 = sphi 0, %s116
      %s118 = sphi 0, %s116
      %s119 = sphi 0, %s118
      %s133 = sphi 0, %s119
      %s137 = sphi 0, %s137
      %s139 = sphi 0, %s137
      %s140 = sphi 0, %s139
      %s154 = sphi 0, %s140
      %s158 = sphi 0, %s158
      %s160 = sphi 0, %s158
      %s161 = sphi 0, %s160
      %s175 = sphi 0, %s161
      %s179 = sphi 0, %s179
      %s181 = sphi 0, %s179
      %s182 = sphi 0, %s181
      %s196 = sphi 0, %s182
      %s200 = sphi 0, %s200
      %s202 = sphi 0, %s200
      %s203 = sphi 0, %s202
      %s217 = sphi 0, %s203
      %s221 = sphi 0, %s221
      %s223 = sphi 0, %s221
      %s224 = sphi 0, %s223
      %s238 = sphi 0, %s224
      %s242 = sphi 0, %s242
      %s244 = sphi 0, %s242
      %s245 = sphi 0, %s244
      %s259 = sphi 0, %s245
      %s263 = sphi 0, %s263
      %s265 = sphi 0, %s263
      %s266 = sphi 0, %s265
      %s280 = sphi 0, %s266
      %s284 = sphi 0, %s284
      %s286 = sphi 0, %s284
      %s287 = sphi 0, %s286
      %s301 = sphi 0, %s287
      %s305 = sphi 0, %s305
      %s307 = sphi 0, %s305
      %s308 = sphi 0, %s307
      %s322 = sphi 0, %s308
      %s326 = sphi 0, %s326
      %s328 = sphi 0, %s326
      %s329 = sphi 0, %s328
      %s343 = sphi 0, %s329
      %s347 = sphi 0, %s347
      %s349 = sphi 0, %s347
      %s350 = sphi 0, %s349
      %s364 = sphi 0, %s350
      %s368 = sphi 0, %s368
      %s370 = sphi 0, %s368
      %s371 = sphi 0, %s370
      %s385 = sphi 0, %s371
      %s389 = sphi 0, %s389
      %s391 = sphi 0, %s389
      %s392 = sphi 0, %s391
      %s406 = sphi 0, %s392
      %s410 = sphi 0, %s410
      %s412 = sphi 0, %s410
      %s413 = sphi 0, %s412
      %s427 = sphi 0, %s413
      %s431 = sphi 0, %s431
      %s433 = sphi 0, %s431
      %s434 = sphi 0, %s433
      %s448 = sphi 0, %s434
      %s452 = sphi 0, %s452
      %s454 = sphi 0, %s452
      %s455 = sphi 0, %s454
      %s469 = sphi 0, %s455
      %s473 = sphi 0, %s473
      %s475 = sphi 0, %s473
      %s476 = sphi 0, %s475
      %s490 = sphi 0, %s476
      %s494 = sphi 0, %s494
      %s496 = sphi 0, %s494
      %s497 = sphi 0, %s496
      %s511 = sphi 0, %s497
      %s515 = sphi 0, %s515
      %s517 = sphi 0, %s515
      %s518 = sphi 0, %s517
      %s532 = sphi 0, %s518
      %s536 = sphi 0, %s536
      %s538 = sphi 0, %s536
      %s539 = sphi 0, %s538
      %s553 = sphi 0, %s539
      %s557 = sphi 0, %s557
      %s559 = sphi 0, %s557
      %s560 = sphi 0, %s559
      %s574 = sphi 0, %s560
      %s578 = sphi 0, %s578
      %s580 = sphi 0, %s578
      %s581 = sphi 0, %s580
      %s595 = sphi 0, %s581
      %s599 = sphi 0, %s599
      %s601 = sphi 0, %s599
      %s602 = sphi 0, %s601
      %s616 = sphi 0, %s602
    $region4: #{attention_refine_forward.1} parent=1 // loop_header_branch
      %38 = sbr.rel (%p36) target = $region8
    $region5: #{attention_refine_forward.1} parent=1 // loop_body
      %s40 = ssub.s32 %s35, 1
      %s41 = ssub.s32 %s35, 2
      %s42 = sadd.s32 %s35, 1
      %s43 = ssub.s32 %s35, %s42
      %p44 = scmp.eq.s32.totalorder %s43, 0
      %s46 = sadd.s32 %s45, 1
      %s47 = scalar_select %p44, %s45, %s46
      %p50 = pneg %p44
      %p51 = scmp.eq.s32.totalorder %s35, 3
      %p52 = por %p50, %p51
      %p53 = scmp.ne.s32.totalorder %s45, %s48
      %p54 = scmp.eq.s32.totalorder %s35, 0
      %p55 = por %p53, %p54
      %p56 = scmp.ne.s32.totalorder %s45, %s48
      %p57 = scmp.eq.s32.totalorder %s40, 3
      %p58 = por %p56, %p57
      %p59 = scmp.ne.s32.totalorder %s48, %s49
      %p60 = scmp.eq.s32.totalorder %s40, 0
      %p61 = por %p59, %p60
      %p62 = scmp.ne.s32.totalorder %s48, %s49
      %p63 = scmp.eq.s32.totalorder %s41, 3
      %p64 = por %p62, %p63
      %p66 = scmp.ne.s32.totalorder %s49, %s65
      %p67 = scmp.eq.s32.totalorder %s41, 0
      %p68 = por %p66, %p67
      %s69 = ssub.s32 %s35, %s42
      %p70 = scmp.eq.s32.totalorder %s69, 0
      %s72 = sadd.s32 %s71, 1
      %s73 = scalar_select %p70, %s71, %s72
      %p76 = pneg %p70
      %p77 = scmp.eq.s32.totalorder %s35, 3
      %p78 = por %p76, %p77
      %p79 = scmp.ne.s32.totalorder %s71, %s74
      %p80 = scmp.eq.s32.totalorder %s35, 0
      %p81 = por %p79, %p80
      %p82 = scmp.ne.s32.totalorder %s71, %s74
      %p83 = scmp.eq.s32.totalorder %s40, 3
      %p84 = por %p82, %p83
      %p85 = scmp.ne.s32.totalorder %s74, %s75
      %p86 = scmp.eq.s32.totalorder %s40, 0
      %p87 = por %p85, %p86
      %p88 = scmp.ne.s32.totalorder %s74, %s75
      %p89 = scmp.eq.s32.totalorder %s41, 3
      %p90 = por %p88, %p89
      %p92 = scmp.ne.s32.totalorder %s75, %s91
      %p93 = scmp.eq.s32.totalorder %s41, 0
      %p94 = por %p92, %p93
      %s96 = sadd.s32 %s95, 1
      %p99 = scmp.eq.s32.totalorder %s35, 3
      %p100 = scmp.ne.s32.totalorder %s95, %s97
      %p101 = scmp.eq.s32.totalorder %s35, 0
      %p102 = por %p100, %p101
      %p103 = scmp.ne.s32.totalorder %s95, %s97
      %p104 = scmp.eq.s32.totalorder %s40, 3
      %p105 = por %p103, %p104
      %p106 = scmp.ne.s32.totalorder %s97, %s98
      %p107 = scmp.eq.s32.totalorder %s40, 0
      %p108 = por %p106, %p107
      %p109 = scmp.ne.s32.totalorder %s97, %s98
      %p110 = scmp.eq.s32.totalorder %s41, 3
      %p111 = por %p109, %p110
      %p113 = scmp.ne.s32.totalorder %s98, %s112
      %p114 = scmp.eq.s32.totalorder %s41, 0
      %p115 = por %p113, %p114
      %s117 = sadd.s32 %s116, 1
      %p120 = scmp.eq.s32.totalorder %s35, 3
      %p121 = scmp.ne.s32.totalorder %s116, %s118
      %p122 = scmp.eq.s32.totalorder %s35, 0
      %p123 = por %p121, %p122
      %p124 = scmp.ne.s32.totalorder %s116, %s118
      %p125 = scmp.eq.s32.totalorder %s40, 3
      %p126 = por %p124, %p125
      %p127 = scmp.ne.s32.totalorder %s118, %s119
      %p128 = scmp.eq.s32.totalorder %s40, 0
      %p129 = por %p127, %p128
      %p130 = scmp.ne.s32.totalorder %s118, %s119
      %p131 = scmp.eq.s32.totalorder %s41, 3
      %p132 = por %p130, %p131
      %p134 = scmp.ne.s32.totalorder %s119, %s133
      %p135 = scmp.eq.s32.totalorder %s41, 0
      %p136 = por %p134, %p135
      %s138 = sadd.s32 %s137, 1
      %p141 = scmp.eq.s32.totalorder %s35, 3
      %p142 = scmp.ne.s32.totalorder %s137, %s139
      %p143 = scmp.eq.s32.totalorder %s35, 0
      %p144 = por %p142, %p143
      %p145 = scmp.ne.s32.totalorder %s137, %s139
      %p146 = scmp.eq.s32.totalorder %s40, 3
      %p147 = por %p145, %p146
      %p148 = scmp.ne.s32.totalorder %s139, %s140
      %p149 = scmp.eq.s32.totalorder %s40, 0
      %p150 = por %p148, %p149
      %p151 = scmp.ne.s32.totalorder %s139, %s140
      %p152 = scmp.eq.s32.totalorder %s41, 3
      %p153 = por %p151, %p152
      %p155 = scmp.ne.s32.totalorder %s140, %s154
      %p156 = scmp.eq.s32.totalorder %s41, 0
      %p157 = por %p155, %p156
      %s159 = sadd.s32 %s158, 1
      %p162 = scmp.eq.s32.totalorder %s35, 3
      %p163 = scmp.ne.s32.totalorder %s158, %s160
      %p164 = scmp.eq.s32.totalorder %s35, 0
      %p165 = por %p163, %p164
      %p166 = scmp.ne.s32.totalorder %s158, %s160
      %p167 = scmp.eq.s32.totalorder %s40, 3
      %p168 = por %p166, %p167
      %p169 = scmp.ne.s32.totalorder %s160, %s161
      %p170 = scmp.eq.s32.totalorder %s40, 0
      %p171 = por %p169, %p170
      %p172 = scmp.ne.s32.totalorder %s160, %s161
      %p173 = scmp.eq.s32.totalorder %s41, 3
      %p174 = por %p172, %p173
      %p176 = scmp.ne.s32.totalorder %s161, %s175
      %p177 = scmp.eq.s32.totalorder %s41, 0
      %p178 = por %p176, %p177
      %s180 = sadd.s32 %s179, 1
      %p183 = scmp.eq.s32.totalorder %s35, 3
      %p184 = scmp.ne.s32.totalorder %s179, %s181
      %p185 = scmp.eq.s32.totalorder %s35, 0
      %p186 = por %p184, %p185
      %p187 = scmp.ne.s32.totalorder %s179, %s181
      %p188 = scmp.eq.s32.totalorder %s40, 3
      %p189 = por %p187, %p188
      %p190 = scmp.ne.s32.totalorder %s181, %s182
      %p191 = scmp.eq.s32.totalorder %s40, 0
      %p192 = por %p190, %p191
      %p193 = scmp.ne.s32.totalorder %s181, %s182
      %p194 = scmp.eq.s32.totalorder %s41, 3
      %p195 = por %p193, %p194
      %p197 = scmp.ne.s32.totalorder %s182, %s196
      %p198 = scmp.eq.s32.totalorder %s41, 0
      %p199 = por %p197, %p198
      %s201 = sadd.s32 %s200, 1
      %p204 = scmp.eq.s32.totalorder %s35, 3
      %p205 = scmp.ne.s32.totalorder %s200, %s202
      %p206 = scmp.eq.s32.totalorder %s35, 0
      %p207 = por %p205, %p206
      %p208 = scmp.ne.s32.totalorder %s200, %s202
      %p209 = scmp.eq.s32.totalorder %s40, 3
      %p210 = por %p208, %p209
      %p211 = scmp.ne.s32.totalorder %s202, %s203
      %p212 = scmp.eq.s32.totalorder %s40, 0
      %p213 = por %p211, %p212
      %p214 = scmp.ne.s32.totalorder %s202, %s203
      %p215 = scmp.eq.s32.totalorder %s41, 3
      %p216 = por %p214, %p215
      %p218 = scmp.ne.s32.totalorder %s203, %s217
      %p219 = scmp.eq.s32.totalorder %s41, 0
      %p220 = por %p218, %p219
      %s222 = sadd.s32 %s221, 1
      %p225 = scmp.eq.s32.totalorder %s35, 3
      %p226 = scmp.ne.s32.totalorder %s221, %s223
      %p227 = scmp.eq.s32.totalorder %s35, 0
      %p228 = por %p226, %p227
      %p229 = scmp.ne.s32.totalorder %s221, %s223
      %p230 = scmp.eq.s32.totalorder %s40, 3
      %p231 = por %p229, %p230
      %p232 = scmp.ne.s32.totalorder %s223, %s224
      %p233 = scmp.eq.s32.totalorder %s40, 0
      %p234 = por %p232, %p233
      %p235 = scmp.ne.s32.totalorder %s223, %s224
      %p236 = scmp.eq.s32.totalorder %s41, 3
      %p237 = por %p235, %p236
      %p239 = scmp.ne.s32.totalorder %s224, %s238
      %p240 = scmp.eq.s32.totalorder %s41, 0
      %p241 = por %p239, %p240
      %s243 = sadd.s32 %s242, 1
      %p246 = scmp.eq.s32.totalorder %s35, 3
      %p247 = scmp.ne.s32.totalorder %s242, %s244
      %p248 = scmp.eq.s32.totalorder %s35, 0
      %p249 = por %p247, %p248
      %p250 = scmp.ne.s32.totalorder %s242, %s244
      %p251 = scmp.eq.s32.totalorder %s40, 3
      %p252 = por %p250, %p251
      %p253 = scmp.ne.s32.totalorder %s244, %s245
      %p254 = scmp.eq.s32.totalorder %s40, 0
      %p255 = por %p253, %p254
      %p256 = scmp.ne.s32.totalorder %s244, %s245
      %p257 = scmp.eq.s32.totalorder %s41, 3
      %p258 = por %p256, %p257
      %p260 = scmp.ne.s32.totalorder %s245, %s259
      %p261 = scmp.eq.s32.totalorder %s41, 0
      %p262 = por %p260, %p261
      %s264 = sadd.s32 %s263, 1
      %p267 = scmp.eq.s32.totalorder %s35, 3
      %p268 = scmp.ne.s32.totalorder %s263, %s265
      %p269 = scmp.eq.s32.totalorder %s35, 0
      %p270 = por %p268, %p269
      %p271 = scmp.ne.s32.totalorder %s263, %s265
      %p272 = scmp.eq.s32.totalorder %s40, 3
      %p273 = por %p271, %p272
      %p274 = scmp.ne.s32.totalorder %s265, %s266
      %p275 = scmp.eq.s32.totalorder %s40, 0
      %p276 = por %p274, %p275
      %p277 = scmp.ne.s32.totalorder %s265, %s266
      %p278 = scmp.eq.s32.totalorder %s41, 3
      %p279 = por %p277, %p278
      %p281 = scmp.ne.s32.totalorder %s266, %s280
      %p282 = scmp.eq.s32.totalorder %s41, 0
      %p283 = por %p281, %p282
      %s285 = sadd.s32 %s284, 1
      %p288 = scmp.eq.s32.totalorder %s35, 3
      %p289 = scmp.ne.s32.totalorder %s284, %s286
      %p290 = scmp.eq.s32.totalorder %s35, 0
      %p291 = por %p289, %p290
      %p292 = scmp.ne.s32.totalorder %s284, %s286
      %p293 = scmp.eq.s32.totalorder %s40, 3
      %p294 = por %p292, %p293
      %p295 = scmp.ne.s32.totalorder %s286, %s287
      %p296 = scmp.eq.s32.totalorder %s40, 0
      %p297 = por %p295, %p296
      %p298 = scmp.ne.s32.totalorder %s286, %s287
      %p299 = scmp.eq.s32.totalorder %s41, 3
      %p300 = por %p298, %p299
      %p302 = scmp.ne.s32.totalorder %s287, %s301
      %p303 = scmp.eq.s32.totalorder %s41, 0
      %p304 = por %p302, %p303
      %s306 = sadd.s32 %s305, 1
      %p309 = scmp.eq.s32.totalorder %s35, 3
      %p310 = scmp.ne.s32.totalorder %s305, %s307
      %p311 = scmp.eq.s32.totalorder %s35, 0
      %p312 = por %p310, %p311
      %p313 = scmp.ne.s32.totalorder %s305, %s307
      %p314 = scmp.eq.s32.totalorder %s40, 3
      %p315 = por %p313, %p314
      %p316 = scmp.ne.s32.totalorder %s307, %s308
      %p317 = scmp.eq.s32.totalorder %s40, 0
      %p318 = por %p316, %p317
      %p319 = scmp.ne.s32.totalorder %s307, %s308
      %p320 = scmp.eq.s32.totalorder %s41, 3
      %p321 = por %p319, %p320
      %p323 = scmp.ne.s32.totalorder %s308, %s322
      %p324 = scmp.eq.s32.totalorder %s41, 0
      %p325 = por %p323, %p324
      %s327 = sadd.s32 %s326, 1
      %p330 = scmp.eq.s32.totalorder %s35, 3
      %p331 = scmp.ne.s32.totalorder %s326, %s328
      %p332 = scmp.eq.s32.totalorder %s35, 0
      %p333 = por %p331, %p332
      %p334 = scmp.ne.s32.totalorder %s326, %s328
      %p335 = scmp.eq.s32.totalorder %s40, 3
      %p336 = por %p334, %p335
      %p337 = scmp.ne.s32.totalorder %s328, %s329
      %p338 = scmp.eq.s32.totalorder %s40, 0
      %p339 = por %p337, %p338
      %p340 = scmp.ne.s32.totalorder %s328, %s329
      %p341 = scmp.eq.s32.totalorder %s41, 3
      %p342 = por %p340, %p341
      %p344 = scmp.ne.s32.totalorder %s329, %s343
      %p345 = scmp.eq.s32.totalorder %s41, 0
      %p346 = por %p344, %p345
      %s348 = sadd.s32 %s347, 1
      %p351 = scmp.eq.s32.totalorder %s35, 3
      %p352 = scmp.ne.s32.totalorder %s347, %s349
      %p353 = scmp.eq.s32.totalorder %s35, 0
      %p354 = por %p352, %p353
      %p355 = scmp.ne.s32.totalorder %s347, %s349
      %p356 = scmp.eq.s32.totalorder %s40, 3
      %p357 = por %p355, %p356
      %p358 = scmp.ne.s32.totalorder %s349, %s350
      %p359 = scmp.eq.s32.totalorder %s40, 0
      %p360 = por %p358, %p359
      %p361 = scmp.ne.s32.totalorder %s349, %s350
      %p362 = scmp.eq.s32.totalorder %s41, 3
      %p363 = por %p361, %p362
      %p365 = scmp.ne.s32.totalorder %s350, %s364
      %p366 = scmp.eq.s32.totalorder %s41, 0
      %p367 = por %p365, %p366
      %s369 = sadd.s32 %s368, 1
      %p372 = scmp.eq.s32.totalorder %s35, 3
      %p373 = scmp.ne.s32.totalorder %s368, %s370
      %p374 = scmp.eq.s32.totalorder %s35, 0
      %p375 = por %p373, %p374
      %p376 = scmp.ne.s32.totalorder %s368, %s370
      %p377 = scmp.eq.s32.totalorder %s40, 3
      %p378 = por %p376, %p377
      %p379 = scmp.ne.s32.totalorder %s370, %s371
      %p380 = scmp.eq.s32.totalorder %s40, 0
      %p381 = por %p379, %p380
      %p382 = scmp.ne.s32.totalorder %s370, %s371
      %p383 = scmp.eq.s32.totalorder %s41, 3
      %p384 = por %p382, %p383
      %p386 = scmp.ne.s32.totalorder %s371, %s385
      %p387 = scmp.eq.s32.totalorder %s41, 0
      %p388 = por %p386, %p387
      %s390 = sadd.s32 %s389, 1
      %p393 = scmp.eq.s32.totalorder %s35, 3
      %p394 = scmp.ne.s32.totalorder %s389, %s391
      %p395 = scmp.eq.s32.totalorder %s35, 0
      %p396 = por %p394, %p395
      %p397 = scmp.ne.s32.totalorder %s389, %s391
      %p398 = scmp.eq.s32.totalorder %s40, 3
      %p399 = por %p397, %p398
      %p400 = scmp.ne.s32.totalorder %s391, %s392
      %p401 = scmp.eq.s32.totalorder %s40, 0
      %p402 = por %p400, %p401
      %p403 = scmp.ne.s32.totalorder %s391, %s392
      %p404 = scmp.eq.s32.totalorder %s41, 3
      %p405 = por %p403, %p404
      %p407 = scmp.ne.s32.totalorder %s392, %s406
      %p408 = scmp.eq.s32.totalorder %s41, 0
      %p409 = por %p407, %p408
      %s411 = sadd.s32 %s410, 1
      %p414 = scmp.eq.s32.totalorder %s35, 3
      %p415 = scmp.ne.s32.totalorder %s410, %s412
      %p416 = scmp.eq.s32.totalorder %s35, 0
      %p417 = por %p415, %p416
      %p418 = scmp.ne.s32.totalorder %s410, %s412
      %p419 = scmp.eq.s32.totalorder %s40, 3
      %p420 = por %p418, %p419
      %p421 = scmp.ne.s32.totalorder %s412, %s413
      %p422 = scmp.eq.s32.totalorder %s40, 0
      %p423 = por %p421, %p422
      %p424 = scmp.ne.s32.totalorder %s412, %s413
      %p425 = scmp.eq.s32.totalorder %s41, 3
      %p426 = por %p424, %p425
      %p428 = scmp.ne.s32.totalorder %s413, %s427
      %p429 = scmp.eq.s32.totalorder %s41, 0
      %p430 = por %p428, %p429
      %s432 = sadd.s32 %s431, 1
      %p435 = scmp.eq.s32.totalorder %s35, 3
      %p436 = scmp.ne.s32.totalorder %s431, %s433
      %p437 = scmp.eq.s32.totalorder %s35, 0
      %p438 = por %p436, %p437
      %p439 = scmp.ne.s32.totalorder %s431, %s433
      %p440 = scmp.eq.s32.totalorder %s40, 3
      %p441 = por %p439, %p440
      %p442 = scmp.ne.s32.totalorder %s433, %s434
      %p443 = scmp.eq.s32.totalorder %s40, 0
      %p444 = por %p442, %p443
      %p445 = scmp.ne.s32.totalorder %s433, %s434
      %p446 = scmp.eq.s32.totalorder %s41, 3
      %p447 = por %p445, %p446
      %p449 = scmp.ne.s32.totalorder %s434, %s448
      %p450 = scmp.eq.s32.totalorder %s41, 0
      %p451 = por %p449, %p450
      %s453 = sadd.s32 %s452, 1
      %p456 = scmp.eq.s32.totalorder %s35, 3
      %p457 = scmp.ne.s32.totalorder %s452, %s454
      %p458 = scmp.eq.s32.totalorder %s35, 0
      %p459 = por %p457, %p458
      %p460 = scmp.ne.s32.totalorder %s452, %s454
      %p461 = scmp.eq.s32.totalorder %s40, 3
      %p462 = por %p460, %p461
      %p463 = scmp.ne.s32.totalorder %s454, %s455
      %p464 = scmp.eq.s32.totalorder %s40, 0
      %p465 = por %p463, %p464
      %p466 = scmp.ne.s32.totalorder %s454, %s455
      %p467 = scmp.eq.s32.totalorder %s41, 3
      %p468 = por %p466, %p467
      %p470 = scmp.ne.s32.totalorder %s455, %s469
      %p471 = scmp.eq.s32.totalorder %s41, 0
      %p472 = por %p470, %p471
      %s474 = sadd.s32 %s473, 1
      %p477 = scmp.eq.s32.totalorder %s35, 3
      %p478 = scmp.ne.s32.totalorder %s473, %s475
      %p479 = scmp.eq.s32.totalorder %s35, 0
      %p480 = por %p478, %p479
      %p481 = scmp.ne.s32.totalorder %s473, %s475
      %p482 = scmp.eq.s32.totalorder %s40, 3
      %p483 = por %p481, %p482
      %p484 = scmp.ne.s32.totalorder %s475, %s476
      %p485 = scmp.eq.s32.totalorder %s40, 0
      %p486 = por %p484, %p485
      %p487 = scmp.ne.s32.totalorder %s475, %s476
      %p488 = scmp.eq.s32.totalorder %s41, 3
      %p489 = por %p487, %p488
      %p491 = scmp.ne.s32.totalorder %s476, %s490
      %p492 = scmp.eq.s32.totalorder %s41, 0
      %p493 = por %p491, %p492
      %s495 = sadd.s32 %s494, 1
      %p498 = scmp.eq.s32.totalorder %s35, 3
      %p499 = scmp.ne.s32.totalorder %s494, %s496
      %p500 = scmp.eq.s32.totalorder %s35, 0
      %p501 = por %p499, %p500
      %p502 = scmp.ne.s32.totalorder %s494, %s496
      %p503 = scmp.eq.s32.totalorder %s40, 3
      %p504 = por %p502, %p503
      %p505 = scmp.ne.s32.totalorder %s496, %s497
      %p506 = scmp.eq.s32.totalorder %s40, 0
      %p507 = por %p505, %p506
      %p508 = scmp.ne.s32.totalorder %s496, %s497
      %p509 = scmp.eq.s32.totalorder %s41, 3
      %p510 = por %p508, %p509
      %p512 = scmp.ne.s32.totalorder %s497, %s511
      %p513 = scmp.eq.s32.totalorder %s41, 0
      %p514 = por %p512, %p513
      %s516 = sadd.s32 %s515, 1
      %p519 = scmp.eq.s32.totalorder %s35, 3
      %p520 = scmp.ne.s32.totalorder %s515, %s517
      %p521 = scmp.eq.s32.totalorder %s35, 0
      %p522 = por %p520, %p521
      %p523 = scmp.ne.s32.totalorder %s515, %s517
      %p524 = scmp.eq.s32.totalorder %s40, 3
      %p525 = por %p523, %p524
      %p526 = scmp.ne.s32.totalorder %s517, %s518
      %p527 = scmp.eq.s32.totalorder %s40, 0
      %p528 = por %p526, %p527
      %p529 = scmp.ne.s32.totalorder %s517, %s518
      %p530 = scmp.eq.s32.totalorder %s41, 3
      %p531 = por %p529, %p530
      %p533 = scmp.ne.s32.totalorder %s518, %s532
      %p534 = scmp.eq.s32.totalorder %s41, 0
      %p535 = por %p533, %p534
      %s537 = sadd.s32 %s536, 1
      %p540 = scmp.eq.s32.totalorder %s35, 3
      %p541 = scmp.ne.s32.totalorder %s536, %s538
      %p542 = scmp.eq.s32.totalorder %s35, 0
      %p543 = por %p541, %p542
      %p544 = scmp.ne.s32.totalorder %s536, %s538
      %p545 = scmp.eq.s32.totalorder %s40, 3
      %p546 = por %p544, %p545
      %p547 = scmp.ne.s32.totalorder %s538, %s539
      %p548 = scmp.eq.s32.totalorder %s40, 0
      %p549 = por %p547, %p548
      %p550 = scmp.ne.s32.totalorder %s538, %s539
      %p551 = scmp.eq.s32.totalorder %s41, 3
      %p552 = por %p550, %p551
      %p554 = scmp.ne.s32.totalorder %s539, %s553
      %p555 = scmp.eq.s32.totalorder %s41, 0
      %p556 = por %p554, %p555
      %s558 = sadd.s32 %s557, 1
      %p561 = scmp.eq.s32.totalorder %s35, 3
      %p562 = scmp.ne.s32.totalorder %s557, %s559
      %p563 = scmp.eq.s32.totalorder %s35, 0
      %p564 = por %p562, %p563
      %p565 = scmp.ne.s32.totalorder %s557, %s559
      %p566 = scmp.eq.s32.totalorder %s40, 3
      %p567 = por %p565, %p566
      %p568 = scmp.ne.s32.totalorder %s559, %s560
      %p569 = scmp.eq.s32.totalorder %s40, 0
      %p570 = por %p568, %p569
      %p571 = scmp.ne.s32.totalorder %s559, %s560
      %p572 = scmp.eq.s32.totalorder %s41, 3
      %p573 = por %p571, %p572
      %p575 = scmp.ne.s32.totalorder %s560, %s574
      %p576 = scmp.eq.s32.totalorder %s41, 0
      %p577 = por %p575, %p576
      %s579 = sadd.s32 %s578, 1
      %p582 = scmp.eq.s32.totalorder %s35, 3
      %p583 = scmp.ne.s32.totalorder %s578, %s580
      %p584 = scmp.eq.s32.totalorder %s35, 0
      %p585 = por %p583, %p584
      %p586 = scmp.ne.s32.totalorder %s578, %s580
      %p587 = scmp.eq.s32.totalorder %s40, 3
      %p588 = por %p586, %p587
      %p589 = scmp.ne.s32.totalorder %s580, %s581
      %p590 = scmp.eq.s32.totalorder %s40, 0
      %p591 = por %p589, %p590
      %p592 = scmp.ne.s32.totalorder %s580, %s581
      %p593 = scmp.eq.s32.totalorder %s41, 3
      %p594 = por %p592, %p593
      %p596 = scmp.ne.s32.totalorder %s581, %s595
      %p597 = scmp.eq.s32.totalorder %s41, 0
      %p598 = por %p596, %p597
      %s600 = sadd.s32 %s599, 1
      %p603 = scmp.eq.s32.totalorder %s35, 3
      %p604 = scmp.ne.s32.totalorder %s599, %s601
      %p605 = scmp.eq.s32.totalorder %s35, 0
      %p606 = por %p604, %p605
      %p607 = scmp.ne.s32.totalorder %s599, %s601
      %p608 = scmp.eq.s32.totalorder %s40, 3
      %p609 = por %p607, %p608
      %p610 = scmp.ne.s32.totalorder %s601, %s602
      %p611 = scmp.eq.s32.totalorder %s40, 0
      %p612 = por %p610, %p611
      %p613 = scmp.ne.s32.totalorder %s601, %s602
      %p614 = scmp.eq.s32.totalorder %s41, 3
      %p615 = por %p613, %p614
      %p617 = scmp.ne.s32.totalorder %s602, %s616
      %p618 = scmp.eq.s32.totalorder %s41, 0
      %p619 = por %p617, %p618
      %p620 = scmp.le.s32.totalorder 1, %s35
      %p621 = scmp.lt.s32.totalorder %s35, 5
      %p622 = pnand %p620, %p621
      %p623 = pneg %p622
      // Predicated region
      $region9: #{attention_refine_forward.1} parent=5 // pred_check
        _
      $region10: #{attention_refine_forward.1} parent=5 // pred_check_branch
        %625 = sbr.rel (%p622) target = $region12
      $region11: #{attention_refine_forward.1} parent=5 // pred_region
        %s626 = ssub.s32 %s35, 1
        // Predicated region
        $region13: #{attention_refine_forward.1} parent=11 // pred_check
          %p627 = pneg %p108
        $region14: #{attention_refine_forward.1} parent=11 // pred_check_branch
          %629 = sbr.rel (%p627) target = $region16
        $region15: #{attention_refine_forward.1} parent=11 // pred_region
          _
        $region16: #{attention_refine_forward.1} parent=11 // pred_fallthru
          _
        // Predicated region
        $region17: #{attention_refine_forward.1} parent=11 // pred_check
          %p630 = pneg %p129
        $region18: #{attention_refine_forward.1} parent=11 // pred_check_branch
          %632 = sbr.rel (%p630) target = $region20
        $region19: #{attention_refine_forward.1} parent=11 // pred_region
          _
        $region20: #{attention_refine_forward.1} parent=11 // pred_fallthru
          _
        // Predicated region
        $region21: #{attention_refine_forward.1} parent=11 // pred_check
          %p633 = pneg %p150
        $region22: #{attention_refine_forward.1} parent=11 // pred_check_branch
          %635 = sbr.rel (%p633) target = $region24
        $region23: #{attention_refine_forward.1} parent=11 // pred_region
          _
        $region24: #{attention_refine_forward.1} parent=11 // pred_fallthru
          _
        // Predicated region
        $region25: #{attention_refine_forward.1} parent=11 // pred_check
          %p636 = pneg %p171
        $region26: #{attention_refine_forward.1} parent=11 // pred_check_branch
          %638 = sbr.rel (%p636) target = $region28
        $region27: #{attention_refine_forward.1} parent=11 // pred_region
          _
        $region28: #{attention_refine_forward.1} parent=11 // pred_fallthru
          _
        // Predicated region
        $region29: #{attention_refine_forward.1} parent=11 // pred_check
          %p639 = pneg %p192
        $region30: #{attention_refine_forward.1} parent=11 // pred_check_branch
          %641 = sbr.rel (%p639) target = $region32
        $region31: #{attention_refine_forward.1} parent=11 // pred_region
          _
        $region32: #{attention_refine_forward.1} parent=11 // pred_fallthru
          _
        // Predicated region
        $region33: #{attention_refine_forward.1} parent=11 // pred_check
          %p642 = pneg %p213
        $region34: #{attention_refine_forward.1} parent=11 // pred_check_branch
          %644 = sbr.rel (%p642) target = $region36
        $region35: #{attention_refine_forward.1} parent=11 // pred_region
          _
        $region36: #{attention_refine_forward.1} parent=11 // pred_fallthru
          _
        // Predicated region
        $region37: #{attention_refine_forward.1} parent=11 // pred_check
          %p645 = pneg %p234
        $region38: #{attention_refine_forward.1} parent=11 // pred_check_branch
          %647 = sbr.rel (%p645) target = $region40
        $region39: #{attention_refine_forward.1} parent=11 // pred_region
          _
        $region40: #{attention_refine_forward.1} parent=11 // pred_fallthru
          _
        // Predicated region
        $region41: #{attention_refine_forward.1} parent=11 // pred_check
          %p648 = pneg %p255
        $region42: #{attention_refine_forward.1} parent=11 // pred_check_branch
          %650 = sbr.rel (%p648) target = $region44
        $region43: #{attention_refine_forward.1} parent=11 // pred_region
          _
        $region44: #{attention_refine_forward.1} parent=11 // pred_fallthru
          _
        // Predicated region
        $region45: #{attention_refine_forward.1} parent=11 // pred_check
          %p651 = pneg %p276
        $region46: #{attention_refine_forward.1} parent=11 // pred_check_branch
          %653 = sbr.rel (%p651) target = $region48
        $region47: #{attention_refine_forward.1} parent=11 // pred_region
          _
        $region48: #{attention_refine_forward.1} parent=11 // pred_fallthru
          _
        // Predicated region
        $region49: #{attention_refine_forward.1} parent=11 // pred_check
          %p654 = pneg %p297
        $region50: #{attention_refine_forward.1} parent=11 // pred_check_branch
          %656 = sbr.rel (%p654) target = $region52
        $region51: #{attention_refine_forward.1} parent=11 // pred_region
          _
        $region52: #{attention_refine_forward.1} parent=11 // pred_fallthru
          _
        // Predicated region
        $region53: #{attention_refine_forward.1} parent=11 // pred_check
          %p657 = pneg %p318
        $region54: #{attention_refine_forward.1} parent=11 // pred_check_branch
          %659 = sbr.rel (%p657) target = $region56
        $region55: #{attention_refine_forward.1} parent=11 // pred_region
          _
        $region56: #{attention_refine_forward.1} parent=11 // pred_fallthru
          _
        // Predicated region
        $region57: #{attention_refine_forward.1} parent=11 // pred_check
          %p660 = pneg %p339
        $region58: #{attention_refine_forward.1} parent=11 // pred_check_branch
          %662 = sbr.rel (%p660) target = $region60
        $region59: #{attention_refine_forward.1} parent=11 // pred_region
          _
        $region60: #{attention_refine_forward.1} parent=11 // pred_fallthru
          _
        // Predicated region
        $region61: #{attention_refine_forward.1} parent=11 // pred_check
          %p663 = pneg %p360
        $region62: #{attention_refine_forward.1} parent=11 // pred_check_branch
          %665 = sbr.rel (%p663) target = $region64
        $region63: #{attention_refine_forward.1} parent=11 // pred_region
          _
        $region64: #{attention_refine_forward.1} parent=11 // pred_fallthru
          _
        // Predicated region
        $region65: #{attention_refine_forward.1} parent=11 // pred_check
          %p666 = pneg %p381
        $region66: #{attention_refine_forward.1} parent=11 // pred_check_branch
          %668 = sbr.rel (%p666) target = $region68
        $region67: #{attention_refine_forward.1} parent=11 // pred_region
          _
        $region68: #{attention_refine_forward.1} parent=11 // pred_fallthru
          _
        // Predicated region
        $region69: #{attention_refine_forward.1} parent=11 // pred_check
          %p669 = pneg %p402
        $region70: #{attention_refine_forward.1} parent=11 // pred_check_branch
          %671 = sbr.rel (%p669) target = $region72
        $region71: #{attention_refine_forward.1} parent=11 // pred_region
          _
        $region72: #{attention_refine_forward.1} parent=11 // pred_fallthru
          _
        // Predicated region
        $region73: #{attention_refine_forward.1} parent=11 // pred_check
          %p672 = pneg %p423
        $region74: #{attention_refine_forward.1} parent=11 // pred_check_branch
          %674 = sbr.rel (%p672) target = $region76
        $region75: #{attention_refine_forward.1} parent=11 // pred_region
          _
        $region76: #{attention_refine_forward.1} parent=11 // pred_fallthru
          _
        // Predicated region
        $region77: #{attention_refine_forward.1} parent=11 // pred_check
          %p675 = pneg %p444
        $region78: #{attention_refine_forward.1} parent=11 // pred_check_branch
          %677 = sbr.rel (%p675) target = $region80
        $region79: #{attention_refine_forward.1} parent=11 // pred_region
          _
        $region80: #{attention_refine_forward.1} parent=11 // pred_fallthru
          _
        // Predicated region
        $region81: #{attention_refine_forward.1} parent=11 // pred_check
          %p678 = pneg %p465
        $region82: #{attention_refine_forward.1} parent=11 // pred_check_branch
          %680 = sbr.rel (%p678) target = $region84
        $region83: #{attention_refine_forward.1} parent=11 // pred_region
          _
        $region84: #{attention_refine_forward.1} parent=11 // pred_fallthru
          _
        // Predicated region
        $region85: #{attention_refine_forward.1} parent=11 // pred_check
          %p681 = pneg %p486
        $region86: #{attention_refine_forward.1} parent=11 // pred_check_branch
          %683 = sbr.rel (%p681) target = $region88
        $region87: #{attention_refine_forward.1} parent=11 // pred_region
          _
        $region88: #{attention_refine_forward.1} parent=11 // pred_fallthru
          _
        // Predicated region
        $region89: #{attention_refine_forward.1} parent=11 // pred_check
          %p684 = pneg %p507
        $region90: #{attention_refine_forward.1} parent=11 // pred_check_branch
          %686 = sbr.rel (%p684) target = $region92
        $region91: #{attention_refine_forward.1} parent=11 // pred_region
          _
        $region92: #{attention_refine_forward.1} parent=11 // pred_fallthru
          _
        // Predicated region
        $region93: #{attention_refine_forward.1} parent=11 // pred_check
          %p687 = pneg %p528
        $region94: #{attention_refine_forward.1} parent=11 // pred_check_branch
          %689 = sbr.rel (%p687) target = $region96
        $region95: #{attention_refine_forward.1} parent=11 // pred_region
          _
        $region96: #{attention_refine_forward.1} parent=11 // pred_fallthru
          _
        // Predicated region
        $region97: #{attention_refine_forward.1} parent=11 // pred_check
          %p690 = pneg %p549
        $region98: #{attention_refine_forward.1} parent=11 // pred_check_branch
          %692 = sbr.rel (%p690) target = $region100
        $region99: #{attention_refine_forward.1} parent=11 // pred_region
          _
        $region100: #{attention_refine_forward.1} parent=11 // pred_fallthru
          _
        // Predicated region
        $region101: #{attention_refine_forward.1} parent=11 // pred_check
          %p693 = pneg %p570
        $region102: #{attention_refine_forward.1} parent=11 // pred_check_branch
          %695 = sbr.rel (%p693) target = $region104
        $region103: #{attention_refine_forward.1} parent=11 // pred_region
          _
        $region104: #{attention_refine_forward.1} parent=11 // pred_fallthru
          _
      $region12: #{attention_refine_forward.1} parent=5 // pred_fallthru
        _
      %p696 = scmp.lt.s32.totalorder %s35, 4
      // Predicated region
      $region105: #{attention_refine_forward.1} parent=5 // pred_check
        %p697 = pneg %p696
      $region106: #{attention_refine_forward.1} parent=5 // pred_check_branch
        %699 = sbr.rel (%p697) target = $region108
      $region107: #{attention_refine_forward.1} parent=5 // pred_region
        // Predicated region
        $region109: #{attention_refine_forward.1} parent=107 // pred_check
          %p700 = pneg %p55
        $region110: #{attention_refine_forward.1} parent=107 // pred_check_branch
          %702 = sbr.rel (%p700) target = $region112
        $region111: #{attention_refine_forward.1} parent=107 // pred_region
          %p703 = scmp.lt.s32.totalorder %s35, 3
          %s704 = scalar_select %p703, %s35, 3
          %s705 = smul.addr %s704, 2
          %s706 = scalar_lea.vmem %s0, %s705
        $region112: #{attention_refine_forward.1} parent=107 // pred_fallthru
          _
        // Predicated region
        $region113: #{attention_refine_forward.1} parent=107 // pred_check
          %p707 = pneg %p81
        $region114: #{attention_refine_forward.1} parent=107 // pred_check_branch
          %709 = sbr.rel (%p707) target = $region116
        $region115: #{attention_refine_forward.1} parent=107 // pred_region
          %s710 = smul.u32 16, %s35
          %p711 = scmp.lt.s32.totalorder %s710, 63
          %s712 = scalar_select %p711, %s710, 63
          %s713 = smul.addr %s712, 4
          %s714 = scalar_lea.vmem %s1, %s713
          %s715 = smul.u32 16, %s35
        $region116: #{attention_refine_forward.1} parent=107 // pred_fallthru
          _
      $region108: #{attention_refine_forward.1} parent=5 // pred_fallthru
        _
      %p716 = scmp.le.s32.totalorder 1, %s35
      %p717 = scmp.lt.s32.totalorder %s35, 5
      %p718 = pnand %p716, %p717
      %p719 = pneg %p718
      // Predicated region
      $region117: #{attention_refine_forward.1} parent=5 // pred_check
        _
      $region118: #{attention_refine_forward.1} parent=5 // pred_check_branch
        %721 = sbr.rel (%p718) target = $region120
      $region119: #{attention_refine_forward.1} parent=5 // pred_region
        %s722 = ssub.s32 %s35, 1
        %p723 = scmp.lt.s32.totalorder %s40, 3
        %s724 = scalar_select %p723, %s40, 3
        %s725 = smul.addr %s724, 2
        %s726 = scalar_lea.vmem %s0, %s725
        %p727 = pneg %p61
        %p728 = pneg %p58
        %s729 = smul.u32 16, %s40
        %p730 = scmp.lt.s32.totalorder %s729, 63
        %s731 = scalar_select %p730, %s729, 63
        %s732 = smul.addr %s731, 4
        %s733 = scalar_lea.vmem %s1, %s732
        %p734 = pneg %p87
        %p735 = pneg %p84
        %p736 = pneg %p108
        %p737 = pneg %p105
        %p738 = pneg %p129
        %p739 = pneg %p126
        %p740 = pneg %p150
        %p741 = pneg %p147
        %p742 = pneg %p171
        %p743 = pneg %p168
        %p744 = pneg %p192
        %p745 = pneg %p189
        %p746 = pneg %p213
        %p747 = pneg %p210
        %p748 = pneg %p234
        %p749 = pneg %p231
        %p750 = pneg %p255
        %p751 = pneg %p252
        %p752 = pneg %p276
        %p753 = pneg %p273
        %p754 = pneg %p297
        %p755 = pneg %p294
        %p756 = pneg %p318
        %p757 = pneg %p315
        %p758 = pneg %p339
        %p759 = pneg %p336
        %p760 = pneg %p360
        %p761 = pneg %p357
        %p762 = pneg %p381
        %p763 = pneg %p378
        %p764 = pneg %p402
        %p765 = pneg %p399
        %p766 = pneg %p423
        %p767 = pneg %p420
        %p768 = pneg %p444
        %p769 = pneg %p441
        %p770 = pneg %p465
        %p771 = pneg %p462
        %p772 = pneg %p486
        %p773 = pneg %p483
        %p774 = pneg %p507
        %p775 = pneg %p504
        %p776 = pneg %p528
        %p777 = pneg %p525
        %p778 = pneg %p549
        %p779 = pneg %p546
        %p780 = pneg %p570
        %p781 = pneg %p567
        %p782 = pneg %p591
        %p783 = pneg %p588
        %p784 = pneg %p612
        %p785 = pneg %p609
        %p786 = scmp.lt.s32.totalorder %s40, 3
        %s787 = scalar_select %p786, %s40, 3
        %s788 = smul.addr %s787, 2
        %s789 = scalar_lea.vmem %s0, %s788
        %s790 = smul.u32 16, %s40
        %p791 = scmp.lt.s32.totalorder %s790, 63
        %s792 = scalar_select %p791, %s790, 63
        %s793 = smul.addr %s792, 4
        %s794 = scalar_lea.vmem %s1, %s793
        %s795 = smul.u32 16, %s40
        %p797 = scmp.eq.s32.totalorder %s40, 0
        // Predicated region
        $region121: #{attention_refine_forward.1} parent=119 // pred_check
          %p798 = pneg %p797
        $region122: #{attention_refine_forward.1} parent=119 // pred_check_branch
          %800 = sbr.rel (%p798) target = $region124
        $region123: #{attention_refine_forward.1} parent=119 // pred_region
          %801 = vst [vmem:[#allocation2] sm:$0x3] 0.0
        $region124: #{attention_refine_forward.1} parent=119 // pred_fallthru
          _
        %v802 = vld [vmem:[#allocation2] sm:$0x3]
        %v803 = vld [vmem:[%s789] sm:$0x3]
        %v804 = vpack.c.bf16 %v803, %v803
        %v805 = vld [vmem:[%s794] sm:$0xf]
        %v806 = vld [vmem:[%s794 + $0x4] sm:$0xf]
        %v807 = vld [vmem:[%s794 + $0x8] sm:$0xf]
        %v808 = vld [vmem:[%s794 + $0xc] sm:$0xf]
        %v809 = vld [vmem:[%s794 + $0x10] sm:$0xf]
        %v810 = vld [vmem:[%s794 + $0x14] sm:$0xf]
        %v811 = vld [vmem:[%s794 + $0x18] sm:$0xf]
        %v812 = vld [vmem:[%s794 + $0x1c] sm:$0xf]
        %v813 = vld [vmem:[%s794 + $0x20] sm:$0xf]
        %v814 = vld [vmem:[%s794 + $0x24] sm:$0xf]
        %v815 = vld [vmem:[%s794 + $0x28] sm:$0xf]
        %v816 = vld [vmem:[%s794 + $0x2c] sm:$0xf]
        %v817 = vld [vmem:[%s794 + $0x30] sm:$0xf]
        %v818 = vld [vmem:[%s794 + $0x34] sm:$0xf]
        %v819 = vld [vmem:[%s794 + $0x38] sm:$0xf]
        %v820 = vld [vmem:[%s794 + $0x3c] sm:$0xf]
        %v837 = vunpack.c.l.b16 %v805
        %v838 = vunpack.c.l.b16 %v806
        %v839 = vunpack.c.l.b16 %v807
        %v840 = vunpack.c.l.b16 %v808
        %v841 = vunpack.c.l.b16 %v809
        %v842 = vunpack.c.l.b16 %v810
        %v843 = vunpack.c.l.b16 %v811
        %v844 = vunpack.c.l.b16 %v812
        %v845 = vunpack.c.l.b16 %v813
        %v846 = vunpack.c.l.b16 %v814
        %v847 = vunpack.c.l.b16 %v815
        %v848 = vunpack.c.l.b16 %v816
        %v849 = vunpack.c.l.b16 %v817
        %v850 = vunpack.c.l.b16 %v818
        %v851 = vunpack.c.l.b16 %v819
        %v852 = vunpack.c.l.b16 %v820
        %v853 = vpack.c.b16 %v838, %v837
        %v854 = vpack.c.b16 %v840, %v839
        %v855 = vpack.c.b16 %v842, %v841
        %v856 = vpack.c.b16 %v844, %v843
        %v857 = vpack.c.b16 %v846, %v845
        %v858 = vpack.c.b16 %v848, %v847
        %v859 = vpack.c.b16 %v850, %v849
        %v860 = vpack.c.b16 %v852, %v851
        %869 = vmatprep.subr.bf16.mxu0 0
        %870 = vmatpush1.bf16.msra.mxu0 %v853
        %871 = vmatprep.subr.bf16.mxu0 0
        %872 = vmatpush1.bf16.msra.mxu0 %v854
        %873 = vmatprep.subr.bf16.mxu0 0
        %874 = vmatpush1.bf16.msra.mxu0 %v855
        %875 = vmatprep.subr.bf16.mxu0 0
        %876 = vmatpush1.bf16.msra.mxu0 %v856
        %877 = vmatprep.subr.bf16.mxu0 0
        %878 = vmatpush1.bf16.msra.mxu0 %v857
        %879 = vmatprep.subr.bf16.mxu0 0
        %880 = vmatpush1.bf16.msra.mxu0 %v858
        %881 = vmatprep.subr.bf16.mxu0 0
        %882 = vmatpush1.bf16.msra.mxu0 %v859
        %883 = vmatprep.subr.bf16.mxu0 0
        %884 = vmatpush1.bf16.msra.mxu0 %v860
        %885 = vmatprep.subr.bf16.mxu0 0
        %886 = vmatpush1.bf16.msra.mxu0 0
        %887 = vmatprep.subr.bf16.mxu0 0
        %888 = vmatpush1.bf16.msra.mxu0 0
        %889 = vmatprep.subr.bf16.mxu0 0
        %890 = vmatpush1.bf16.msra.mxu0 0
        %891 = vmatprep.subr.bf16.mxu0 0
        %892 = vmatpush1.bf16.msra.mxu0 0
        %893 = vmatprep.subr.bf16.mxu0 0
        %894 = vmatpush1.bf16.msra.mxu0 0
        %895 = vmatprep.subr.bf16.mxu0 0
        %896 = vmatpush1.bf16.msra.mxu0 0
        %897 = vmatprep.subr.bf16.mxu0 0
        %898 = vmatpush1.bf16.msra.mxu0 0
        %899 = vmatprep.subr.bf16.mxu0 0
        %900 = vmatpush1.bf16.msra.mxu0 0
        %901 = vmatprep.mubr.bf16.mxu0 0
        %902 = vmatmul.mubr.bf16.gmra.mrb[0].mxu0 %v804
        %v903 = vpop.f32.mrb[0].mxu0
        %v904 = vadd.f32 0.0, %v903
        %v905 = vpop.f32.mrb[0].mxu0
        %v906 = vpop.f32.mrb[0].mxu0
        %v907 = vpop.f32.mrb[0].mxu0
        %908 = vdwg.mxu0
        %v909 = vadd.f32 %v802, %v904
        %910 = vst [vmem:[#allocation2] sm:$0x3] %v909
        %p911 = scmp.eq.s32.totalorder %s40, 3
        // Predicated region
        $region125: #{attention_refine_forward.1} parent=119 // pred_check
          %p912 = pneg %p911
        $region126: #{attention_refine_forward.1} parent=119 // pred_check_branch
          %914 = sbr.rel (%p912) target = $region128
        $region127: #{attention_refine_forward.1} parent=119 // pred_region
          %v915 = vld [vmem:[#allocation2] sm:$0x3]
          %v916 = vld [vmem:[%s2] sm:$0x1]
          %v918 = vlaneseq
          %v919 = vshrl.u32 %v918, 7
          %v920 = vsub.s32 0, %v919
          %v921 = vrot.slane %v916, %v920
          %v923 = vadd.f32 %v915, %v921
          %vm924 = vcmp.ge.f32.partialorder %v923, 0.0
          %v925 = vmul.f32 %v923, 0.1
          %v926 = vsel %vm924, %v923, %v925
          %v927 = vld [vmem:[%s3] sm:$0x3f]
          %v929 = vcombine.high %v927, %v927
          %v931 = vunpack.c.l.s4 1983009808
          %v932 = vunpack.c.0.s8 %v931
          %v933 = vlaneseq
          %v934 = vshrl.u32 %v933, 7
          %v935 = vsub.s32 %v932, %v934
          %v936 = vrot.slane %v927, %v935
          %v938 = vunpack.c.l.s4 1983009808
          %v939 = vunpack.c.0.s8 %v938
          %v940 = vlaneseq
          %v941 = vshrl.u32 %v940, 7
          %v942 = vsub.s32 %v939, %v941
          %v943 = vrot.slane %v929, %v942
          %v944 = vcombine.high %v936, %v936
          %v948 = vpack.c.bf16 %v936, %v936
          %v949 = vpack.c.bf16 %v944, %v944
          %v950 = vpack.c.bf16 %v943, %v943
          %v951 = vld [vmem:[%s4] sm:$0xf]
          %v952 = vld [vmem:[%s4 + $0x4] sm:$0xf]
          %v953 = vld [vmem:[%s4 + $0x8] sm:$0xf]
          %v954 = vld [vmem:[%s4 + $0xc] sm:$0xf]
          %v955 = vld [vmem:[%s4 + $0x10] sm:$0xf]
          %v956 = vld [vmem:[%s4 + $0x14] sm:$0xf]
          %v957 = vld [vmem:[%s4 + $0x18] sm:$0xf]
          %v958 = vld [vmem:[%s4 + $0x1c] sm:$0xf]
          %v959 = vld [vmem:[%s4 + $0x20] sm:$0xf]
          %v960 = vld [vmem:[%s4 + $0x24] sm:$0xf]
          %v961 = vld [vmem:[%s4 + $0x28] sm:$0xf]
          %v962 = vld [vmem:[%s4 + $0x2c] sm:$0xf]
          %v963 = vld [vmem:[%s4 + $0x30] sm:$0xf]
          %v964 = vld [vmem:[%s4 + $0x34] sm:$0xf]
          %v965 = vld [vmem:[%s4 + $0x38] sm:$0xf]
          %v966 = vld [vmem:[%s4 + $0x3c] sm:$0xf]
          %v967 = vld [vmem:[%s4 + $0x40] sm:$0xf]
          %v968 = vld [vmem:[%s4 + $0x44] sm:$0xf]
          %v969 = vld [vmem:[%s4 + $0x48] sm:$0xf]
          %v970 = vld [vmem:[%s4 + $0x4c] sm:$0xf]
          %v971 = vld [vmem:[%s4 + $0x50] sm:$0xf]
          %v972 = vld [vmem:[%s4 + $0x54] sm:$0xf]
          %v973 = vld [vmem:[%s4 + $0x58] sm:$0xf]
          %v974 = vld [vmem:[%s4 + $0x5c] sm:$0xf]
          %v975 = vld [vmem:[%s4 + $0x60] sm:$0xf]
          %v976 = vld [vmem:[%s4 + $0x64] sm:$0xf]
          %v977 = vld [vmem:[%s4 + $0x68] sm:$0xf]
          %v978 = vld [vmem:[%s4 + $0x6c] sm:$0xf]
          %v979 = vld [vmem:[%s4 + $0x70] sm:$0xf]
          %v980 = vld [vmem:[%s4 + $0x74] sm:$0xf]
          %v981 = vld [vmem:[%s4 + $0x78] sm:$0xf]
          %v982 = vld [vmem:[%s4 + $0x7c] sm:$0xf]
          %v983 = vld [vmem:[%s4 + $0x80] sm:$0xf]
          %v984 = vld [vmem:[%s4 + $0x84] sm:$0xf]
          %v985 = vld [vmem:[%s4 + $0x88] sm:$0xf]
          %v986 = vld [vmem:[%s4 + $0x8c] sm:$0xf]
          %v987 = vld [vmem:[%s4 + $0x90] sm:$0xf]
          %v988 = vld [vmem:[%s4 + $0x94] sm:$0xf]
          %v989 = vld [vmem:[%s4 + $0x98] sm:$0xf]
          %v990 = vld [vmem:[%s4 + $0x9c] sm:$0xf]
          %v991 = vld [vmem:[%s4 + $0xa0] sm:$0xf]
          %v992 = vld [vmem:[%s4 + $0xa4] sm:$0xf]
          %v993 = vld [vmem:[%s4 + $0xa8] sm:$0xf]
          %v994 = vld [vmem:[%s4 + $0xac] sm:$0xf]
          %v995 = vld [vmem:[%s4 + $0xb0] sm:$0xf]
          %v996 = vld [vmem:[%s4 + $0xb4] sm:$0xf]
          %v997 = vld [vmem:[%s4 + $0xb8] sm:$0xf]
          %v998 = vld [vmem:[%s4 + $0xbc] sm:$0xf]
          %v999 = vld [vmem:[%s5] sm:$0x1]
          %v1001 = vlaneseq
          %v1002 = vshrl.u32 %v1001, 7
          %v1003 = vsub.s32 0, %v1002
          %v1004 = vrot.slane %v999, %v1003
          %v1054 = vunpack.c.l.b16 %v951
          %v1055 = vunpack.c.l.b16 %v952
          %v1056 = vunpack.c.l.b16 %v953
          %v1057 = vunpack.c.l.b16 %v954
          %v1058 = vunpack.c.l.b16 %v955
          %v1059 = vunpack.c.l.b16 %v956
          %v1060 = vunpack.c.l.b16 %v957
          %v1061 = vunpack.c.l.b16 %v958
          %v1062 = vunpack.c.l.b16 %v959
          %v1063 = vunpack.c.l.b16 %v960
          %v1064 = vunpack.c.l.b16 %v961
          %v1065 = vunpack.c.l.b16 %v962
          %v1066 = vunpack.c.l.b16 %v963
          %v1067 = vunpack.c.l.b16 %v964
          %v1068 = vunpack.c.l.b16 %v965
          %v1069 = vunpack.c.l.b16 %v966
          %v1070 = vunpack.c.l.b16 %v967
          %v1071 = vunpack.c.l.b16 %v968
          %v1072 = vunpack.c.l.b16 %v969
          %v1073 = vunpack.c.l.b16 %v970
          %v1074 = vunpack.c.l.b16 %v971
          %v1075 = vunpack.c.l.b16 %v972
          %v1076 = vunpack.c.l.b16 %v973
          %v1077 = vunpack.c.l.b16 %v974
          %v1078 = vunpack.c.l.b16 %v975
          %v1079 = vunpack.c.l.b16 %v976
          %v1080 = vunpack.c.l.b16 %v977
          %v1081 = vunpack.c.l.b16 %v978
          %v1082 = vunpack.c.l.b16 %v979
          %v1083 = vunpack.c.l.b16 %v980
          %v1084 = vunpack.c.l.b16 %v981
          %v1085 = vunpack.c.l.b16 %v982
          %v1086 = vunpack.c.l.b16 %v983
          %v1087 = vunpack.c.l.b16 %v984
          %v1088 = vunpack.c.l.b16 %v985
          %v1089 = vunpack.c.l.b16 %v986
          %v1090 = vunpack.c.l.b16 %v987
          %v1091 = vunpack.c.l.b16 %v988
          %v1092 = vunpack.c.l.b16 %v989
          %v1093 = vunpack.c.l.b16 %v990
          %v1094 = vunpack.c.l.b16 %v991
          %v1095 = vunpack.c.l.b16 %v992
          %v1096 = vunpack.c.l.b16 %v993
          %v1097 = vunpack.c.l.b16 %v994
          %v1098 = vunpack.c.l.b16 %v995
          %v1099 = vunpack.c.l.b16 %v996
          %v1100 = vunpack.c.l.b16 %v997
          %v1101 = vunpack.c.l.b16 %v998
          %v1102 = vpack.c.b16 %v1055, %v1054
          %v1103 = vpack.c.b16 %v1057, %v1056
          %v1104 = vpack.c.b16 %v1059, %v1058
          %v1105 = vpack.c.b16 %v1061, %v1060
          %v1106 = vpack.c.b16 %v1063, %v1062
          %v1107 = vpack.c.b16 %v1065, %v1064
          %v1108 = vpack.c.b16 %v1067, %v1066
          %v1109 = vpack.c.b16 %v1069, %v1068
          %v1110 = vpack.c.b16 %v1071, %v1070
          %v1111 = vpack.c.b16 %v1073, %v1072
          %v1112 = vpack.c.b16 %v1075, %v1074
          %v1113 = vpack.c.b16 %v1077, %v1076
          %v1114 = vpack.c.b16 %v1079, %v1078
          %v1115 = vpack.c.b16 %v1081, %v1080
          %v1116 = vpack.c.b16 %v1083, %v1082
          %v1117 = vpack.c.b16 %v1085, %v1084
          %v1118 = vpack.c.b16 %v1087, %v1086
          %v1119 = vpack.c.b16 %v1089, %v1088
          %v1120 = vpack.c.b16 %v1091, %v1090
          %v1121 = vpack.c.b16 %v1093, %v1092
          %v1122 = vpack.c.b16 %v1095, %v1094
          %v1123 = vpack.c.b16 %v1097, %v1096
          %v1124 = vpack.c.b16 %v1099, %v1098
          %v1125 = vpack.c.b16 %v1101, %v1100
          %1150 = vmatprep.subr.bf16.mxu0 0
          %1151 = vmatpush1.bf16.msra.mxu0 %v1102
          %1152 = vmatprep.subr.bf16.mxu0 0
          %1153 = vmatpush1.bf16.msra.mxu0 %v1103
          %1154 = vmatprep.subr.bf16.mxu0 0
          %1155 = vmatpush1.bf16.msra.mxu0 %v1104
          %1156 = vmatprep.subr.bf16.mxu0 0
          %1157 = vmatpush1.bf16.msra.mxu0 %v1105
          %1158 = vmatprep.subr.bf16.mxu0 0
          %1159 = vmatpush1.bf16.msra.mxu0 %v1106
          %1160 = vmatprep.subr.bf16.mxu0 0
          %1161 = vmatpush1.bf16.msra.mxu0 %v1107
          %1162 = vmatprep.subr.bf16.mxu0 0
          %1163 = vmatpush1.bf16.msra.mxu0 %v1108
          %1164 = vmatprep.subr.bf16.mxu0 0
          %1165 = vmatpush1.bf16.msra.mxu0 %v1109
          %1166 = vmatprep.subr.bf16.mxu0 0
          %1167 = vmatpush1.bf16.msra.mxu0 %v1110
          %1168 = vmatprep.subr.bf16.mxu0 0
          %1169 = vmatpush1.bf16.msra.mxu0 %v1111
          %1170 = vmatprep.subr.bf16.mxu0 0
          %1171 = vmatpush1.bf16.msra.mxu0 %v1112
          %1172 = vmatprep.subr.bf16.mxu0 0
          %1173 = vmatpush1.bf16.msra.mxu0 %v1113
          %1174 = vmatprep.subr.bf16.mxu0 0
          %1175 = vmatpush1.bf16.msra.mxu0 %v1114
          %1176 = vmatprep.subr.bf16.mxu0 0
          %1177 = vmatpush1.bf16.msra.mxu0 %v1115
          %1178 = vmatprep.subr.bf16.mxu0 0
          %1179 = vmatpush1.bf16.msra.mxu0 %v1116
          %1180 = vmatprep.subr.bf16.mxu0 0
          %1181 = vmatpush1.bf16.msra.mxu0 %v1117
          %1182 = vmatprep.mubr.bf16.mxu0 %v949
          %1183 = vmatmul.mubr.bf16.gmra.mrb[0].mxu0 %v948
          %v1184 = vpop.f32.mrb[0].mxu0
          %v1185 = vadd.f32 %v1004, %v1184
          %v1186 = vpop.f32.mrb[0].mxu0
          %v1187 = vpop.f32.mrb[0].mxu0
          %v1188 = vpop.f32.mrb[0].mxu0
          %1189 = vdwg.mxu0
          %1190 = vmatprep.subr.bf16.mxu0 0
          %1191 = vmatpush1.bf16.msra.mxu0 %v1118
          %1192 = vmatprep.subr.bf16.mxu0 0
          %1193 = vmatpush1.bf16.msra.mxu0 %v1119
          %1194 = vmatprep.subr.bf16.mxu0 0
          %1195 = vmatpush1.bf16.msra.mxu0 %v1120
          %1196 = vmatprep.subr.bf16.mxu0 0
          %1197 = vmatpush1.bf16.msra.mxu0 %v1121
          %1198 = vmatprep.subr.bf16.mxu0 0
          %1199 = vmatpush1.bf16.msra.mxu0 %v1122
          %1200 = vmatprep.subr.bf16.mxu0 0
          %1201 = vmatpush1.bf16.msra.mxu0 %v1123
          %1202 = vmatprep.subr.bf16.mxu0 0
          %1203 = vmatpush1.bf16.msra.mxu0 %v1124
          %1204 = vmatprep.subr.bf16.mxu0 0
          %1205 = vmatpush1.bf16.msra.mxu0 %v1125
          %1206 = vmatprep.subr.bf16.mxu0 0
          %1207 = vmatpush1.bf16.msra.mxu0 0
          %1208 = vmatprep.subr.bf16.mxu0 0
          %1209 = vmatpush1.bf16.msra.mxu0 0
          %1210 = vmatprep.subr.bf16.mxu0 0
          %1211 = vmatpush1.bf16.msra.mxu0 0
          %1212 = vmatprep.subr.bf16.mxu0 0
          %1213 = vmatpush1.bf16.msra.mxu0 0
          %1214 = vmatprep.subr.bf16.mxu0 0
          %1215 = vmatpush1.bf16.msra.mxu0 0
          %1216 = vmatprep.subr.bf16.mxu0 0
          %1217 = vmatpush1.bf16.msra.mxu0 0
          %1218 = vmatprep.subr.bf16.mxu0 0
          %1219 = vmatpush1.bf16.msra.mxu0 0
          %1220 = vmatprep.subr.bf16.mxu0 0
          %1221 = vmatpush1.bf16.msra.mxu0 0
          %1222 = vmatprep.mubr.bf16.mxu0 0
          %1223 = vmatmul.mubr.bf16.gmra.mrb[0].mxu0 %v950
          %v1224 = vpop.f32.mrb[0].mxu0
          %v1225 = vadd.f32 %v1185, %v1224
          %v1226 = vpop.f32.mrb[0].mxu0
          %v1227 = vpop.f32.mrb[0].mxu0
          %v1228 = vpop.f32.mrb[0].mxu0
          %1229 = vdwg.mxu0
          %vm1230 = vcmp.ge.f32.partialorder %v1225, 0.0
          %v1231 = vmul.f32 %v1225, 0.1
          %v1232 = vsel %vm1230, %v1225, %v1231
          %v1233 = vld [vmem:[%s6] sm:$0x3]
          %v1234 = vpack.c.bf16 %v1233, %v1233
          %v1235 = vld [vmem:[%s7] sm:$0xf]
          %v1236 = vld [vmem:[%s7 + $0x4] sm:$0xf]
          %v1237 = vld [vmem:[%s7 + $0x8] sm:$0xf]
          %v1238 = vld [vmem:[%s7 + $0xc] sm:$0xf]
          %v1239 = vld [vmem:[%s7 + $0x10] sm:$0xf]
          %v1240 = vld [vmem:[%s7 + $0x14] sm:$0xf]
          %v1241 = vld [vmem:[%s7 + $0x18] sm:$0xf]
          %v1242 = vld [vmem:[%s7 + $0x1c] sm:$0xf]
          %v1243 = vld [vmem:[%s7 + $0x20] sm:$0xf]
          %v1244 = vld [vmem:[%s7 + $0x24] sm:$0xf]
          %v1245 = vld [vmem:[%s7 + $0x28] sm:$0xf]
          %v1246 = vld [vmem:[%s7 + $0x2c] sm:$0xf]
          %v1247 = vld [vmem:[%s7 + $0x30] sm:$0xf]
          %v1248 = vld [vmem:[%s7 + $0x34] sm:$0xf]
          %v1249 = vld [vmem:[%s7 + $0x38] sm:$0xf]
          %v1250 = vld [vmem:[%s7 + $0x3c] sm:$0xf]
          %v1251 = vld [vmem:[%s8] sm:$0x1]
          %v1253 = vlaneseq
          %v1254 = vshrl.u32 %v1253, 7
          %v1255 = vsub.s32 0, %v1254
          %v1256 = vrot.slane %v1251, %v1255
          %v1274 = vunpack.c.l.b16 %v1235
          %v1275 = vunpack.c.l.b16 %v1236
          %v1276 = vunpack.c.l.b16 %v1237
          %v1277 = vunpack.c.l.b16 %v1238
          %v1278 = vunpack.c.l.b16 %v1239
          %v1279 = vunpack.c.l.b16 %v1240
          %v1280 = vunpack.c.l.b16 %v1241
          %v1281 = vunpack.c.l.b16 %v1242
          %v1282 = vunpack.c.l.b16 %v1243
          %v1283 = vunpack.c.l.b16 %v1244
          %v1284 = vunpack.c.l.b16 %v1245
          %v1285 = vunpack.c.l.b16 %v1246
          %v1286 = vunpack.c.l.b16 %v1247
          %v1287 = vunpack.c.l.b16 %v1248
          %v1288 = vunpack.c.l.b16 %v1249
          %v1289 = vunpack.c.l.b16 %v1250
          %v1290 = vpack.c.b16 %v1275, %v1274
          %v1291 = vpack.c.b16 %v1277, %v1276
          %v1292 = vpack.c.b16 %v1279, %v1278
          %v1293 = vpack.c.b16 %v1281, %v1280
          %v1294 = vpack.c.b16 %v1283, %v1282
          %v1295 = vpack.c.b16 %v1285, %v1284
          %v1296 = vpack.c.b16 %v1287, %v1286
          %v1297 = vpack.c.b16 %v1289, %v1288
          %1306 = vmatprep.subr.bf16.mxu0 0
          %1307 = vmatpush1.bf16.msra.mxu0 %v1290
          %1308 = vmatprep.subr.bf16.mxu0 0
          %1309 = vmatpush1.bf16.msra.mxu0 %v1291
          %1310 = vmatprep.subr.bf16.mxu0 0
          %1311 = vmatpush1.bf16.msra.mxu0 %v1292
          %1312 = vmatprep.subr.bf16.mxu0 0
          %1313 = vmatpush1.bf16.msra.mxu0 %v1293
          %1314 = vmatprep.subr.bf16.mxu0 0
          %1315 = vmatpush1.bf16.msra.mxu0 %v1294
          %1316 = vmatprep.subr.bf16.mxu0 0
          %1317 = vmatpush1.bf16.msra.mxu0 %v1295
          %1318 = vmatprep.subr.bf16.mxu0 0
          %1319 = vmatpush1.bf16.msra.mxu0 %v1296
          %1320 = vmatprep.subr.bf16.mxu0 0
          %1321 = vmatpush1.bf16.msra.mxu0 %v1297
          %1322 = vmatprep.subr.bf16.mxu0 0
          %1323 = vmatpush1.bf16.msra.mxu0 0
          %1324 = vmatprep.subr.bf16.mxu0 0
          %1325 = vmatpush1.bf16.msra.mxu0 0
          %1326 = vmatprep.subr.bf16.mxu0 0
          %1327 = vmatpush1.bf16.msra.mxu0 0
          %1328 = vmatprep.subr.bf16.mxu0 0
          %1329 = vmatpush1.bf16.msra.mxu0 0
          %1330 = vmatprep.subr.bf16.mxu0 0
          %1331 = vmatpush1.bf16.msra.mxu0 0
          %1332 = vmatprep.subr.bf16.mxu0 0
          %1333 = vmatpush1.bf16.msra.mxu0 0
          %1334 = vmatprep.subr.bf16.mxu0 0
          %1335 = vmatpush1.bf16.msra.mxu0 0
          %1336 = vmatprep.subr.bf16.mxu0 0
          %1337 = vmatpush1.bf16.msra.mxu0 0
          %1338 = vmatprep.mubr.bf16.mxu0 0
          %1339 = vmatmul.mubr.bf16.gmra.mrb[0].mxu0 %v1234
          %v1340 = vpop.f32.mrb[0].mxu0
          %v1341 = vadd.f32 %v1256, %v1340
          %v1342 = vpop.f32.mrb[0].mxu0
          %v1343 = vpop.f32.mrb[0].mxu0
          %v1344 = vpop.f32.mrb[0].mxu0
          %1345 = vdwg.mxu0
          %vm1346 = vcmp.ge.f32.partialorder %v1341, 0.0
          %v1347 = vmul.f32 %v1341, 0.1
          %v1348 = vsel %vm1346, %v1341, %v1347
          %v1349 = vld [vmem:[%s9] sm:$0xf]
          %v1352 = vunpack.c.l.s4 1983009808
          %v1353 = vunpack.c.0.s8 %v1352
          %v1354 = vlaneseq
          %v1355 = vshrl.u32 %v1354, 7
          %v1356 = vsub.s32 %v1353, %v1355
          %v1357 = vrot.slane %v1349, %v1356
          %v1358 = vcombine.high %v1357, %v1357
          %v1361 = vpack.c.bf16 %v1357, %v1357
          %v1362 = vpack.c.bf16 %v1358, %v1358
          %v1363 = vld [vmem:[%s10] sm:$0xf]
          %v1364 = vld [vmem:[%s10 + $0x4] sm:$0xf]
          %v1365 = vld [vmem:[%s10 + $0x8] sm:$0xf]
          %v1366 = vld [vmem:[%s10 + $0xc] sm:$0xf]
          %v1367 = vld [vmem:[%s10 + $0x10] sm:$0xf]
          %v1368 = vld [vmem:[%s10 + $0x14] sm:$0xf]
          %v1369 = vld [vmem:[%s10 + $0x18] sm:$0xf]
          %v1370 = vld [vmem:[%s10 + $0x1c] sm:$0xf]
          %v1371 = vld [vmem:[%s10 + $0x20] sm:$0xf]
          %v1372 = vld [vmem:[%s10 + $0x24] sm:$0xf]
          %v1373 = vld [vmem:[%s10 + $0x28] sm:$0xf]
          %v1374 = vld [vmem:[%s10 + $0x2c] sm:$0xf]
          %v1375 = vld [vmem:[%s10 + $0x30] sm:$0xf]
          %v1376 = vld [vmem:[%s10 + $0x34] sm:$0xf]
          %v1377 = vld [vmem:[%s10 + $0x38] sm:$0xf]
          %v1378 = vld [vmem:[%s10 + $0x3c] sm:$0xf]
          %v1379 = vld [vmem:[%s10 + $0x40] sm:$0xf]
          %v1380 = vld [vmem:[%s10 + $0x44] sm:$0xf]
          %v1381 = vld [vmem:[%s10 + $0x48] sm:$0xf]
          %v1382 = vld [vmem:[%s10 + $0x4c] sm:$0xf]
          %v1383 = vld [vmem:[%s10 + $0x50] sm:$0xf]
          %v1384 = vld [vmem:[%s10 + $0x54] sm:$0xf]
          %v1385 = vld [vmem:[%s10 + $0x58] sm:$0xf]
          %v1386 = vld [vmem:[%s10 + $0x5c] sm:$0xf]
          %v1387 = vld [vmem:[%s10 + $0x60] sm:$0xf]
          %v1388 = vld [vmem:[%s10 + $0x64] sm:$0xf]
          %v1389 = vld [vmem:[%s10 + $0x68] sm:$0xf]
          %v1390 = vld [vmem:[%s10 + $0x6c] sm:$0xf]
          %v1391 = vld [vmem:[%s10 + $0x70] sm:$0xf]
          %v1392 = vld [vmem:[%s10 + $0x74] sm:$0xf]
          %v1393 = vld [vmem:[%s10 + $0x78] sm:$0xf]
          %v1394 = vld [vmem:[%s10 + $0x7c] sm:$0xf]
          %v1395 = vld [vmem:[%s11] sm:$0x1]
          %v1397 = vlaneseq
          %v1398 = vshrl.u32 %v1397, 7
          %v1399 = vsub.s32 0, %v1398
          %v1400 = vrot.slane %v1395, %v1399
          %v1434 = vunpack.c.l.b16 %v1363
          %v1435 = vunpack.c.l.b16 %v1364
          %v1436 = vunpack.c.l.b16 %v1365
          %v1437 = vunpack.c.l.b16 %v1366
          %v1438 = vunpack.c.l.b16 %v1367
          %v1439 = vunpack.c.l.b16 %v1368
          %v1440 = vunpack.c.l.b16 %v1369
          %v1441 = vunpack.c.l.b16 %v1370
          %v1442 = vunpack.c.l.b16 %v1371
          %v1443 = vunpack.c.l.b16 %v1372
          %v1444 = vunpack.c.l.b16 %v1373
          %v1445 = vunpack.c.l.b16 %v1374
          %v1446 = vunpack.c.l.b16 %v1375
          %v1447 = vunpack.c.l.b16 %v1376
          %v1448 = vunpack.c.l.b16 %v1377
          %v1449 = vunpack.c.l.b16 %v1378
          %v1450 = vunpack.c.l.b16 %v1379
          %v1451 = vunpack.c.l.b16 %v1380
          %v1452 = vunpack.c.l.b16 %v1381
          %v1453 = vunpack.c.l.b16 %v1382
          %v1454 = vunpack.c.l.b16 %v1383
          %v1455 = vunpack.c.l.b16 %v1384
          %v1456 = vunpack.c.l.b16 %v1385
          %v1457 = vunpack.c.l.b16 %v1386
          %v1458 = vunpack.c.l.b16 %v1387
          %v1459 = vunpack.c.l.b16 %v1388
          %v1460 = vunpack.c.l.b16 %v1389
          %v1461 = vunpack.c.l.b16 %v1390
          %v1462 = vunpack.c.l.b16 %v1391
          %v1463 = vunpack.c.l.b16 %v1392
          %v1464 = vunpack.c.l.b16 %v1393
          %v1465 = vunpack.c.l.b16 %v1394
          %v1466 = vpack.c.b16 %v1435, %v1434
          %v1467 = vpack.c.b16 %v1437, %v1436
          %v1468 = vpack.c.b16 %v1439, %v1438
          %v1469 = vpack.c.b16 %v1441, %v1440
          %v1470 = vpack.c.b16 %v1443, %v1442
          %v1471 = vpack.c.b16 %v1445, %v1444
          %v1472 = vpack.c.b16 %v1447, %v1446
          %v1473 = vpack.c.b16 %v1449, %v1448
          %v1474 = vpack.c.b16 %v1451, %v1450
          %v1475 = vpack.c.b16 %v1453, %v1452
          %v1476 = vpack.c.b16 %v1455, %v1454
          %v1477 = vpack.c.b16 %v1457, %v1456
          %v1478 = vpack.c.b16 %v1459, %v1458
          %v1479 = vpack.c.b16 %v1461, %v1460
          %v1480 = vpack.c.b16 %v1463, %v1462
          %v1481 = vpack.c.b16 %v1465, %v1464
          %1498 = vmatprep.subr.bf16.mxu0 0
          %1499 = vmatpush1.bf16.msra.mxu0 %v1466
          %1500 = vmatprep.subr.bf16.mxu0 0
          %1501 = vmatpush1.bf16.msra.mxu0 %v1467
          %1502 = vmatprep.subr.bf16.mxu0 0
          %1503 = vmatpush1.bf16.msra.mxu0 %v1468
          %1504 = vmatprep.subr.bf16.mxu0 0
          %1505 = vmatpush1.bf16.msra.mxu0 %v1469
          %1506 = vmatprep.subr.bf16.mxu0 0
          %1507 = vmatpush1.bf16.msra.mxu0 %v1470
          %1508 = vmatprep.subr.bf16.mxu0 0
          %1509 = vmatpush1.bf16.msra.mxu0 %v1471
          %1510 = vmatprep.subr.bf16.mxu0 0
          %1511 = vmatpush1.bf16.msra.mxu0 %v1472
          %1512 = vmatprep.subr.bf16.mxu0 0
          %1513 = vmatpush1.bf16.msra.mxu0 %v1473
          %1514 = vmatprep.subr.bf16.mxu0 0
          %1515 = vmatpush1.bf16.msra.mxu0 %v1474
          %1516 = vmatprep.subr.bf16.mxu0 0
          %1517 = vmatpush1.bf16.msra.mxu0 %v1475
          %1518 = vmatprep.subr.bf16.mxu0 0
          %1519 = vmatpush1.bf16.msra.mxu0 %v1476
          %1520 = vmatprep.subr.bf16.mxu0 0
          %1521 = vmatpush1.bf16.msra.mxu0 %v1477
          %1522 = vmatprep.subr.bf16.mxu0 0
          %1523 = vmatpush1.bf16.msra.mxu0 %v1478
          %1524 = vmatprep.subr.bf16.mxu0 0
          %1525 = vmatpush1.bf16.msra.mxu0 %v1479
          %1526 = vmatprep.subr.bf16.mxu0 0
          %1527 = vmatpush1.bf16.msra.mxu0 %v1480
          %1528 = vmatprep.subr.bf16.mxu0 0
          %1529 = vmatpush1.bf16.msra.mxu0 %v1481
          %1530 = vmatprep.mubr.bf16.mxu0 %v1362
          %1531 = vmatmul.mubr.bf16.gmra.mrb[0].mxu0 %v1361
          %v1532 = vpop.f32.mrb[0].mxu0
          %v1533 = vadd.f32 %v1400, %v1532
          %v1534 = vpop.f32.mrb[0].mxu0
          %v1535 = vpop.f32.mrb[0].mxu0
          %v1536 = vpop.f32.mrb[0].mxu0
          %1537 = vdwg.mxu0
          %vm1538 = vcmp.ge.f32.partialorder %v1533, 0.0
          %v1539 = vmul.f32 %v1533, 0.1
          %v1540 = vsel %vm1538, %v1533, %v1539
          %v1541 = vpack.c.bf16 %v926, %v926
          %v1542 = vld [vmem:[%s12] sm:$0xff]
          %v1543 = vld [vmem:[%s12 + $0x8] sm:$0xff]
          %v1544 = vld [vmem:[%s12 + $0x10] sm:$0xff]
          %v1545 = vld [vmem:[%s12 + $0x18] sm:$0xff]
          %v1546 = vld [vmem:[%s12 + $0x20] sm:$0xff]
          %v1547 = vld [vmem:[%s12 + $0x28] sm:$0xff]
          %v1548 = vld [vmem:[%s12 + $0x30] sm:$0xff]
          %v1549 = vld [vmem:[%s12 + $0x38] sm:$0xff]
          %v1550 = vld [vmem:[%s12 + $0x40] sm:$0xff]
          %v1551 = vld [vmem:[%s12 + $0x48] sm:$0xff]
          %v1552 = vld [vmem:[%s12 + $0x50] sm:$0xff]
          %v1553 = vld [vmem:[%s12 + $0x58] sm:$0xff]
          %v1554 = vld [vmem:[%s12 + $0x60] sm:$0xff]
          %v1555 = vld [vmem:[%s12 + $0x68] sm:$0xff]
          %v1556 = vld [vmem:[%s12 + $0x70] sm:$0xff]
          %v1557 = vld [vmem:[%s12 + $0x78] sm:$0xff]
          %v1558 = vpack.c.bf16 %v1232, %v1232
          %v1559 = vld [vmem:[%s13] sm:$0xff]
          %v1560 = vld [vmem:[%s13 + $0x8] sm:$0xff]
          %v1561 = vld [vmem:[%s13 + $0x10] sm:$0xff]
          %v1562 = vld [vmem:[%s13 + $0x18] sm:$0xff]
          %v1563 = vld [vmem:[%s13 + $0x20] sm:$0xff]
          %v1564 = vld [vmem:[%s13 + $0x28] sm:$0xff]
          %v1565 = vld [vmem:[%s13 + $0x30] sm:$0xff]
          %v1566 = vld [vmem:[%s13 + $0x38] sm:$0xff]
          %v1567 = vld [vmem:[%s13 + $0x40] sm:$0xff]
          %v1568 = vld [vmem:[%s13 + $0x48] sm:$0xff]
          %v1569 = vld [vmem:[%s13 + $0x50] sm:$0xff]
          %v1570 = vld [vmem:[%s13 + $0x58] sm:$0xff]
          %v1571 = vld [vmem:[%s13 + $0x60] sm:$0xff]
          %v1572 = vld [vmem:[%s13 + $0x68] sm:$0xff]
          %v1573 = vld [vmem:[%s13 + $0x70] sm:$0xff]
          %v1574 = vld [vmem:[%s13 + $0x78] sm:$0xff]
          %v1591 = vunpack.c.l.b16 %v1559
          %v1592 = vunpack.c.h.b16 %v1559
          %v1593 = vunpack.c.l.b16 %v1560
          %v1594 = vunpack.c.h.b16 %v1560
          %v1595 = vunpack.c.l.b16 %v1561
          %v1596 = vunpack.c.h.b16 %v1561
          %v1597 = vunpack.c.l.b16 %v1562
          %v1598 = vunpack.c.h.b16 %v1562
          %v1599 = vunpack.c.l.b16 %v1563
          %v1600 = vunpack.c.h.b16 %v1563
          %v1601 = vunpack.c.l.b16 %v1564
          %v1602 = vunpack.c.h.b16 %v1564
          %v1603 = vunpack.c.l.b16 %v1565
          %v1604 = vunpack.c.h.b16 %v1565
          %v1605 = vunpack.c.l.b16 %v1566
          %v1606 = vunpack.c.h.b16 %v1566
          %v1607 = vunpack.c.l.b16 %v1567
          %v1608 = vunpack.c.h.b16 %v1567
          %v1609 = vunpack.c.l.b16 %v1568
          %v1610 = vunpack.c.h.b16 %v1568
          %v1611 = vunpack.c.l.b16 %v1569
          %v1612 = vunpack.c.h.b16 %v1569
          %v1613 = vunpack.c.l.b16 %v1570
          %v1614 = vunpack.c.h.b16 %v1570
          %v1615 = vunpack.c.l.b16 %v1571
          %v1616 = vunpack.c.h.b16 %v1571
          %v1617 = vunpack.c.l.b16 %v1572
          %v1618 = vunpack.c.h.b16 %v1572
          %v1619 = vunpack.c.l.b16 %v1573
          %v1620 = vunpack.c.h.b16 %v1573
          %v1621 = vunpack.c.l.b16 %v1574
          %v1622 = vunpack.c.h.b16 %v1574
          %v1623 = vpack.c.b16 %v1593, %v1591
          %v1624 = vpack.c.b16 %v1594, %v1592
          %v1625 = vpack.c.b16 %v1597, %v1595
          %v1626 = vpack.c.b16 %v1598, %v1596
          %v1627 = vpack.c.b16 %v1601, %v1599
          %v1628 = vpack.c.b16 %v1602, %v1600
          %v1629 = vpack.c.b16 %v1605, %v1603
          %v1630 = vpack.c.b16 %v1606, %v1604
          %v1631 = vpack.c.b16 %v1609, %v1607
          %v1632 = vpack.c.b16 %v1610, %v1608
          %v1633 = vpack.c.b16 %v1613, %v1611
          %v1634 = vpack.c.b16 %v1614, %v1612
          %v1635 = vpack.c.b16 %v1617, %v1615
          %v1636 = vpack.c.b16 %v1618, %v1616
          %v1637 = vpack.c.b16 %v1621, %v1619
          %v1638 = vpack.c.b16 %v1622, %v1620
          %1655 = vmatprep.subr.bf16.mxu0 %v1624
          %1656 = vmatpush1.bf16.msra.mxu0 %v1623
          %1657 = vmatprep.subr.bf16.mxu0 %v1626
          %1658 = vmatpush1.bf16.msra.mxu0 %v1625
          %1659 = vmatprep.subr.bf16.mxu0 %v1628
          %1660 = vmatpush1.bf16.msra.mxu0 %v1627
          %1661 = vmatprep.subr.bf16.mxu0 %v1630
          %1662 = vmatpush1.bf16.msra.mxu0 %v1629
          %1663 = vmatprep.subr.bf16.mxu0 %v1632
          %1664 = vmatpush1.bf16.msra.mxu0 %v1631
          %1665 = vmatprep.subr.bf16.mxu0 %v1634
          %1666 = vmatpush1.bf16.msra.mxu0 %v1633
          %1667 = vmatprep.subr.bf16.mxu0 %v1636
          %1668 = vmatpush1.bf16.msra.mxu0 %v1635
          %1669 = vmatprep.subr.bf16.mxu0 %v1638
          %1670 = vmatpush1.bf16.msra.mxu0 %v1637
          %1671 = vmatprep.subr.bf16.mxu0 0
          %1672 = vmatpush1.bf16.msra.mxu0 0
          %1673 = vmatprep.subr.bf16.mxu0 0
          %1674 = vmatpush1.bf16.msra.mxu0 0
          %1675 = vmatprep.subr.bf16.mxu0 0
          %1676 = vmatpush1.bf16.msra.mxu0 0
          %1677 = vmatprep.subr.bf16.mxu0 0
          %1678 = vmatpush1.bf16.msra.mxu0 0
          %1679 = vmatprep.subr.bf16.mxu0 0
          %1680 = vmatpush1.bf16.msra.mxu0 0
          %1681 = vmatprep.subr.bf16.mxu0 0
          %1682 = vmatpush1.bf16.msra.mxu0 0
          %1683 = vmatprep.subr.bf16.mxu0 0
          %1684 = vmatpush1.bf16.msra.mxu0 0
          %1685 = vmatprep.subr.bf16.mxu0 0
          %1686 = vmatpush1.bf16.msra.mxu0 0
          %1687 = vmatprep.mubr.bf16.mxu0 0
          %1688 = vmatmul.mubr.bf16.gmra.mrb[0].mxu0 %v1558
          %v1689 = vpop.f32.mrb[0].mxu0
          %v1690 = vadd.f32 0.0, %v1689
          %v1691 = vpop.f32.mrb[0].mxu0
          %v1692 = vadd.f32 0.0, %v1691
          %v1693 = vpop.f32.mrb[0].mxu0
          %v1694 = vpop.f32.mrb[0].mxu0
          %1695 = vdwg.mxu0
          %v1712 = vunpack.c.l.b16 %v1542
          %v1713 = vunpack.c.h.b16 %v1542
          %v1714 = vunpack.c.l.b16 %v1543
          %v1715 = vunpack.c.h.b16 %v1543
          %v1716 = vunpack.c.l.b16 %v1544
          %v1717 = vunpack.c.h.b16 %v1544
          %v1718 = vunpack.c.l.b16 %v1545
          %v1719 = vunpack.c.h.b16 %v1545
          %v1720 = vunpack.c.l.b16 %v1546
          %v1721 = vunpack.c.h.b16 %v1546
          %v1722 = vunpack.c.l.b16 %v1547
          %v1723 = vunpack.c.h.b16 %v1547
          %v1724 = vunpack.c.l.b16 %v1548
          %v1725 = vunpack.c.h.b16 %v1548
          %v1726 = vunpack.c.l.b16 %v1549
          %v1727 = vunpack.c.h.b16 %v1549
          %v1728 = vunpack.c.l.b16 %v1550
          %v1729 = vunpack.c.h.b16 %v1550
          %v1730 = vunpack.c.l.b16 %v1551
          %v1731 = vunpack.c.h.b16 %v1551
          %v1732 = vunpack.c.l.b16 %v1552
          %v1733 = vunpack.c.h.b16 %v1552
          %v1734 = vunpack.c.l.b16 %v1553
          %v1735 = vunpack.c.h.b16 %v1553
          %v1736 = vunpack.c.l.b16 %v1554
          %v1737 = vunpack.c.h.b16 %v1554
          %v1738 = vunpack.c.l.b16 %v1555
          %v1739 = vunpack.c.h.b16 %v1555
          %v1740 = vunpack.c.l.b16 %v1556
          %v1741 = vunpack.c.h.b16 %v1556
          %v1742 = vunpack.c.l.b16 %v1557
          %v1743 = vunpack.c.h.b16 %v1557
          %v1744 = vpack.c.b16 %v1714, %v1712
          %v1745 = vpack.c.b16 %v1715, %v1713
          %v1746 = vpack.c.b16 %v1718, %v1716
          %v1747 = vpack.c.b16 %v1719, %v1717
          %v1748 = vpack.c.b16 %v1722, %v1720
          %v1749 = vpack.c.b16 %v1723, %v1721
          %v1750 = vpack.c.b16 %v1726, %v1724
          %v1751 = vpack.c.b16 %v1727, %v1725
          %v1752 = vpack.c.b16 %v1730, %v1728
          %v1753 = vpack.c.b16 %v1731, %v1729
          %v1754 = vpack.c.b16 %v1734, %v1732
          %v1755 = vpack.c.b16 %v1735, %v1733
          %v1756 = vpack.c.b16 %v1738, %v1736
          %v1757 = vpack.c.b16 %v1739, %v1737
          %v1758 = vpack.c.b16 %v1742, %v1740
          %v1759 = vpack.c.b16 %v1743, %v1741
          %1776 = vmatprep.subr.bf16.mxu0 %v1745
          %1777 = vmatpush1.bf16.msra.mxu0 %v1744
          %1778 = vmatprep.subr.bf16.mxu0 %v1747
          %1779 = vmatpush1.bf16.msra.mxu0 %v1746
          %1780 = vmatprep.subr.bf16.mxu0 %v1749
          %1781 = vmatpush1.bf16.msra.mxu0 %v1748
          %1782 = vmatprep.subr.bf16.mxu0 %v1751
          %1783 = vmatpush1.bf16.msra.mxu0 %v1750
          %1784 = vmatprep.subr.bf16.mxu0 %v1753
          %1785 = vmatpush1.bf16.msra.mxu0 %v1752
          %1786 = vmatprep.subr.bf16.mxu0 %v1755
          %1787 = vmatpush1.bf16.msra.mxu0 %v1754
          %1788 = vmatprep.subr.bf16.mxu0 %v1757
          %1789 = vmatpush1.bf16.msra.mxu0 %v1756
          %1790 = vmatprep.subr.bf16.mxu0 %v1759
          %1791 = vmatpush1.bf16.msra.mxu0 %v1758
          %1792 = vmatprep.subr.bf16.mxu0 0
          %1793 = vmatpush1.bf16.msra.mxu0 0
          %1794 = vmatprep.subr.bf16.mxu0 0
          %1795 = vmatpush1.bf16.msra.mxu0 0
          %1796 = vmatprep.subr.bf16.mxu0 0
          %1797 = vmatpush1.bf16.msra.mxu0 0
          %1798 = vmatprep.subr.bf16.mxu0 0
          %1799 = vmatpush1.bf16.msra.mxu0 0
          %1800 = vmatprep.subr.bf16.mxu0 0
          %1801 = vmatpush1.bf16.msra.mxu0 0
          %1802 = vmatprep.subr.bf16.mxu0 0
          %1803 = vmatpush1.bf16.msra.mxu0 0
          %1804 = vmatprep.subr.bf16.mxu0 0
          %1805 = vmatpush1.bf16.msra.mxu0 0
          %1806 = vmatprep.subr.bf16.mxu0 0
          %1807 = vmatpush1.bf16.msra.mxu0 0
          %1808 = vmatprep.mubr.bf16.mxu0 0
          %1809 = vmatmul.mubr.bf16.gmra.mrb[0].mxu0 %v1541
          %v1810 = vpop.f32.mrb[0].mxu0
          %v1811 = vadd.f32 %v1690, %v1810
          %v1812 = vpop.f32.mrb[0].mxu0
          %v1813 = vadd.f32 %v1692, %v1812
          %v1814 = vpop.f32.mrb[0].mxu0
          %v1815 = vpop.f32.mrb[0].mxu0
          %1816 = vdwg.mxu0
          %v1817 = vpack.c.bf16 %v1348, %v1348
          %v1818 = vld [vmem:[%s14] sm:$0xff]
          %v1819 = vld [vmem:[%s14 + $0x8] sm:$0xff]
          %v1820 = vld [vmem:[%s14 + $0x10] sm:$0xff]
          %v1821 = vld [vmem:[%s14 + $0x18] sm:$0xff]
          %v1822 = vld [vmem:[%s14 + $0x20] sm:$0xff]
          %v1823 = vld [vmem:[%s14 + $0x28] sm:$0xff]
          %v1824 = vld [vmem:[%s14 + $0x30] sm:$0xff]
          %v1825 = vld [vmem:[%s14 + $0x38] sm:$0xff]
          %v1826 = vld [vmem:[%s14 + $0x40] sm:$0xff]
          %v1827 = vld [vmem:[%s14 + $0x48] sm:$0xff]
          %v1828 = vld [vmem:[%s14 + $0x50] sm:$0xff]
          %v1829 = vld [vmem:[%s14 + $0x58] sm:$0xff]
          %v1830 = vld [vmem:[%s14 + $0x60] sm:$0xff]
          %v1831 = vld [vmem:[%s14 + $0x68] sm:$0xff]
          %v1832 = vld [vmem:[%s14 + $0x70] sm:$0xff]
          %v1833 = vld [vmem:[%s14 + $0x78] sm:$0xff]
          %v1850 = vunpack.c.l.b16 %v1818
          %v1851 = vunpack.c.h.b16 %v1818
          %v1852 = vunpack.c.l.b16 %v1819
          %v1853 = vunpack.c.h.b16 %v1819
          %v1854 = vunpack.c.l.b16 %v1820
          %v1855 = vunpack.c.h.b16 %v1820
          %v1856 = vunpack.c.l.b16 %v1821
          %v1857 = vunpack.c.h.b16 %v1821
          %v1858 = vunpack.c.l.b16 %v1822
          %v1859 = vunpack.c.h.b16 %v1822
          %v1860 = vunpack.c.l.b16 %v1823
          %v1861 = vunpack.c.h.b16 %v1823
          %v1862 = vunpack.c.l.b16 %v1824
          %v1863 = vunpack.c.h.b16 %v1824
          %v1864 = vunpack.c.l.b16 %v1825
          %v1865 = vunpack.c.h.b16 %v1825
          %v1866 = vunpack.c.l.b16 %v1826
          %v1867 = vunpack.c.h.b16 %v1826
          %v1868 = vunpack.c.l.b16 %v1827
          %v1869 = vunpack.c.h.b16 %v1827
          %v1870 = vunpack.c.l.b16 %v1828
          %v1871 = vunpack.c.h.b16 %v1828
          %v1872 = vunpack.c.l.b16 %v1829
          %v1873 = vunpack.c.h.b16 %v1829
          %v1874 = vunpack.c.l.b16 %v1830
          %v1875 = vunpack.c.h.b16 %v1830
          %v1876 = vunpack.c.l.b16 %v1831
          %v1877 = vunpack.c.h.b16 %v1831
          %v1878 = vunpack.c.l.b16 %v1832
          %v1879 = vunpack.c.h.b16 %v1832
          %v1880 = vunpack.c.l.b16 %v1833
          %v1881 = vunpack.c.h.b16 %v1833
          %v1882 = vpack.c.b16 %v1852, %v1850
          %v1883 = vpack.c.b16 %v1853, %v1851
          %v1884 = vpack.c.b16 %v1856, %v1854
          %v1885 = vpack.c.b16 %v1857, %v1855
          %v1886 = vpack.c.b16 %v1860, %v1858
          %v1887 = vpack.c.b16 %v1861, %v1859
          %v1888 = vpack.c.b16 %v1864, %v1862
          %v1889 = vpack.c.b16 %v1865, %v1863
          %v1890 = vpack.c.b16 %v1868, %v1866
          %v1891 = vpack.c.b16 %v1869, %v1867
          %v1892 = vpack.c.b16 %v1872, %v1870
          %v1893 = vpack.c.b16 %v1873, %v1871
          %v1894 = vpack.c.b16 %v1876, %v1874
          %v1895 = vpack.c.b16 %v1877, %v1875
          %v1896 = vpack.c.b16 %v1880, %v1878
          %v1897 = vpack.c.b16 %v1881, %v1879
          %1914 = vmatprep.subr.bf16.mxu0 %v1883
          %1915 = vmatpush1.bf16.msra.mxu0 %v1882
          %1916 = vmatprep.subr.bf16.mxu0 %v1885
          %1917 = vmatpush1.bf16.msra.mxu0 %v1884
          %1918 = vmatprep.subr.bf16.mxu0 %v1887
          %1919 = vmatpush1.bf16.msra.mxu0 %v1886
          %1920 = vmatprep.subr.bf16.mxu0 %v1889
          %1921 = vmatpush1.bf16.msra.mxu0 %v1888
          %1922 = vmatprep.subr.bf16.mxu0 %v1891
          %1923 = vmatpush1.bf16.msra.mxu0 %v1890
          %1924 = vmatprep.subr.bf16.mxu0 %v1893
          %1925 = vmatpush1.bf16.msra.mxu0 %v1892
          %1926 = vmatprep.subr.bf16.mxu0 %v1895
          %1927 = vmatpush1.bf16.msra.mxu0 %v1894
          %1928 = vmatprep.subr.bf16.mxu0 %v1897
          %1929 = vmatpush1.bf16.msra.mxu0 %v1896
          %1930 = vmatprep.subr.bf16.mxu0 0
          %1931 = vmatpush1.bf16.msra.mxu0 0
          %1932 = vmatprep.subr.bf16.mxu0 0
          %1933 = vmatpush1.bf16.msra.mxu0 0
          %1934 = vmatprep.subr.bf16.mxu0 0
          %1935 = vmatpush1.bf16.msra.mxu0 0
          %1936 = vmatprep.subr.bf16.mxu0 0
          %1937 = vmatpush1.bf16.msra.mxu0 0
          %1938 = vmatprep.subr.bf16.mxu0 0
          %1939 = vmatpush1.bf16.msra.mxu0 0
          %1940 = vmatprep.subr.bf16.mxu0 0
          %1941 = vmatpush1.bf16.msra.mxu0 0
          %1942 = vmatprep.subr.bf16.mxu0 0
          %1943 = vmatpush1.bf16.msra.mxu0 0
          %1944 = vmatprep.subr.bf16.mxu0 0
          %1945 = vmatpush1.bf16.msra.mxu0 0
          %1946 = vmatprep.mubr.bf16.mxu0 0
          %1947 = vmatmul.mubr.bf16.gmra.mrb[0].mxu0 %v1817
          %v1948 = vpop.f32.mrb[0].mxu0
          %v1949 = vadd.f32 0.0, %v1948
          %v1950 = vpop.f32.mrb[0].mxu0
          %v1951 = vadd.f32 0.0, %v1950
          %v1952 = vpop.f32.mrb[0].mxu0
          %v1953 = vpop.f32.mrb[0].mxu0
          %1954 = vdwg.mxu0
          %v1955 = vadd.f32 %v1811, %v1949
          %v1956 = vadd.f32 %v1813, %v1951
          %v1957 = vpack.c.bf16 %v1540, %v1540
          %v1958 = vld [vmem:[%s15] sm:$0xff]
          %v1959 = vld [vmem:[%s15 + $0x8] sm:$0xff]
          %v1960 = vld [vmem:[%s15 + $0x10] sm:$0xff]
          %v1961 = vld [vmem:[%s15 + $0x18] sm:$0xff]
          %v1962 = vld [vmem:[%s15 + $0x20] sm:$0xff]
          %v1963 = vld [vmem:[%s15 + $0x28] sm:$0xff]
          %v1964 = vld [vmem:[%s15 + $0x30] sm:$0xff]
          %v1965 = vld [vmem:[%s15 + $0x38] sm:$0xff]
          %v1966 = vld [vmem:[%s15 + $0x40] sm:$0xff]
          %v1967 = vld [vmem:[%s15 + $0x48] sm:$0xff]
          %v1968 = vld [vmem:[%s15 + $0x50] sm:$0xff]
          %v1969 = vld [vmem:[%s15 + $0x58] sm:$0xff]
          %v1970 = vld [vmem:[%s15 + $0x60] sm:$0xff]
          %v1971 = vld [vmem:[%s15 + $0x68] sm:$0xff]
          %v1972 = vld [vmem:[%s15 + $0x70] sm:$0xff]
          %v1973 = vld [vmem:[%s15 + $0x78] sm:$0xff]
          %v1990 = vunpack.c.l.b16 %v1958
          %v1991 = vunpack.c.h.b16 %v1958
          %v1992 = vunpack.c.l.b16 %v1959
          %v1993 = vunpack.c.h.b16 %v1959
          %v1994 = vunpack.c.l.b16 %v1960
          %v1995 = vunpack.c.h.b16 %v1960
          %v1996 = vunpack.c.l.b16 %v1961
          %v1997 = vunpack.c.h.b16 %v1961
          %v1998 = vunpack.c.l.b16 %v1962
          %v1999 = vunpack.c.h.b16 %v1962
          %v2000 = vunpack.c.l.b16 %v1963
          %v2001 = vunpack.c.h.b16 %v1963
          %v2002 = vunpack.c.l.b16 %v1964
          %v2003 = vunpack.c.h.b16 %v1964
          %v2004 = vunpack.c.l.b16 %v1965
          %v2005 = vunpack.c.h.b16 %v1965
          %v2006 = vunpack.c.l.b16 %v1966
          %v2007 = vunpack.c.h.b16 %v1966
          %v2008 = vunpack.c.l.b16 %v1967
          %v2009 = vunpack.c.h.b16 %v1967
          %v2010 = vunpack.c.l.b16 %v1968
          %v2011 = vunpack.c.h.b16 %v1968
          %v2012 = vunpack.c.l.b16 %v1969
          %v2013 = vunpack.c.h.b16 %v1969
          %v2014 = vunpack.c.l.b16 %v1970
          %v2015 = vunpack.c.h.b16 %v1970
          %v2016 = vunpack.c.l.b16 %v1971
          %v2017 = vunpack.c.h.b16 %v1971
          %v2018 = vunpack.c.l.b16 %v1972
          %v2019 = vunpack.c.h.b16 %v1972
          %v2020 = vunpack.c.l.b16 %v1973
          %v2021 = vunpack.c.h.b16 %v1973
          %v2022 = vpack.c.b16 %v1992, %v1990
          %v2023 = vpack.c.b16 %v1993, %v1991
          %v2024 = vpack.c.b16 %v1996, %v1994
          %v2025 = vpack.c.b16 %v1997, %v1995
          %v2026 = vpack.c.b16 %v2000, %v1998
          %v2027 = vpack.c.b16 %v2001, %v1999
          %v2028 = vpack.c.b16 %v2004, %v2002
          %v2029 = vpack.c.b16 %v2005, %v2003
          %v2030 = vpack.c.b16 %v2008, %v2006
          %v2031 = vpack.c.b16 %v2009, %v2007
          %v2032 = vpack.c.b16 %v2012, %v2010
          %v2033 = vpack.c.b16 %v2013, %v2011
          %v2034 = vpack.c.b16 %v2016, %v2014
          %v2035 = vpack.c.b16 %v2017, %v2015
          %v2036 = vpack.c.b16 %v2020, %v2018
          %v2037 = vpack.c.b16 %v2021, %v2019
          %2054 = vmatprep.subr.bf16.mxu0 %v2023
          %2055 = vmatpush1.bf16.msra.mxu0 %v2022
          %2056 = vmatprep.subr.bf16.mxu0 %v2025
          %2057 = vmatpush1.bf16.msra.mxu0 %v2024
          %2058 = vmatprep.subr.bf16.mxu0 %v2027
          %2059 = vmatpush1.bf16.msra.mxu0 %v2026
          %2060 = vmatprep.subr.bf16.mxu0 %v2029
          %2061 = vmatpush1.bf16.msra.mxu0 %v2028
          %2062 = vmatprep.subr.bf16.mxu0 %v2031
          %2063 = vmatpush1.bf16.msra.mxu0 %v2030
          %2064 = vmatprep.subr.bf16.mxu0 %v2033
          %2065 = vmatpush1.bf16.msra.mxu0 %v2032
          %2066 = vmatprep.subr.bf16.mxu0 %v2035
          %2067 = vmatpush1.bf16.msra.mxu0 %v2034
          %2068 = vmatprep.subr.bf16.mxu0 %v2037
          %2069 = vmatpush1.bf16.msra.mxu0 %v2036
          %2070 = vmatprep.subr.bf16.mxu0 0
          %2071 = vmatpush1.bf16.msra.mxu0 0
          %2072 = vmatprep.subr.bf16.mxu0 0
          %2073 = vmatpush1.bf16.msra.mxu0 0
          %2074 = vmatprep.subr.bf16.mxu0 0
          %2075 = vmatpush1.bf16.msra.mxu0 0
          %2076 = vmatprep.subr.bf16.mxu0 0
          %2077 = vmatpush1.bf16.msra.mxu0 0
          %2078 = vmatprep.subr.bf16.mxu0 0
          %2079 = vmatpush1.bf16.msra.mxu0 0
          %2080 = vmatprep.subr.bf16.mxu0 0
          %2081 = vmatpush1.bf16.msra.mxu0 0
          %2082 = vmatprep.subr.bf16.mxu0 0
          %2083 = vmatpush1.bf16.msra.mxu0 0
          %2084 = vmatprep.subr.bf16.mxu0 0
          %2085 = vmatpush1.bf16.msra.mxu0 0
          %2086 = vmatprep.mubr.bf16.mxu0 0
          %2087 = vmatmul.mubr.bf16.gmra.mrb[0].mxu0 %v1957
          %v2088 = vpop.f32.mrb[0].mxu0
          %v2089 = vadd.f32 0.0, %v2088
          %v2090 = vpop.f32.mrb[0].mxu0
          %v2091 = vadd.f32 0.0, %v2090
          %v2092 = vpop.f32.mrb[0].mxu0
          %v2093 = vpop.f32.mrb[0].mxu0
          %2094 = vdwg.mxu0
          %v2095 = vadd.f32 %v1955, %v2089
          %v2096 = vadd.f32 %v1956, %v2091
          %v2097 = vld [vmem:[%s16] sm:$0x3]
          %v2099 = vlaneseq
          %v2100 = vshrl.u32 %v2099, 7
          %v2101 = vsub.s32 0, %v2100
          %v2102 = vrot.slane %v2097, %v2101
          %v2103 = vlaneseq
          %v2104 = vshrl.u32 %v2103, 7
          %v2105 = vsub.s32 1, %v2104
          %v2106 = vrot.slane %v2097, %v2105
          %v2109 = vadd.f32 %v2095, %v2102
          %v2110 = vadd.f32 %v2096, %v2106
          %vm2111 = vcmp.ge.f32.partialorder %v2109, 0.0
          %vm2112 = vcmp.ge.f32.partialorder %v2110, 0.0
          %v2113 = vmul.f32 %v2109, 0.1
          %v2114 = vmul.f32 %v2110, 0.1
          %v2115 = vsel %vm2111, %v2109, %v2113
          %v2116 = vsel %vm2112, %v2110, %v2114
          %v2117 = vpack.c.bf16 %v2115, %v2115
          %v2118 = vpack.c.bf16 %v2116, %v2116
          %v2119 = vld [vmem:[%s17] sm:$0xff]
          %v2120 = vld [vmem:[%s17 + $0x8] sm:$0xff]
          %v2121 = vld [vmem:[%s17 + $0x10] sm:$0xff]
          %v2122 = vld [vmem:[%s17 + $0x18] sm:$0xff]
          %v2123 = vld [vmem:[%s17 + $0x20] sm:$0xff]
          %v2124 = vld [vmem:[%s17 + $0x28] sm:$0xff]
          %v2125 = vld [vmem:[%s17 + $0x30] sm:$0xff]
          %v2126 = vld [vmem:[%s17 + $0x38] sm:$0xff]
          %v2127 = vld [vmem:[%s17 + $0x40] sm:$0xff]
          %v2128 = vld [vmem:[%s17 + $0x48] sm:$0xff]
          %v2129 = vld [vmem:[%s17 + $0x50] sm:$0xff]
          %v2130 = vld [vmem:[%s17 + $0x58] sm:$0xff]
          %v2131 = vld [vmem:[%s17 + $0x60] sm:$0xff]
          %v2132 = vld [vmem:[%s17 + $0x68] sm:$0xff]
          %v2133 = vld [vmem:[%s17 + $0x70] sm:$0xff]
          %v2134 = vld [vmem:[%s17 + $0x78] sm:$0xff]
          %v2135 = vld [vmem:[%s17 + $0x80] sm:$0xff]
          %v2136 = vld [vmem:[%s17 + $0x88] sm:$0xff]
          %v2137 = vld [vmem:[%s17 + $0x90] sm:$0xff]
          %v2138 = vld [vmem:[%s17 + $0x98] sm:$0xff]
          %v2139 = vld [vmem:[%s17 + $0xa0] sm:$0xff]
          %v2140 = vld [vmem:[%s17 + $0xa8] sm:$0xff]
          %v2141 = vld [vmem:[%s17 + $0xb0] sm:$0xff]
          %v2142 = vld [vmem:[%s17 + $0xb8] sm:$0xff]
          %v2143 = vld [vmem:[%s17 + $0xc0] sm:$0xff]
          %v2144 = vld [vmem:[%s17 + $0xc8] sm:$0xff]
          %v2145 = vld [vmem:[%s17 + $0xd0] sm:$0xff]
          %v2146 = vld [vmem:[%s17 + $0xd8] sm:$0xff]
          %v2147 = vld [vmem:[%s17 + $0xe0] sm:$0xff]
          %v2148 = vld [vmem:[%s17 + $0xe8] sm:$0xff]
          %v2149 = vld [vmem:[%s17 + $0xf0] sm:$0xff]
          %v2150 = vld [vmem:[%s17 + $0xf8] sm:$0xff]
          %v2151 = vld [vmem:[%s18] sm:$0x3]
          %v2153 = vlaneseq
          %v2154 = vshrl.u32 %v2153, 7
          %v2155 = vsub.s32 0, %v2154
          %v2156 = vrot.slane %v2151, %v2155
          %v2157 = vlaneseq
          %v2158 = vshrl.u32 %v2157, 7
          %v2159 = vsub.s32 1, %v2158
          %v2160 = vrot.slane %v2151, %v2159
          %v2195 = vunpack.c.l.b16 %v2119
          %v2196 = vunpack.c.h.b16 %v2119
          %v2197 = vunpack.c.l.b16 %v2120
          %v2198 = vunpack.c.h.b16 %v2120
          %v2199 = vunpack.c.l.b16 %v2121
          %v2200 = vunpack.c.h.b16 %v2121
          %v2201 = vunpack.c.l.b16 %v2122
          %v2202 = vunpack.c.h.b16 %v2122
          %v2203 = vunpack.c.l.b16 %v2123
          %v2204 = vunpack.c.h.b16 %v2123
          %v2205 = vunpack.c.l.b16 %v2124
          %v2206 = vunpack.c.h.b16 %v2124
          %v2207 = vunpack.c.l.b16 %v2125
          %v2208 = vunpack.c.h.b16 %v2125
          %v2209 = vunpack.c.l.b16 %v2126
          %v2210 = vunpack.c.h.b16 %v2126
          %v2211 = vunpack.c.l.b16 %v2127
          %v2212 = vunpack.c.h.b16 %v2127
          %v2213 = vunpack.c.l.b16 %v2128
          %v2214 = vunpack.c.h.b16 %v2128
          %v2215 = vunpack.c.l.b16 %v2129
          %v2216 = vunpack.c.h.b16 %v2129
          %v2217 = vunpack.c.l.b16 %v2130
          %v2218 = vunpack.c.h.b16 %v2130
          %v2219 = vunpack.c.l.b16 %v2131
          %v2220 = vunpack.c.h.b16 %v2131
          %v2221 = vunpack.c.l.b16 %v2132
          %v2222 = vunpack.c.h.b16 %v2132
          %v2223 = vunpack.c.l.b16 %v2133
          %v2224 = vunpack.c.h.b16 %v2133
          %v2225 = vunpack.c.l.b16 %v2134
          %v2226 = vunpack.c.h.b16 %v2134
          %v2227 = vunpack.c.l.b16 %v2135
          %v2228 = vunpack.c.h.b16 %v2135
          %v2229 = vunpack.c.l.b16 %v2136
          %v2230 = vunpack.c.h.b16 %v2136
          %v2231 = vunpack.c.l.b16 %v2137
          %v2232 = vunpack.c.h.b16 %v2137
          %v2233 = vunpack.c.l.b16 %v2138
          %v2234 = vunpack.c.h.b16 %v2138
          %v2235 = vunpack.c.l.b16 %v2139
          %v2236 = vunpack.c.h.b16 %v2139
          %v2237 = vunpack.c.l.b16 %v2140
          %v2238 = vunpack.c.h.b16 %v2140
          %v2239 = vunpack.c.l.b16 %v2141
          %v2240 = vunpack.c.h.b16 %v2141
          %v2241 = vunpack.c.l.b16 %v2142
          %v2242 = vunpack.c.h.b16 %v2142
          %v2243 = vunpack.c.l.b16 %v2143
          %v2244 = vunpack.c.h.b16 %v2143
          %v2245 = vunpack.c.l.b16 %v2144
          %v2246 = vunpack.c.h.b16 %v2144
          %v2247 = vunpack.c.l.b16 %v2145
          %v2248 = vunpack.c.h.b16 %v2145
          %v2249 = vunpack.c.l.b16 %v2146
          %v2250 = vunpack.c.h.b16 %v2146
          %v2251 = vunpack.c.l.b16 %v2147
          %v2252 = vunpack.c.h.b16 %v2147
          %v2253 = vunpack.c.l.b16 %v2148
          %v2254 = vunpack.c.h.b16 %v2148
          %v2255 = vunpack.c.l.b16 %v2149
          %v2256 = vunpack.c.h.b16 %v2149
          %v2257 = vunpack.c.l.b16 %v2150
          %v2258 = vunpack.c.h.b16 %v2150
          %v2259 = vpack.c.b16 %v2197, %v2195
          %v2260 = vpack.c.b16 %v2198, %v2196
          %v2261 = vpack.c.b16 %v2201, %v2199
          %v2262 = vpack.c.b16 %v2202, %v2200
          %v2263 = vpack.c.b16 %v2205, %v2203
          %v2264 = vpack.c.b16 %v2206, %v2204
          %v2265 = vpack.c.b16 %v2209, %v2207
          %v2266 = vpack.c.b16 %v2210, %v2208
          %v2267 = vpack.c.b16 %v2213, %v2211
          %v2268 = vpack.c.b16 %v2214, %v2212
          %v2269 = vpack.c.b16 %v2217, %v2215
          %v2270 = vpack.c.b16 %v2218, %v2216
          %v2271 = vpack.c.b16 %v2221, %v2219
          %v2272 = vpack.c.b16 %v2222, %v2220
          %v2273 = vpack.c.b16 %v2225, %v2223
          %v2274 = vpack.c.b16 %v2226, %v2224
          %v2275 = vpack.c.b16 %v2229, %v2227
          %v2276 = vpack.c.b16 %v2230, %v2228
          %v2277 = vpack.c.b16 %v2233, %v2231
          %v2278 = vpack.c.b16 %v2234, %v2232
          %v2279 = vpack.c.b16 %v2237, %v2235
          %v2280 = vpack.c.b16 %v2238, %v2236
          %v2281 = vpack.c.b16 %v2241, %v2239
          %v2282 = vpack.c.b16 %v2242, %v2240
          %v2283 = vpack.c.b16 %v2245, %v2243
          %v2284 = vpack.c.b16 %v2246, %v2244
          %v2285 = vpack.c.b16 %v2249, %v2247
          %v2286 = vpack.c.b16 %v2250, %v2248
          %v2287 = vpack.c.b16 %v2253, %v2251
          %v2288 = vpack.c.b16 %v2254, %v2252
          %v2289 = vpack.c.b16 %v2257, %v2255
          %v2290 = vpack.c.b16 %v2258, %v2256
          %2323 = vmatprep.subr.bf16.mxu0 %v2260
          %2324 = vmatpush1.bf16.msra.mxu0 %v2259
          %2325 = vmatprep.subr.bf16.mxu0 %v2262
          %2326 = vmatpush1.bf16.msra.mxu0 %v2261
          %2327 = vmatprep.subr.bf16.mxu0 %v2264
          %2328 = vmatpush1.bf16.msra.mxu0 %v2263
          %2329 = vmatprep.subr.bf16.mxu0 %v2266
          %2330 = vmatpush1.bf16.msra.mxu0 %v2265
          %2331 = vmatprep.subr.bf16.mxu0 %v2268
          %2332 = vmatpush1.bf16.msra.mxu0 %v2267
          %2333 = vmatprep.subr.bf16.mxu0 %v2270
          %2334 = vmatpush1.bf16.msra.mxu0 %v2269
          %2335 = vmatprep.subr.bf16.mxu0 %v2272
          %2336 = vmatpush1.bf16.msra.mxu0 %v2271
          %2337 = vmatprep.subr.bf16.mxu0 %v2274
          %2338 = vmatpush1.bf16.msra.mxu0 %v2273
          %2339 = vmatprep.subr.bf16.mxu0 %v2276
          %2340 = vmatpush1.bf16.msra.mxu0 %v2275
          %2341 = vmatprep.subr.bf16.mxu0 %v2278
          %2342 = vmatpush1.bf16.msra.mxu0 %v2277
          %2343 = vmatprep.subr.bf16.mxu0 %v2280
          %2344 = vmatpush1.bf16.msra.mxu0 %v2279
          %2345 = vmatprep.subr.bf16.mxu0 %v2282
          %2346 = vmatpush1.bf16.msra.mxu0 %v2281
          %2347 = vmatprep.subr.bf16.mxu0 %v2284
          %2348 = vmatpush1.bf16.msra.mxu0 %v2283
          %2349 = vmatprep.subr.bf16.mxu0 %v2286
          %2350 = vmatpush1.bf16.msra.mxu0 %v2285
          %2351 = vmatprep.subr.bf16.mxu0 %v2288
          %2352 = vmatpush1.bf16.msra.mxu0 %v2287
          %2353 = vmatprep.subr.bf16.mxu0 %v2290
          %2354 = vmatpush1.bf16.msra.mxu0 %v2289
          %2355 = vmatprep.mubr.bf16.mxu0 %v2118
          %2356 = vmatmul.mubr.bf16.gmra.mrb[0].mxu0 %v2117
          %v2357 = vpop.f32.mrb[0].mxu0
          %v2358 = vadd.f32 %v2156, %v2357
          %v2359 = vpop.f32.mrb[0].mxu0
          %v2360 = vadd.f32 %v2160, %v2359
          %v2361 = vpop.f32.mrb[0].mxu0
          %v2362 = vpop.f32.mrb[0].mxu0
          %2363 = vdwg.mxu0
          %vm2364 = vcmp.ge.f32.partialorder %v2358, 0.0
          %vm2365 = vcmp.ge.f32.partialorder %v2360, 0.0
          %v2366 = vmul.f32 %v2358, 0.1
          %v2367 = vmul.f32 %v2360, 0.1
          %v2368 = vsel %vm2364, %v2358, %v2366
          %v2369 = vsel %vm2365, %v2360, %v2367
          %v2370 = vpack.c.bf16 %v2368, %v2368
          %v2371 = vpack.c.bf16 %v2369, %v2369
          %v2372 = vld [vmem:[%s19] sm:$0xff]
          %v2373 = vld [vmem:[%s19 + $0x8] sm:$0xff]
          %v2374 = vld [vmem:[%s19 + $0x10] sm:$0xff]
          %v2375 = vld [vmem:[%s19 + $0x18] sm:$0xff]
          %v2376 = vld [vmem:[%s19 + $0x20] sm:$0xff]
          %v2377 = vld [vmem:[%s19 + $0x28] sm:$0xff]
          %v2378 = vld [vmem:[%s19 + $0x30] sm:$0xff]
          %v2379 = vld [vmem:[%s19 + $0x38] sm:$0xff]
          %v2380 = vld [vmem:[%s19 + $0x40] sm:$0xff]
          %v2381 = vld [vmem:[%s19 + $0x48] sm:$0xff]
          %v2382 = vld [vmem:[%s19 + $0x50] sm:$0xff]
          %v2383 = vld [vmem:[%s19 + $0x58] sm:$0xff]
          %v2384 = vld [vmem:[%s19 + $0x60] sm:$0xff]
          %v2385 = vld [vmem:[%s19 + $0x68] sm:$0xff]
          %v2386 = vld [vmem:[%s19 + $0x70] sm:$0xff]
          %v2387 = vld [vmem:[%s19 + $0x78] sm:$0xff]
          %v2388 = vld [vmem:[%s19 + $0x80] sm:$0xff]
          %v2389 = vld [vmem:[%s19 + $0x88] sm:$0xff]
          %v2390 = vld [vmem:[%s19 + $0x90] sm:$0xff]
          %v2391 = vld [vmem:[%s19 + $0x98] sm:$0xff]
          %v2392 = vld [vmem:[%s19 + $0xa0] sm:$0xff]
          %v2393 = vld [vmem:[%s19 + $0xa8] sm:$0xff]
          %v2394 = vld [vmem:[%s19 + $0xb0] sm:$0xff]
          %v2395 = vld [vmem:[%s19 + $0xb8] sm:$0xff]
          %v2396 = vld [vmem:[%s20] sm:$0x3]
          %v2398 = vlaneseq
          %v2399 = vshrl.u32 %v2398, 7
          %v2400 = vsub.s32 0, %v2399
          %v2401 = vrot.slane %v2396, %v2400
          %v2402 = vlaneseq
          %v2403 = vshrl.u32 %v2402, 7
          %v2404 = vsub.s32 1, %v2403
          %v2405 = vrot.slane %v2396, %v2404
          %v2432 = vunpack.c.l.b16 %v2372
          %v2433 = vunpack.c.h.b16 %v2372
          %v2434 = vunpack.c.l.b16 %v2373
          %v2435 = vunpack.c.h.b16 %v2373
          %v2436 = vunpack.c.l.b16 %v2374
          %v2437 = vunpack.c.h.b16 %v2374
          %v2438 = vunpack.c.l.b16 %v2375
          %v2439 = vunpack.c.h.b16 %v2375
          %v2440 = vunpack.c.l.b16 %v2376
          %v2441 = vunpack.c.h.b16 %v2376
          %v2442 = vunpack.c.l.b16 %v2377
          %v2443 = vunpack.c.h.b16 %v2377
          %v2444 = vunpack.c.l.b16 %v2378
          %v2445 = vunpack.c.h.b16 %v2378
          %v2446 = vunpack.c.l.b16 %v2379
          %v2447 = vunpack.c.h.b16 %v2379
          %v2448 = vunpack.c.l.b16 %v2380
          %v2449 = vunpack.c.h.b16 %v2380
          %v2450 = vunpack.c.l.b16 %v2381
          %v2451 = vunpack.c.h.b16 %v2381
          %v2452 = vunpack.c.l.b16 %v2382
          %v2453 = vunpack.c.h.b16 %v2382
          %v2454 = vunpack.c.l.b16 %v2383
          %v2455 = vunpack.c.h.b16 %v2383
          %v2456 = vunpack.c.l.b16 %v2384
          %v2457 = vunpack.c.h.b16 %v2384
          %v2458 = vunpack.c.l.b16 %v2385
          %v2459 = vunpack.c.h.b16 %v2385
          %v2460 = vunpack.c.l.b16 %v2386
          %v2461 = vunpack.c.h.b16 %v2386
          %v2462 = vunpack.c.l.b16 %v2387
          %v2463 = vunpack.c.h.b16 %v2387
          %v2464 = vunpack.c.l.b16 %v2388
          %v2465 = vunpack.c.h.b16 %v2388
          %v2466 = vunpack.c.l.b16 %v2389
          %v2467 = vunpack.c.h.b16 %v2389
          %v2468 = vunpack.c.l.b16 %v2390
          %v2469 = vunpack.c.h.b16 %v2390
          %v2470 = vunpack.c.l.b16 %v2391
          %v2471 = vunpack.c.h.b16 %v2391
          %v2472 = vunpack.c.l.b16 %v2392
          %v2473 = vunpack.c.h.b16 %v2392
          %v2474 = vunpack.c.l.b16 %v2393
          %v2475 = vunpack.c.h.b16 %v2393
          %v2476 = vunpack.c.l.b16 %v2394
          %v2477 = vunpack.c.h.b16 %v2394
          %v2478 = vunpack.c.l.b16 %v2395
          %v2479 = vunpack.c.h.b16 %v2395
          %v2480 = vpack.c.b16 %v2434, %v2432
          %v2481 = vpack.c.b16 %v2435, %v2433
          %v2482 = vpack.c.b16 %v2438, %v2436
          %v2483 = vpack.c.b16 %v2439, %v2437
          %v2484 = vpack.c.b16 %v2442, %v2440
          %v2485 = vpack.c.b16 %v2443, %v2441
          %v2486 = vpack.c.b16 %v2446, %v2444
          %v2487 = vpack.c.b16 %v2447, %v2445
          %v2488 = vpack.c.b16 %v2450, %v2448
          %v2489 = vpack.c.b16 %v2451, %v2449
          %v2490 = vpack.c.b16 %v2454, %v2452
          %v2491 = vpack.c.b16 %v2455, %v2453
          %v2492 = vpack.c.b16 %v2458, %v2456
          %v2493 = vpack.c.b16 %v2459, %v2457
          %v2494 = vpack.c.b16 %v2462, %v2460
          %v2495 = vpack.c.b16 %v2463, %v2461
          %v2496 = vpack.c.b16 %v2466, %v2464
          %v2497 = vpack.c.b16 %v2467, %v2465
          %v2498 = vpack.c.b16 %v2470, %v2468
          %v2499 = vpack.c.b16 %v2471, %v2469
          %v2500 = vpack.c.b16 %v2474, %v2472
          %v2501 = vpack.c.b16 %v2475, %v2473
          %v2502 = vpack.c.b16 %v2478, %v2476
          %v2503 = vpack.c.b16 %v2479, %v2477
          %vm2528 = vcmask 523264
          %v2530 = vsel %vm2528, %v2371, 0
          %2532 = vmatprep.subr.bf16.mxu0 %v2481
          %2533 = vmatpush1.bf16.msra.mxu0 %v2480
          %2534 = vmatprep.subr.bf16.mxu0 %v2483
          %2535 = vmatpush1.bf16.msra.mxu0 %v2482
          %2536 = vmatprep.subr.bf16.mxu0 %v2485
          %2537 = vmatpush1.bf16.msra.mxu0 %v2484
          %2538 = vmatprep.subr.bf16.mxu0 %v2487
          %2539 = vmatpush1.bf16.msra.mxu0 %v2486
          %2540 = vmatprep.subr.bf16.mxu0 %v2489
          %2541 = vmatpush1.bf16.msra.mxu0 %v2488
          %2542 = vmatprep.subr.bf16.mxu0 %v2491
          %2543 = vmatpush1.bf16.msra.mxu0 %v2490
          %2544 = vmatprep.subr.bf16.mxu0 %v2493
          %2545 = vmatpush1.bf16.msra.mxu0 %v2492
          %2546 = vmatprep.subr.bf16.mxu0 %v2495
          %2547 = vmatpush1.bf16.msra.mxu0 %v2494
          %2548 = vmatprep.subr.bf16.mxu0 %v2497
          %2549 = vmatpush1.bf16.msra.mxu0 %v2496
          %2550 = vmatprep.subr.bf16.mxu0 %v2499
          %2551 = vmatpush1.bf16.msra.mxu0 %v2498
          %2552 = vmatprep.subr.bf16.mxu0 %v2501
          %2553 = vmatpush1.bf16.msra.mxu0 %v2500
          %2554 = vmatprep.subr.bf16.mxu0 %v2503
          %2555 = vmatpush1.bf16.msra.mxu0 %v2502
          %2556 = vmatprep.subr.bf16.mxu0 0
          %2557 = vmatpush1.bf16.msra.mxu0 0
          %2558 = vmatprep.subr.bf16.mxu0 0
          %2559 = vmatpush1.bf16.msra.mxu0 0
          %2560 = vmatprep.subr.bf16.mxu0 0
          %2561 = vmatpush1.bf16.msra.mxu0 0
          %2562 = vmatprep.subr.bf16.mxu0 0
          %2563 = vmatpush1.bf16.msra.mxu0 0
          %2564 = vmatprep.mubr.bf16.mxu0 %v2530
          %2565 = vmatmul.mubr.bf16.gmra.mrb[0].mxu0 %v2370
          %v2566 = vpop.f32.mrb[0].mxu0
          %v2567 = vadd.f32 %v2401, %v2566
          %v2568 = vpop.f32.mrb[0].mxu0
          %v2569 = vadd.f32 %v2405, %v2568
          %v2570 = vpop.f32.mrb[0].mxu0
          %v2571 = vpop.f32.mrb[0].mxu0
          %2572 = vdwg.mxu0
          %vm2573 = vcmp.ge.f32.partialorder %v2567, 0.0
          %vm2574 = vcmp.ge.f32.partialorder %v2569, 0.0
          %v2575 = vmul.f32 %v2567, 0.1
          %v2576 = vmul.f32 %v2569, 0.1
          %v2577 = vsel %vm2573, %v2567, %v2575
          %v2578 = vsel %vm2574, %v2569, %v2576
          %v2579 = vpack.c.bf16 %v2577, %v2577
          %v2580 = vpack.c.bf16 %v2578, %v2578
          %v2581 = vld [vmem:[%s21] sm:$0xff]
          %v2582 = vld [vmem:[%s21 + $0x8] sm:$0xff]
          %v2583 = vld [vmem:[%s21 + $0x10] sm:$0xff]
          %v2584 = vld [vmem:[%s21 + $0x18] sm:$0xff]
          %v2585 = vld [vmem:[%s21 + $0x20] sm:$0xff]
          %v2586 = vld [vmem:[%s21 + $0x28] sm:$0xff]
          %v2587 = vld [vmem:[%s21 + $0x30] sm:$0xff]
          %v2588 = vld [vmem:[%s21 + $0x38] sm:$0xff]
          %v2589 = vld [vmem:[%s21 + $0x40] sm:$0xff]
          %v2590 = vld [vmem:[%s21 + $0x48] sm:$0xff]
          %v2591 = vld [vmem:[%s21 + $0x50] sm:$0xff]
          %v2592 = vld [vmem:[%s21 + $0x58] sm:$0xff]
          %v2593 = vld [vmem:[%s21 + $0x60] sm:$0xff]
          %v2594 = vld [vmem:[%s21 + $0x68] sm:$0xff]
          %v2595 = vld [vmem:[%s21 + $0x70] sm:$0xff]
          %v2596 = vld [vmem:[%s21 + $0x78] sm:$0xff]
          %v2597 = vld [vmem:[%s21 + $0x80] sm:$0xff]
          %v2598 = vld [vmem:[%s21 + $0x88] sm:$0xff]
          %v2599 = vld [vmem:[%s21 + $0x90] sm:$0xff]
          %v2600 = vld [vmem:[%s21 + $0x98] sm:$0xff]
          %v2601 = vld [vmem:[%s21 + $0xa0] sm:$0xff]
          %v2602 = vld [vmem:[%s21 + $0xa8] sm:$0xff]
          %v2603 = vld [vmem:[%s21 + $0xb0] sm:$0xff]
          %v2604 = vld [vmem:[%s21 + $0xb8] sm:$0xff]
          %v2605 = vld [vmem:[%s22] sm:$0x3]
          %v2607 = vlaneseq
          %v2608 = vshrl.u32 %v2607, 7
          %v2609 = vsub.s32 0, %v2608
          %v2610 = vrot.slane %v2605, %v2609
          %v2611 = vlaneseq
          %v2612 = vshrl.u32 %v2611, 7
          %v2613 = vsub.s32 1, %v2612
          %v2614 = vrot.slane %v2605, %v2613
          %v2641 = vunpack.c.l.b16 %v2581
          %v2642 = vunpack.c.h.b16 %v2581
          %v2643 = vunpack.c.l.b16 %v2582
          %v2644 = vunpack.c.h.b16 %v2582
          %v2645 = vunpack.c.l.b16 %v2583
          %v2646 = vunpack.c.h.b16 %v2583
          %v2647 = vunpack.c.l.b16 %v2584
          %v2648 = vunpack.c.h.b16 %v2584
          %v2649 = vunpack.c.l.b16 %v2585
          %v2650 = vunpack.c.h.b16 %v2585
          %v2651 = vunpack.c.l.b16 %v2586
          %v2652 = vunpack.c.h.b16 %v2586
          %v2653 = vunpack.c.l.b16 %v2587
          %v2654 = vunpack.c.h.b16 %v2587
          %v2655 = vunpack.c.l.b16 %v2588
          %v2656 = vunpack.c.h.b16 %v2588
          %v2657 = vunpack.c.l.b16 %v2589
          %v2658 = vunpack.c.h.b16 %v2589
          %v2659 = vunpack.c.l.b16 %v2590
          %v2660 = vunpack.c.h.b16 %v2590
          %v2661 = vunpack.c.l.b16 %v2591
          %v2662 = vunpack.c.h.b16 %v2591
          %v2663 = vunpack.c.l.b16 %v2592
          %v2664 = vunpack.c.h.b16 %v2592
          %v2665 = vunpack.c.l.b16 %v2593
          %v2666 = vunpack.c.h.b16 %v2593
          %v2667 = vunpack.c.l.b16 %v2594
          %v2668 = vunpack.c.h.b16 %v2594
          %v2669 = vunpack.c.l.b16 %v2595
          %v2670 = vunpack.c.h.b16 %v2595
          %v2671 = vunpack.c.l.b16 %v2596
          %v2672 = vunpack.c.h.b16 %v2596
          %v2673 = vunpack.c.l.b16 %v2597
          %v2674 = vunpack.c.h.b16 %v2597
          %v2675 = vunpack.c.l.b16 %v2598
          %v2676 = vunpack.c.h.b16 %v2598
          %v2677 = vunpack.c.l.b16 %v2599
          %v2678 = vunpack.c.h.b16 %v2599
          %v2679 = vunpack.c.l.b16 %v2600
          %v2680 = vunpack.c.h.b16 %v2600
          %v2681 = vunpack.c.l.b16 %v2601
          %v2682 = vunpack.c.h.b16 %v2601
          %v2683 = vunpack.c.l.b16 %v2602
          %v2684 = vunpack.c.h.b16 %v2602
          %v2685 = vunpack.c.l.b16 %v2603
          %v2686 = vunpack.c.h.b16 %v2603
          %v2687 = vunpack.c.l.b16 %v2604
          %v2688 = vunpack.c.h.b16 %v2604
          %v2689 = vpack.c.b16 %v2643, %v2641
          %v2690 = vpack.c.b16 %v2644, %v2642
          %v2691 = vpack.c.b16 %v2647, %v2645
          %v2692 = vpack.c.b16 %v2648, %v2646
          %v2693 = vpack.c.b16 %v2651, %v2649
          %v2694 = vpack.c.b16 %v2652, %v2650
          %v2695 = vpack.c.b16 %v2655, %v2653
          %v2696 = vpack.c.b16 %v2656, %v2654
          %v2697 = vpack.c.b16 %v2659, %v2657
          %v2698 = vpack.c.b16 %v2660, %v2658
          %v2699 = vpack.c.b16 %v2663, %v2661
          %v2700 = vpack.c.b16 %v2664, %v2662
          %v2701 = vpack.c.b16 %v2667, %v2665
          %v2702 = vpack.c.b16 %v2668, %v2666
          %v2703 = vpack.c.b16 %v2671, %v2669
          %v2704 = vpack.c.b16 %v2672, %v2670
          %v2705 = vpack.c.b16 %v2675, %v2673
          %v2706 = vpack.c.b16 %v2676, %v2674
          %v2707 = vpack.c.b16 %v2679, %v2677
          %v2708 = vpack.c.b16 %v2680, %v2678
          %v2709 = vpack.c.b16 %v2683, %v2681
          %v2710 = vpack.c.b16 %v2684, %v2682
          %v2711 = vpack.c.b16 %v2687, %v2685
          %v2712 = vpack.c.b16 %v2688, %v2686
          %v2738 = vsel %vm2528, %v2580, 0
          %2740 = vmatprep.subr.bf16.mxu0 %v2690
          %2741 = vmatpush1.bf16.msra.mxu0 %v2689
          %2742 = vmatprep.subr.bf16.mxu0 %v2692
          %2743 = vmatpush1.bf16.msra.mxu0 %v2691
          %2744 = vmatprep.subr.bf16.mxu0 %v2694
          %2745 = vmatpush1.bf16.msra.mxu0 %v2693
          %2746 = vmatprep.subr.bf16.mxu0 %v2696
          %2747 = vmatpush1.bf16.msra.mxu0 %v2695
          %2748 = vmatprep.subr.bf16.mxu0 %v2698
          %2749 = vmatpush1.bf16.msra.mxu0 %v2697
          %2750 = vmatprep.subr.bf16.mxu0 %v2700
          %2751 = vmatpush1.bf16.msra.mxu0 %v2699
          %2752 = vmatprep.subr.bf16.mxu0 %v2702
          %2753 = vmatpush1.bf16.msra.mxu0 %v2701
          %2754 = vmatprep.subr.bf16.mxu0 %v2704
          %2755 = vmatpush1.bf16.msra.mxu0 %v2703
          %2756 = vmatprep.subr.bf16.mxu0 %v2706
          %2757 = vmatpush1.bf16.msra.mxu0 %v2705
          %2758 = vmatprep.subr.bf16.mxu0 %v2708
          %2759 = vmatpush1.bf16.msra.mxu0 %v2707
          %2760 = vmatprep.subr.bf16.mxu0 %v2710
          %2761 = vmatpush1.bf16.msra.mxu0 %v2709
          %2762 = vmatprep.subr.bf16.mxu0 %v2712
          %2763 = vmatpush1.bf16.msra.mxu0 %v2711
          %2764 = vmatprep.subr.bf16.mxu0 0
          %2765 = vmatpush1.bf16.msra.mxu0 0
          %2766 = vmatprep.subr.bf16.mxu0 0
          %2767 = vmatpush1.bf16.msra.mxu0 0
          %2768 = vmatprep.subr.bf16.mxu0 0
          %2769 = vmatpush1.bf16.msra.mxu0 0
          %2770 = vmatprep.subr.bf16.mxu0 0
          %2771 = vmatpush1.bf16.msra.mxu0 0
          %2772 = vmatprep.mubr.bf16.mxu0 %v2738
          %2773 = vmatmul.mubr.bf16.gmra.mrb[0].mxu0 %v2579
          %v2774 = vpop.f32.mrb[0].mxu0
          %v2775 = vadd.f32 %v2610, %v2774
          %v2776 = vpop.f32.mrb[0].mxu0
          %v2777 = vadd.f32 %v2614, %v2776
          %v2778 = vpop.f32.mrb[0].mxu0
          %v2779 = vpop.f32.mrb[0].mxu0
          %2780 = vdwg.mxu0
          %vm2781 = vcmask 1041408
          %v2782 = vsel %vm2781, %v2775, -inf
          %vm2783 = vcmask 549888
          %v2784 = vsel %vm2783, %v2777, -inf
          %v2785 = vmax.f32 %v2782, %v2784
          %2786 = vmax.xlane.f32.xlu0 %v2785
          %v2787 = vpop.xlane.xlu0 %2786
          %v2788 = vsub.f32 %v2775, %v2787
          %v2789 = vsub.f32 %v2777, %v2787
          %v2790 = vmul.f32 %v2788, 1.442695
          %v2791 = vpow.pop %v2790
          %v2792 = vmul.f32 %v2789, 1.442695
          %v2793 = vpow.pop %v2792
          %v2794 = vsel %vm2781, %v2791, 0.0
          %v2795 = vsel %vm2783, %v2793, 0.0
          %v2796 = vadd.f32 %v2794, %v2795
          %2797 = vadd.xlane.f32.xlu0 %v2796
          %v2798 = vpop.xlane.xlu0 %2797
          %v2799 = vrcp.pop %v2798
          %v2800 = vmul.f32 %v2791, %v2799
          %v2801 = vmul.f32 %v2793, %v2799
          %v2804 = vcombine.low %v2800, %v2801
          %v2806 = vunpack.c.l.s4 1983009808
          %v2807 = vunpack.c.0.s8 %v2806
          %v2808 = vlaneseq
          %v2809 = vshrl.u32 %v2808, 7
          %v2810 = vsub.s32 %v2807, %v2809
          %v2811 = vrot.slane %v2804, %v2810
          %vm2813 = vcmask 551938
          %vm2814 = vmor %vm2813, %vm2781
          %2815 = vst.msk [vmem:[#allocation3] sm:$0xf] %vm2814, %v2811
          %v2816 = vld [vmem:[%s23] sm:$0xff]
          %v2817 = vld [vmem:[%s23 + $0x8] sm:$0xff]
          %v2818 = vld [vmem:[%s23 + $0x10] sm:$0xff]
          %v2819 = vld [vmem:[%s23 + $0x18] sm:$0xff]
          %v2820 = vld [vmem:[%s23 + $0x20] sm:$0xff]
          %v2821 = vld [vmem:[%s23 + $0x28] sm:$0xff]
          %v2822 = vld [vmem:[%s23 + $0x30] sm:$0xff]
          %v2823 = vld [vmem:[%s23 + $0x38] sm:$0xff]
          %v2824 = vld [vmem:[%s23 + $0x40] sm:$0xff]
          %v2825 = vld [vmem:[%s23 + $0x48] sm:$0xff]
          %v2826 = vld [vmem:[%s23 + $0x50] sm:$0xff]
          %v2827 = vld [vmem:[%s23 + $0x58] sm:$0xff]
          %v2828 = vld [vmem:[%s23 + $0x60] sm:$0xff]
          %v2829 = vld [vmem:[%s23 + $0x68] sm:$0xff]
          %v2830 = vld [vmem:[%s23 + $0x70] sm:$0xff]
          %v2831 = vld [vmem:[%s23 + $0x78] sm:$0xff]
          %v2832 = vld [vmem:[%s23 + $0x80] sm:$0xff]
          %v2833 = vld [vmem:[%s23 + $0x88] sm:$0xff]
          %v2834 = vld [vmem:[%s23 + $0x90] sm:$0xff]
          %v2835 = vld [vmem:[%s23 + $0x98] sm:$0xff]
          %v2836 = vld [vmem:[%s23 + $0xa0] sm:$0xff]
          %v2837 = vld [vmem:[%s23 + $0xa8] sm:$0xff]
          %v2838 = vld [vmem:[%s23 + $0xb0] sm:$0xff]
          %v2839 = vld [vmem:[%s23 + $0xb8] sm:$0xff]
          %v2840 = vld [vmem:[%s24] sm:$0x3]
          %v2842 = vlaneseq
          %v2843 = vshrl.u32 %v2842, 7
          %v2844 = vsub.s32 0, %v2843
          %v2845 = vrot.slane %v2840, %v2844
          %v2846 = vlaneseq
          %v2847 = vshrl.u32 %v2846, 7
          %v2848 = vsub.s32 1, %v2847
          %v2849 = vrot.slane %v2840, %v2848
          %v2876 = vunpack.c.l.b16 %v2816
          %v2877 = vunpack.c.h.b16 %v2816
          %v2878 = vunpack.c.l.b16 %v2817
          %v2879 = vunpack.c.h.b16 %v2817
          %v2880 = vunpack.c.l.b16 %v2818
          %v2881 = vunpack.c.h.b16 %v2818
          %v2882 = vunpack.c.l.b16 %v2819
          %v2883 = vunpack.c.h.b16 %v2819
          %v2884 = vunpack.c.l.b16 %v2820
          %v2885 = vunpack.c.h.b16 %v2820
          %v2886 = vunpack.c.l.b16 %v2821
          %v2887 = vunpack.c.h.b16 %v2821
          %v2888 = vunpack.c.l.b16 %v2822
          %v2889 = vunpack.c.h.b16 %v2822
          %v2890 = vunpack.c.l.b16 %v2823
          %v2891 = vunpack.c.h.b16 %v2823
          %v2892 = vunpack.c.l.b16 %v2824
          %v2893 = vunpack.c.h.b16 %v2824
          %v2894 = vunpack.c.l.b16 %v2825
          %v2895 = vunpack.c.h.b16 %v2825
          %v2896 = vunpack.c.l.b16 %v2826
          %v2897 = vunpack.c.h.b16 %v2826
          %v2898 = vunpack.c.l.b16 %v2827
          %v2899 = vunpack.c.h.b16 %v2827
          %v2900 = vunpack.c.l.b16 %v2828
          %v2901 = vunpack.c.h.b16 %v2828
          %v2902 = vunpack.c.l.b16 %v2829
          %v2903 = vunpack.c.h.b16 %v2829
          %v2904 = vunpack.c.l.b16 %v2830
          %v2905 = vunpack.c.h.b16 %v2830
          %v2906 = vunpack.c.l.b16 %v2831
          %v2907 = vunpack.c.h.b16 %v2831
          %v2908 = vunpack.c.l.b16 %v2832
          %v2909 = vunpack.c.h.b16 %v2832
          %v2910 = vunpack.c.l.b16 %v2833
          %v2911 = vunpack.c.h.b16 %v2833
          %v2912 = vunpack.c.l.b16 %v2834
          %v2913 = vunpack.c.h.b16 %v2834
          %v2914 = vunpack.c.l.b16 %v2835
          %v2915 = vunpack.c.h.b16 %v2835
          %v2916 = vunpack.c.l.b16 %v2836
          %v2917 = vunpack.c.h.b16 %v2836
          %v2918 = vunpack.c.l.b16 %v2837
          %v2919 = vunpack.c.h.b16 %v2837
          %v2920 = vunpack.c.l.b16 %v2838
          %v2921 = vunpack.c.h.b16 %v2838
          %v2922 = vunpack.c.l.b16 %v2839
          %v2923 = vunpack.c.h.b16 %v2839
          %v2924 = vpack.c.b16 %v2878, %v2876
          %v2925 = vpack.c.b16 %v2879, %v2877
          %v2926 = vpack.c.b16 %v2882, %v2880
          %v2927 = vpack.c.b16 %v2883, %v2881
          %v2928 = vpack.c.b16 %v2886, %v2884
          %v2929 = vpack.c.b16 %v2887, %v2885
          %v2930 = vpack.c.b16 %v2890, %v2888
          %v2931 = vpack.c.b16 %v2891, %v2889
          %v2932 = vpack.c.b16 %v2894, %v2892
          %v2933 = vpack.c.b16 %v2895, %v2893
          %v2934 = vpack.c.b16 %v2898, %v2896
          %v2935 = vpack.c.b16 %v2899, %v2897
          %v2936 = vpack.c.b16 %v2902, %v2900
          %v2937 = vpack.c.b16 %v2903, %v2901
          %v2938 = vpack.c.b16 %v2906, %v2904
          %v2939 = vpack.c.b16 %v2907, %v2905
          %v2940 = vpack.c.b16 %v2910, %v2908
          %v2941 = vpack.c.b16 %v2911, %v2909
          %v2942 = vpack.c.b16 %v2914, %v2912
          %v2943 = vpack.c.b16 %v2915, %v2913
          %v2944 = vpack.c.b16 %v2918, %v2916
          %v2945 = vpack.c.b16 %v2919, %v2917
          %v2946 = vpack.c.b16 %v2922, %v2920
          %v2947 = vpack.c.b16 %v2923, %v2921
          %2972 = vmatprep.subr.bf16.mxu0 %v2925
          %2973 = vmatpush1.bf16.msra.mxu0 %v2924
          %2974 = vmatprep.subr.bf16.mxu0 %v2927
          %2975 = vmatpush1.bf16.msra.mxu0 %v2926
          %2976 = vmatprep.subr.bf16.mxu0 %v2929
          %2977 = vmatpush1.bf16.msra.mxu0 %v2928
          %2978 = vmatprep.subr.bf16.mxu0 %v2931
          %2979 = vmatpush1.bf16.msra.mxu0 %v2930
          %2980 = vmatprep.subr.bf16.mxu0 %v2933
          %2981 = vmatpush1.bf16.msra.mxu0 %v2932
          %2982 = vmatprep.subr.bf16.mxu0 %v2935
          %2983 = vmatpush1.bf16.msra.mxu0 %v2934
          %2984 = vmatprep.subr.bf16.mxu0 %v2937
          %2985 = vmatpush1.bf16.msra.mxu0 %v2936
          %2986 = vmatprep.subr.bf16.mxu0 %v2939
          %2987 = vmatpush1.bf16.msra.mxu0 %v2938
          %2988 = vmatprep.subr.bf16.mxu0 %v2941
          %2989 = vmatpush1.bf16.msra.mxu0 %v2940
          %2990 = vmatprep.subr.bf16.mxu0 %v2943
          %2991 = vmatpush1.bf16.msra.mxu0 %v2942
          %2992 = vmatprep.subr.bf16.mxu0 %v2945
          %2993 = vmatpush1.bf16.msra.mxu0 %v2944
          %2994 = vmatprep.subr.bf16.mxu0 %v2947
          %2995 = vmatpush1.bf16.msra.mxu0 %v2946
          %2996 = vmatprep.subr.bf16.mxu0 0
          %2997 = vmatpush1.bf16.msra.mxu0 0
          %2998 = vmatprep.subr.bf16.mxu0 0
          %2999 = vmatpush1.bf16.msra.mxu0 0
          %3000 = vmatprep.subr.bf16.mxu0 0
          %3001 = vmatpush1.bf16.msra.mxu0 0
          %3002 = vmatprep.subr.bf16.mxu0 0
          %3003 = vmatpush1.bf16.msra.mxu0 0
          %3004 = vmatprep.mubr.bf16.mxu0 %v2530
          %3005 = vmatmul.mubr.bf16.gmra.mrb[0].mxu0 %v2370
          %v3006 = vpop.f32.mrb[0].mxu0
          %v3007 = vadd.f32 %v2845, %v3006
          %v3008 = vpop.f32.mrb[0].mxu0
          %v3009 = vadd.f32 %v2849, %v3008
          %v3010 = vpop.f32.mrb[0].mxu0
          %v3011 = vpop.f32.mrb[0].mxu0
          %3012 = vdwg.mxu0
          %v3015 = vcombine.low %v3007, %v3009
          %v3017 = vunpack.c.l.s4 1983009808
          %v3018 = vunpack.c.0.s8 %v3017
          %v3019 = vlaneseq
          %v3020 = vshrl.u32 %v3019, 7
          %v3021 = vsub.s32 %v3018, %v3020
          %v3022 = vrot.slane %v3015, %v3021
          %3024 = vst [vmem:[#allocation5] sm:$0xf] %v3022
        $region128: #{attention_refine_forward.1} parent=119 // pred_fallthru
          _
        // Predicated region
        $region129: #{attention_refine_forward.1} parent=119 // pred_check
          %p3025 = pneg %p588
        $region130: #{attention_refine_forward.1} parent=119 // pred_check_branch
          %3027 = sbr.rel (%p3025) target = $region132
        $region131: #{attention_refine_forward.1} parent=119 // pred_region
          %s3029 = ssub.s32 64, 64
          %3030 = vsyncadd [#allocation4], %s3029
          %s3032 = sshll.u32 [#allocation3], 4
          %s3033 = int_to_ptr.vmem [resolvable:$true] %s3032
          %3035 = dma.vmem_to_hbm [thread:$0]  %s3033, 64, %s25, [#allocation4]
        $region132: #{attention_refine_forward.1} parent=119 // pred_fallthru
          _
        // Predicated region
        $region133: #{attention_refine_forward.1} parent=119 // pred_check
          %p3036 = pneg %p609
        $region134: #{attention_refine_forward.1} parent=119 // pred_check_branch
          %3038 = sbr.rel (%p3036) target = $region136
        $region135: #{attention_refine_forward.1} parent=119 // pred_region
          %s3040 = ssub.s32 64, 64
          %3041 = vsyncadd [#allocation6], %s3040
          %s3043 = sshll.u32 [#allocation5], 4
          %s3044 = int_to_ptr.vmem [resolvable:$true] %s3043
          %3046 = dma.vmem_to_hbm [thread:$0]  %s3044, 64, %s26, [#allocation6]
        $region136: #{attention_refine_forward.1} parent=119 // pred_fallthru
          _
        // Predicated region
        $region137: #{attention_refine_forward.1} parent=119 // pred_check
          %p3047 = pneg %p588
        $region138: #{attention_refine_forward.1} parent=119 // pred_check_branch
          %3049 = sbr.rel (%p3047) target = $region140
        $region139: #{attention_refine_forward.1} parent=119 // pred_region
          %3050 = dma.done [#allocation4], 64
        $region140: #{attention_refine_forward.1} parent=119 // pred_fallthru
          _
        // Predicated region
        $region141: #{attention_refine_forward.1} parent=119 // pred_check
          %p3051 = pneg %p609
        $region142: #{attention_refine_forward.1} parent=119 // pred_check_branch
          %3053 = sbr.rel (%p3051) target = $region144
        $region143: #{attention_refine_forward.1} parent=119 // pred_region
          %3054 = dma.done [#allocation6], 64
        $region144: #{attention_refine_forward.1} parent=119 // pred_fallthru
          _
      $region120: #{attention_refine_forward.1} parent=5 // pred_fallthru
        _
      %p3055 = scmp.le.s32.totalorder 2, %s35
      // Predicated region
      $region145: #{attention_refine_forward.1} parent=5 // pred_check
        %p3056 = pneg %p3055
      $region146: #{attention_refine_forward.1} parent=5 // pred_check_branch
        %3058 = sbr.rel (%p3056) target = $region148
      $region147: #{attention_refine_forward.1} parent=5 // pred_region
        %s3059 = ssub.s32 %s35, 2
      $region148: #{attention_refine_forward.1} parent=5 // pred_fallthru
        _
    $region6: #{attention_refine_forward.1} parent=1 // loop_footer
      %s39 = sadd.s32 1, %s35
    $region7: #{attention_refine_forward.1} parent=1 // loop_footer_branch
      %34 = sbr.rel target = $region3
    $region8: #{attention_refine_forward.1} parent=1 // loop_exit
      _
    %3060 = vsyncpa [#allocation4], 1
    %s3061 = scalar_lea.sflag [#allocation4], 1
    %3062 = vsyncpa %s3061, 1
    %3063 = vsyncpa [#allocation6], 1

</llo_original>
